<compile_context>
chip_gen: v7x
topology: tpu7x:2x2x1
jax: 0.10.0
libtpu: 0.0.40
codegen_flags: <defaults>
</compile_context>

<pallas_src>
import jax
import jax.numpy as jnp
from jax.experimental import pallas as pl
from jax.experimental.pallas import tpu as pltpu


# ----------------------------------------------------------------------------- kernel
def generator_kernel(emb_ref, z_ref,
                     w1z_ref, b1_ref,
                     w2_ref, b2_ref,
                     w3_ref, b3_ref,
                     w4_ref, b4_ref,
                     out_ref):
    wdt = w1z_ref.dtype  # bfloat16 weights

    # Layer 1: embedding contribution was gathered in the wrapper (emb_ref);
    # only the noise path needs a matmul.  Accumulate in f32.
    h = emb_ref[...].astype(jnp.float32)
    h = h + jnp.dot(z_ref[...], w1z_ref[...], preferred_element_type=jnp.float32)
    h = jnp.tanh(h + b1_ref[...])

    # Layers 2-3 (Linear -> Tanh; Dropout == identity in eval mode).
    h = jnp.tanh(jnp.dot(h.astype(wdt), w2_ref[...],
                         preferred_element_type=jnp.float32) + b2_ref[...])
    h = jnp.tanh(jnp.dot(h.astype(wdt), w3_ref[...],
                         preferred_element_type=jnp.float32) + b3_ref[...])

    # nodes_layer (output lanes zero-padded to a multiple of 128; sliced in wrapper).
    out = jnp.dot(h.astype(wdt), w4_ref[...],
                  preferred_element_type=jnp.float32) + b4_ref[...]
    out_ref[...] = out.astype(out_ref.dtype)


# ----------------------------------------------------------------------------- wrapper
def generator_forward(z, c, p, *, tb=None, out_dtype=jnp.float32):
    B, noise_dim = z.shape
    out_pad = p["w4"].shape[1]
    input_dim = p["input_dim"]
    h1p, h2, h3 = p["w1z"].shape[1], p["w2"].shape[1], p["w3"].shape[1]
    wdt = p["w1z"].dtype

    # Batch tiling: default is ONE grid step (best on single-TC v5e/v6e).
    # On v7x pass tb = round_up(cdiv(B, 2), 8) -> 2 "parallel" steps, one per TC.
    if tb is None:
        tb = max(8, pl.cdiv(B, 8) * 8)
    else:
        tb = max(8, pl.cdiv(tb, 8) * 8)
    n_tiles = pl.cdiv(B, tb)
    Bp = n_tiles * tb
    if Bp != B:
        z = jnp.pad(z, ((0, Bp - B), (0, 0)))
        c = jnp.pad(c, ((0, Bp - B),))  # padded rows use class 0; sliced off below

    # Embedding row-select as a wrapper-side gather -> lane-dense bf16 activation.
    emb_in = jnp.take(p["w1e"], c.astype(jnp.int32), axis=0)   # (Bp, 128) bf16
    z = z.astype(wdt)                                          # halve z DMA bytes

    args = (emb_in, z,
            p["w1z"], p["b1"],
            p["w2"], p["b2"],
            p["w3"], p["b3"],
            p["w4"], p["b4"])

    def act_spec(arr):
        return pl.BlockSpec((tb, arr.shape[1]), lambda i: (i, 0))

    def resident_spec(arr, single_buffer):
        # Constant block index -> weights/biases stay VMEM-resident across steps.
        if single_buffer:
            return pl.BlockSpec(arr.shape, lambda i: (0, 0),
                                pipeline_mode=pl.Buffered(1))
        return pl.BlockSpec(arr.shape, lambda i: (0, 0))

    # Advisory cost estimate (kernel is latency/overhead bound at these sizes).
    flops = 2 * Bp * (noise_dim * h1p + h1p * h2 + h2 * h3 + h3 * out_pad)
    transcendentals = Bp * (h1p + h2 + h3)
    weight_bytes = sum(int(p[k].size) * p[k].dtype.itemsize
                       for k in ("w1z", "b1", "w2", "b2", "w3", "b3", "w4", "b4"))
    bytes_accessed = (weight_bytes
                      + int(emb_in.size) * emb_in.dtype.itemsize
                      + int(z.size) * z.dtype.itemsize
                      + Bp * out_pad * jnp.dtype(out_dtype).itemsize)

    def build(single_buffer):
        in_specs = ([act_spec(emb_in), act_spec(z)]
                    + [resident_spec(a, single_buffer) for a in args[2:]])
        return pl.pallas_call(
            generator_kernel,
            out_shape=jax.ShapeDtypeStruct((Bp, out_pad), out_dtype),
            grid=(n_tiles,),
            in_specs=in_specs,
            out_specs=pl.BlockSpec((tb, out_pad), lambda i: (i, 0)),
            compiler_params=pltpu.CompilerParams(
                dimension_semantics=("parallel",)),
            cost_estimate=pl.CostEstimate(flops=flops,
                                          transcendentals=transcendentals,
                                          bytes_accessed=bytes_accessed),
        )

    try:
        out = build(True)(*args)
    except Exception:
        # Fallback if this JAX version rejects single-buffered (Buffered(1)) specs.
        out = build(False)(*args)
    return out[:B, :input_dim]


# ----------------------------------------------------------------------------- params
def init_params(key, noise_dim, input_dim, output_dim):
    """Torch-equivalent init; Linear weights stored as (in, out) = torch weight.T."""
    dims = [noise_dim + output_dim, 64, 128, 256]
    keys = jax.random.split(key, 10)
    params = {}
    params["emb"] = jax.random.normal(keys[0], (output_dim, output_dim), jnp.float32)
    for li, (d_in, d_out) in enumerate(zip(dims[:-1], dims[1:]), start=1):
        bound = 1.0 / jnp.sqrt(d_in)
        params[f"w{li}"] = jax.random.uniform(
            keys[2 * li - 1], (d_in, d_out), jnp.float32, -bound, bound)
        params[f"b{li}"] = jax.random.uniform(
            keys[2 * li], (1, d_out), jnp.float32, -bound, bound)
    d_in = 256
    bound = 1.0 / jnp.sqrt(d_in)
    params["w4"] = jax.random.uniform(keys[7], (d_in, input_dim), jnp.float32, -bound, bound)
    params["b4"] = jax.random.uniform(keys[8], (1, input_dim), jnp.float32, -bound, bound)
    return params


def prepare_params(raw, noise_dim, input_dim, output_dim,
                   weight_dtype=jnp.bfloat16):
    """Fold emb into layer 1, zero-pad lanes to multiples of 128, cast weights."""
    h1, h1p = 64, 128
    out_pad = pl.cdiv(input_dim, 128) * 128

    w1 = raw["w1"]                       # (output_dim + noise_dim, 64)
    w1e = raw["emb"] @ w1[:output_dim]   # (num_classes, 64)  -- embedding folded in
    w1z = w1[output_dim:]                # (noise_dim, 64)

    pad1 = h1p - h1
    w1e = jnp.pad(w1e, ((0, 0), (0, pad1)))
    w1z = jnp.pad(w1z, ((0, 0), (0, pad1)))
    b1 = jnp.pad(raw["b1"], ((0, 0), (0, pad1)))
    w2 = jnp.pad(raw["w2"], ((0, pad1), (0, 0)))   # extra input rows are zero

    pado = out_pad - input_dim
    w4 = jnp.pad(raw["w4"], ((0, 0), (0, pado)))
    b4 = jnp.pad(raw["b4"], ((0, 0), (0, pado)))

    return {
        "w1e": w1e.astype(weight_dtype), "w1z": w1z.astype(weight_dtype),
        "b1": b1,
        "w2": w2.astype(weight_dtype), "b2": raw["b2"],
        "w3": raw["w3"].astype(weight_dtype), "b3": raw["b3"],
        "w4": w4.astype(weight_dtype), "b4": b4,
        "input_dim": input_dim,
    }


# ----------------------------------------------------------------------------- references
def reference_forward(z, c, p):
    """Pure-JAX reference using the SAME bf16-folded convention as the kernel."""
    wdt = p["w1z"].dtype
    h = (jnp.take(p["w1e"], c, axis=0).astype(jnp.float32)
         + jnp.dot(z.astype(wdt), p["w1z"], preferred_element_type=jnp.float32))
    h = jnp.tanh(h + p["b1"])
    h = jnp.tanh(jnp.dot(h.astype(wdt), p["w2"],
                         preferred_element_type=jnp.float32) + p["b2"])
    h = jnp.tanh(jnp.dot(h.astype(wdt), p["w3"],
                         preferred_element_type=jnp.float32) + p["b3"])
    out = jnp.dot(h.astype(wdt), p["w4"],
                  preferred_element_type=jnp.float32) + p["b4"]
    return out[:, :p["input_dim"]]


def reference_forward_f32(z, c, raw):
    """True f32 torch-equivalent forward (embedding lookup + concat + Linears)."""
    emb = jnp.take(raw["emb"], c, axis=0)
    x = jnp.concatenate([emb, z], axis=-1)
    h = jnp.tanh(x @ raw["w1"] + raw["b1"])
    h = jnp.tanh(h @ raw["w2"] + raw["b2"])
    h = jnp.tanh(h @ raw["w3"] + raw["b3"])
    return h @ raw["w4"] + raw["b4"]


if __name__ == "__main__":
    noise_dim, input_dim, output_dim = 16, 32, 16
    B = 256

    key = jax.random.PRNGKey(0)
    k_param, k_z, k_c = jax.random.split(key, 3)
    raw = init_params(k_param, noise_dim, input_dim, output_dim)
    params = prepare_params(raw, noise_dim, input_dim, output_dim)

    z = jax.random.normal(k_z, (B, noise_dim), jnp.float32)
    c = jax.random.randint(k_c, (B,), 0, output_dim, jnp.int32)

    # Default: grid=(1,), weights resident.  (On v7x pass tb=pl.cdiv(B, 2).)
    out = generator_forward(z, c, params)
    out = jax.block_until_ready(out)
    assert out.shape == (B, input_dim)

    # Exercise the tiled path too (grid=(2,), resident single-buffered weights).
    out_tiled = jax.block_until_ready(generator_forward(z, c, params, tb=128))
    assert jnp.allclose(out, out_tiled, atol=1e-5, rtol=1e-5), \
        float(jnp.max(jnp.abs(out - out_tiled)))

    # Same-convention (bf16-folded) reference: tight tolerance.
    ref = reference_forward(z, c, params)
    assert jnp.allclose(out, ref, atol=2e-3, rtol=2e-3), \
        float(jnp.max(jnp.abs(out - ref)))

    # True f32 torch-equivalent reference: loose tolerance (bf16 weights).
    ref32 = reference_forward_f32(z, c, raw)
    assert jnp.allclose(out, ref32, atol=6e-2, rtol=6e-2), \
        float(jnp.max(jnp.abs(out - ref32)))

    print("KERNEL_OK")
</pallas_src>

<mosaic_0001>
module attributes {stable_mosaic.version = 11 : i64} {
  func.func @generator_kernel(%arg0: i32, %arg1: memref<256x128xbf16, #tpu.memory_space<vmem>>, %arg2: memref<256x16xbf16, #tpu.memory_space<vmem>>, %arg3: memref<16x128xbf16, #tpu.memory_space<vmem>>, %arg4: memref<1x128xf32, #tpu.memory_space<vmem>>, %arg5: memref<128x128xbf16, #tpu.memory_space<vmem>>, %arg6: memref<1x128xf32, #tpu.memory_space<vmem>>, %arg7: memref<128x256xbf16, #tpu.memory_space<vmem>>, %arg8: memref<1x256xf32, #tpu.memory_space<vmem>>, %arg9: memref<256x128xbf16, #tpu.memory_space<vmem>>, %arg10: memref<1x128xf32, #tpu.memory_space<vmem>>, %arg11: memref<256x128xf32, #tpu.memory_space<vmem>>) attributes {dimension_semantics = [#tpu.dimension_semantics<parallel>], iteration_bounds = array<i64: 1>, scalar_prefetch = 0 : i64, scratch_operands = 0 : i64, tpu.core_type = #tpu.core_type<tc>, window_params = [{transform_indices = @transform_0, window_bounds = array<i64: 256, 128>}, {transform_indices = @transform_1, window_bounds = array<i64: 256, 16>}, {pipeline_mode = #tpu.pipeline_mode<synchronous>, transform_indices = @transform_2, window_bounds = array<i64: 16, 128>}, {pipeline_mode = #tpu.pipeline_mode<synchronous>, transform_indices = @transform_3, window_bounds = array<i64: 1, 128>}, {pipeline_mode = #tpu.pipeline_mode<synchronous>, transform_indices = @transform_4, window_bounds = array<i64: 128, 128>}, {pipeline_mode = #tpu.pipeline_mode<synchronous>, transform_indices = @transform_5, window_bounds = array<i64: 1, 128>}, {pipeline_mode = #tpu.pipeline_mode<synchronous>, transform_indices = @transform_6, window_bounds = array<i64: 128, 256>}, {pipeline_mode = #tpu.pipeline_mode<synchronous>, transform_indices = @transform_7, window_bounds = array<i64: 1, 256>}, {pipeline_mode = #tpu.pipeline_mode<synchronous>, transform_indices = @transform_8, window_bounds = array<i64: 256, 128>}, {pipeline_mode = #tpu.pipeline_mode<synchronous>, transform_indices = @transform_9, window_bounds = array<i64: 1, 128>}, {transform_indices = @transform_10, window_bounds = array<i64: 256, 128>}]} {
    %c0 = arith.constant 0 : index
    %c0_0 = arith.constant 0 : index
    %0 = vector.load %arg1[%c0, %c0_0] : memref<256x128xbf16, #tpu.memory_space<vmem>>, vector<256x128xbf16>
    %1 = arith.extf %0 : vector<256x128xbf16> to vector<256x128xf32>
    %c0_1 = arith.constant 0 : index
    %c0_2 = arith.constant 0 : index
    %2 = vector.load %arg2[%c0_1, %c0_2] : memref<256x16xbf16, #tpu.memory_space<vmem>>, vector<256x16xbf16>
    %c0_3 = arith.constant 0 : index
    %c0_4 = arith.constant 0 : index
    %3 = vector.load %arg3[%c0_3, %c0_4] : memref<16x128xbf16, #tpu.memory_space<vmem>>, vector<16x128xbf16>
    %cst = arith.constant dense<0.000000e+00> : vector<256x128xf32>
    %4 = tpu.matmul %2, %3, %cst {dimension_numbers = #tpu.dot_dimension_numbers<[1], [0], [0], [1], [0, 0, 1, 1], [], []>} : vector<256x16xbf16>, vector<16x128xbf16>, vector<256x128xf32> -> vector<256x128xf32>
    %5 = arith.addf %1, %4 : vector<256x128xf32>
    %c0_5 = arith.constant 0 : index
    %c0_6 = arith.constant 0 : index
    %6 = vector.load %arg4[%c0_5, %c0_6] : memref<1x128xf32, #tpu.memory_space<vmem>>, vector<1x128xf32>
    %7 = vector.broadcast %6 : vector<1x128xf32> to vector<256x128xf32>
    %8 = arith.addf %5, %7 : vector<256x128xf32>
    %9 = math.tanh %8 : vector<256x128xf32>
    %10 = arith.truncf %9 : vector<256x128xf32> to vector<256x128xbf16>
    %c0_7 = arith.constant 0 : index
    %c0_8 = arith.constant 0 : index
    %11 = vector.load %arg5[%c0_7, %c0_8] : memref<128x128xbf16, #tpu.memory_space<vmem>>, vector<128x128xbf16>
    %cst_9 = arith.constant dense<0.000000e+00> : vector<256x128xf32>
    %12 = tpu.matmul %10, %11, %cst_9 {dimension_numbers = #tpu.dot_dimension_numbers<[1], [0], [0], [1], [0, 0, 1, 1], [], []>} : vector<256x128xbf16>, vector<128x128xbf16>, vector<256x128xf32> -> vector<256x128xf32>
    %c0_10 = arith.constant 0 : index
    %c0_11 = arith.constant 0 : index
    %13 = vector.load %arg6[%c0_10, %c0_11] : memref<1x128xf32, #tpu.memory_space<vmem>>, vector<1x128xf32>
    %14 = vector.broadcast %13 : vector<1x128xf32> to vector<256x128xf32>
    %15 = arith.addf %12, %14 : vector<256x128xf32>
    %16 = math.tanh %15 : vector<256x128xf32>
    %17 = arith.truncf %16 : vector<256x128xf32> to vector<256x128xbf16>
    %c0_12 = arith.constant 0 : index
    %c0_13 = arith.constant 0 : index
    %18 = vector.load %arg7[%c0_12, %c0_13] : memref<128x256xbf16, #tpu.memory_space<vmem>>, vector<128x256xbf16>
    %cst_14 = arith.constant dense<0.000000e+00> : vector<256x256xf32>
    %19 = tpu.matmul %17, %18, %cst_14 {dimension_numbers = #tpu.dot_dimension_numbers<[1], [0], [0], [1], [0, 0, 1, 1], [], []>} : vector<256x128xbf16>, vector<128x256xbf16>, vector<256x256xf32> -> vector<256x256xf32>
    %c0_15 = arith.constant 0 : index
    %c0_16 = arith.constant 0 : index
    %20 = vector.load %arg8[%c0_15, %c0_16] : memref<1x256xf32, #tpu.memory_space<vmem>>, vector<1x256xf32>
    %21 = vector.broadcast %20 : vector<1x256xf32> to vector<256x256xf32>
    %22 = arith.addf %19, %21 : vector<256x256xf32>
    %23 = math.tanh %22 : vector<256x256xf32>
    %24 = arith.truncf %23 : vector<256x256xf32> to vector<256x256xbf16>
    %c0_17 = arith.constant 0 : index
    %c0_18 = arith.constant 0 : index
    %25 = vector.load %arg9[%c0_17, %c0_18] : memref<256x128xbf16, #tpu.memory_space<vmem>>, vector<256x128xbf16>
    %cst_19 = arith.constant dense<0.000000e+00> : vector<256x128xf32>
    %26 = tpu.matmul %24, %25, %cst_19 {dimension_numbers = #tpu.dot_dimension_numbers<[1], [0], [0], [1], [0, 0, 1, 1], [], []>} : vector<256x256xbf16>, vector<256x128xbf16>, vector<256x128xf32> -> vector<256x128xf32>
    %c0_20 = arith.constant 0 : index
    %c0_21 = arith.constant 0 : index
    %27 = vector.load %arg10[%c0_20, %c0_21] : memref<1x128xf32, #tpu.memory_space<vmem>>, vector<1x128xf32>
    %28 = vector.broadcast %27 : vector<1x128xf32> to vector<256x128xf32>
    %29 = arith.addf %26, %28 : vector<256x128xf32>
    %c0_22 = arith.constant 0 : index
    %c0_23 = arith.constant 0 : index
    %30 = vector.load %arg11[%c0_22, %c0_23] : memref<256x128xf32, #tpu.memory_space<vmem>>, vector<256x128xf32>
    tpu.vector_store %arg11[%c0_22, %c0_23], %29 {strides = array<i32>} : memref<256x128xf32, #tpu.memory_space<vmem>>, vector<256x128xf32>,
    return
  }
  func.func @transform_0(%arg0: i32) -> (i32, i32) {
    %c0_i32 = arith.constant 0 : i32
    %c0_i32_0 = arith.constant 0 : i32
    return %arg0, %c0_i32 : i32, i32
  }
  func.func @transform_1(%arg0: i32) -> (i32, i32) {
    %c0_i32 = arith.constant 0 : i32
    %c0_i32_0 = arith.constant 0 : i32
    return %arg0, %c0_i32 : i32, i32
  }
  func.func @transform_2(%arg0: i32) -> (i32, i32) {
    %c0_i32 = arith.constant 0 : i32
    %c0_i32_0 = arith.constant 0 : i32
    %c0_i32_1 = arith.constant 0 : i32
    return %c0_i32, %c0_i32_0 : i32, i32
  }
  func.func @transform_3(%arg0: i32) -> (i32, i32) {
    %c0_i32 = arith.constant 0 : i32
    %c0_i32_0 = arith.constant 0 : i32
    %c0_i32_1 = arith.constant 0 : i32
    return %c0_i32, %c0_i32_0 : i32, i32
  }
  func.func @transform_4(%arg0: i32) -> (i32, i32) {
    %c0_i32 = arith.constant 0 : i32
    %c0_i32_0 = arith.constant 0 : i32
    %c0_i32_1 = arith.constant 0 : i32
    return %c0_i32, %c0_i32_0 : i32, i32
  }
  func.func @transform_5(%arg0: i32) -> (i32, i32) {
    %c0_i32 = arith.constant 0 : i32
    %c0_i32_0 = arith.constant 0 : i32
    %c0_i32_1 = arith.constant 0 : i32
    return %c0_i32, %c0_i32_0 : i32, i32
  }
  func.func @transform_6(%arg0: i32) -> (i32, i32) {
    %c0_i32 = arith.constant 0 : i32
    %c0_i32_0 = arith.constant 0 : i32
    %c0_i32_1 = arith.constant 0 : i32
    return %c0_i32, %c0_i32_0 : i32, i32
  }
  func.func @transform_7(%arg0: i32) -> (i32, i32) {
    %c0_i32 = arith.constant 0 : i32
    %c0_i32_0 = arith.constant 0 : i32
    %c0_i32_1 = arith.constant 0 : i32
    return %c0_i32, %c0_i32_0 : i32, i32
  }
  func.func @transform_8(%arg0: i32) -> (i32, i32) {
    %c0_i32 = arith.constant 0 : i32
    %c0_i32_0 = arith.constant 0 : i32
    %c0_i32_1 = arith.constant 0 : i32
    return %c0_i32, %c0_i32_0 : i32, i32
  }
  func.func @transform_9(%arg0: i32) -> (i32, i32) {
    %c0_i32 = arith.constant 0 : i32
    %c0_i32_0 = arith.constant 0 : i32
    %c0_i32_1 = arith.constant 0 : i32
    return %c0_i32, %c0_i32_0 : i32, i32
  }
  func.func @transform_10(%arg0: i32) -> (i32, i32) {
    %c0_i32 = arith.constant 0 : i32
    %c0_i32_0 = arith.constant 0 : i32
    return %arg0, %c0_i32 : i32, i32
  }
}

module attributes {stable_mosaic.version = 11 : i64} {
  func.func @generator_kernel(%arg0: i32, %arg1: memref<256x128xbf16, #tpu.memory_space<vmem>>, %arg2: memref<256x16xbf16, #tpu.memory_space<vmem>>, %arg3: memref<16x128xbf16, #tpu.memory_space<vmem>>, %arg4: memref<1x128xf32, #tpu.memory_space<vmem>>, %arg5: memref<128x128xbf16, #tpu.memory_space<vmem>>, %arg6: memref<1x128xf32, #tpu.memory_space<vmem>>, %arg7: memref<128x256xbf16, #tpu.memory_space<vmem>>, %arg8: memref<1x256xf32, #tpu.memory_space<vmem>>, %arg9: memref<256x128xbf16, #tpu.memory_space<vmem>>, %arg10: memref<1x128xf32, #tpu.memory_space<vmem>>, %arg11: memref<256x128xf32, #tpu.memory_space<vmem>>) attributes {dimension_semantics = [#tpu.dimension_semantics<parallel>], iteration_bounds = array<i64: 1>, scalar_prefetch = 0 : i64, scratch_operands = 0 : i64, tpu.core_type = #tpu.core_type<tc>, window_params = [{transform_indices = @transform_0, window_bounds = array<i64: 256, 128>}, {transform_indices = @transform_1, window_bounds = array<i64: 256, 16>}, {pipeline_mode = #tpu.pipeline_mode<synchronous>, transform_indices = @transform_2, window_bounds = array<i64: 16, 128>}, {pipeline_mode = #tpu.pipeline_mode<synchronous>, transform_indices = @transform_3, window_bounds = array<i64: 1, 128>}, {pipeline_mode = #tpu.pipeline_mode<synchronous>, transform_indices = @transform_4, window_bounds = array<i64: 128, 128>}, {pipeline_mode = #tpu.pipeline_mode<synchronous>, transform_indices = @transform_5, window_bounds = array<i64: 1, 128>}, {pipeline_mode = #tpu.pipeline_mode<synchronous>, transform_indices = @transform_6, window_bounds = array<i64: 128, 256>}, {pipeline_mode = #tpu.pipeline_mode<synchronous>, transform_indices = @transform_7, window_bounds = array<i64: 1, 256>}, {pipeline_mode = #tpu.pipeline_mode<synchronous>, transform_indices = @transform_8, window_bounds = array<i64: 256, 128>}, {pipeline_mode = #tpu.pipeline_mode<synchronous>, transform_indices = @transform_9, window_bounds = array<i64: 1, 128>}, {transform_indices = @transform_10, window_bounds = array<i64: 256, 128>}]} {
    %c0 = arith.constant 0 : index
    %c0_0 = arith.constant 0 : index
    %0 = vector.load %arg1[%c0, %c0_0] : memref<256x128xbf16, #tpu.memory_space<vmem>>, vector<256x128xbf16>
    %1 = arith.extf %0 : vector<256x128xbf16> to vector<256x128xf32>
    %c0_1 = arith.constant 0 : index
    %c0_2 = arith.constant 0 : index
    %2 = vector.load %arg2[%c0_1, %c0_2] : memref<256x16xbf16, #tpu.memory_space<vmem>>, vector<256x16xbf16>
    %c0_3 = arith.constant 0 : index
    %c0_4 = arith.constant 0 : index
    %3 = vector.load %arg3[%c0_3, %c0_4] : memref<16x128xbf16, #tpu.memory_space<vmem>>, vector<16x128xbf16>
    %cst = arith.constant dense<0.000000e+00> : vector<256x128xf32>
    %4 = tpu.matmul %2, %3, %cst {dimension_numbers = #tpu.dot_dimension_numbers<[1], [0], [0], [1], [0, 0, 1, 1], [], []>} : vector<256x16xbf16>, vector<16x128xbf16>, vector<256x128xf32> -> vector<256x128xf32>
    %5 = arith.addf %1, %4 : vector<256x128xf32>
    %c0_5 = arith.constant 0 : index
    %c0_6 = arith.constant 0 : index
    %6 = vector.load %arg4[%c0_5, %c0_6] : memref<1x128xf32, #tpu.memory_space<vmem>>, vector<1x128xf32>
    %7 = vector.broadcast %6 : vector<1x128xf32> to vector<256x128xf32>
    %8 = arith.addf %5, %7 : vector<256x128xf32>
    %9 = math.tanh %8 : vector<256x128xf32>
    %10 = arith.truncf %9 : vector<256x128xf32> to vector<256x128xbf16>
    %c0_7 = arith.constant 0 : index
    %c0_8 = arith.constant 0 : index
    %11 = vector.load %arg5[%c0_7, %c0_8] : memref<128x128xbf16, #tpu.memory_space<vmem>>, vector<128x128xbf16>
    %cst_9 = arith.constant dense<0.000000e+00> : vector<256x128xf32>
    %12 = tpu.matmul %10, %11, %cst_9 {dimension_numbers = #tpu.dot_dimension_numbers<[1], [0], [0], [1], [0, 0, 1, 1], [], []>} : vector<256x128xbf16>, vector<128x128xbf16>, vector<256x128xf32> -> vector<256x128xf32>
    %c0_10 = arith.constant 0 : index
    %c0_11 = arith.constant 0 : index
    %13 = vector.load %arg6[%c0_10, %c0_11] : memref<1x128xf32, #tpu.memory_space<vmem>>, vector<1x128xf32>
    %14 = vector.broadcast %13 : vector<1x128xf32> to vector<256x128xf32>
    %15 = arith.addf %12, %14 : vector<256x128xf32>
    %16 = math.tanh %15 : vector<256x128xf32>
    %17 = arith.truncf %16 : vector<256x128xf32> to vector<256x128xbf16>
    %c0_12 = arith.constant 0 : index
    %c0_13 = arith.constant 0 : index
    %18 = vector.load %arg7[%c0_12, %c0_13] : memref<128x256xbf16, #tpu.memory_space<vmem>>, vector<128x256xbf16>
    %cst_14 = arith.constant dense<0.000000e+00> : vector<256x256xf32>
    %19 = tpu.matmul %17, %18, %cst_14 {dimension_numbers = #tpu.dot_dimension_numbers<[1], [0], [0], [1], [0, 0, 1, 1], [], []>} : vector<256x128xbf16>, vector<128x256xbf16>, vector<256x256xf32> -> vector<256x256xf32>
    %c0_15 = arith.constant 0 : index
    %c0_16 = arith.constant 0 : index
    %20 = vector.load %arg8[%c0_15, %c0_16] : memref<1x256xf32, #tpu.memory_space<vmem>>, vector<1x256xf32>
    %21 = vector.broadcast %20 : vector<1x256xf32> to vector<256x256xf32>
    %22 = arith.addf %19, %21 : vector<256x256xf32>
    %23 = math.tanh %22 : vector<256x256xf32>
    %24 = arith.truncf %23 : vector<256x256xf32> to vector<256x256xbf16>
    %c0_17 = arith.constant 0 : index
    %c0_18 = arith.constant 0 : index
    %25 = vector.load %arg9[%c0_17, %c0_18] : memref<256x128xbf16, #tpu.memory_space<vmem>>, vector<256x128xbf16>
    %cst_19 = arith.constant dense<0.000000e+00> : vector<256x128xf32>
    %26 = tpu.matmul %24, %25, %cst_19 {dimension_numbers = #tpu.dot_dimension_numbers<[1], [0], [0], [1], [0, 0, 1, 1], [], []>} : vector<256x256xbf16>, vector<256x128xbf16>, vector<256x128xf32> -> vector<256x128xf32>
    %c0_20 = arith.constant 0 : index
    %c0_21 = arith.constant 0 : index
    %27 = vector.load %arg10[%c0_20, %c0_21] : memref<1x128xf32, #tpu.memory_space<vmem>>, vector<1x128xf32>
    %28 = vector.broadcast %27 : vector<1x128xf32> to vector<256x128xf32>
    %29 = arith.addf %26, %28 : vector<256x128xf32>
    %c0_22 = arith.constant 0 : index
    %c0_23 = arith.constant 0 : index
    %30 = vector.load %arg11[%c0_22, %c0_23] : memref<256x128xf32, #tpu.memory_space<vmem>>, vector<256x128xf32>
    tpu.vector_store %arg11[%c0_22, %c0_23], %29 {strides = array<i32>} : memref<256x128xf32, #tpu.memory_space<vmem>>, vector<256x128xf32>,
    return
  }
  func.func @transform_0(%arg0: i32) -> (i32, i32) {
    %c0_i32 = arith.constant 0 : i32
    %c0_i32_0 = arith.constant 0 : i32
    return %arg0, %c0_i32 : i32, i32
  }
  func.func @transform_1(%arg0: i32) -> (i32, i32) {
    %c0_i32 = arith.constant 0 : i32
    %c0_i32_0 = arith.constant 0 : i32
    return %arg0, %c0_i32 : i32, i32
  }
  func.func @transform_2(%arg0: i32) -> (i32, i32) {
    %c0_i32 = arith.constant 0 : i32
    %c0_i32_0 = arith.constant 0 : i32
    %c0_i32_1 = arith.constant 0 : i32
    return %c0_i32, %c0_i32_0 : i32, i32
  }
  func.func @transform_3(%arg0: i32) -> (i32, i32) {
    %c0_i32 = arith.constant 0 : i32
    %c0_i32_0 = arith.constant 0 : i32
    %c0_i32_1 = arith.constant 0 : i32
    return %c0_i32, %c0_i32_0 : i32, i32
  }
  func.func @transform_4(%arg0: i32) -> (i32, i32) {
    %c0_i32 = arith.constant 0 : i32
    %c0_i32_0 = arith.constant 0 : i32
    %c0_i32_1 = arith.constant 0 : i32
    return %c0_i32, %c0_i32_0 : i32, i32
  }
  func.func @transform_5(%arg0: i32) -> (i32, i32) {
    %c0_i32 = arith.constant 0 : i32
    %c0_i32_0 = arith.constant 0 : i32
    %c0_i32_1 = arith.constant 0 : i32
    return %c0_i32, %c0_i32_0 : i32, i32
  }
  func.func @transform_6(%arg0: i32) -> (i32, i32) {
    %c0_i32 = arith.constant 0 : i32
    %c0_i32_0 = arith.constant 0 : i32
    %c0_i32_1 = arith.constant 0 : i32
    return %c0_i32, %c0_i32_0 : i32, i32
  }
  func.func @transform_7(%arg0: i32) -> (i32, i32) {
    %c0_i32 = arith.constant 0 : i32
    %c0_i32_0 = arith.constant 0 : i32
    %c0_i32_1 = arith.constant 0 : i32
    return %c0_i32, %c0_i32_0 : i32, i32
  }
  func.func @transform_8(%arg0: i32) -> (i32, i32) {
    %c0_i32 = arith.constant 0 : i32
    %c0_i32_0 = arith.constant 0 : i32
    %c0_i32_1 = arith.constant 0 : i32
    return %c0_i32, %c0_i32_0 : i32, i32
  }
  func.func @transform_9(%arg0: i32) -> (i32, i32) {
    %c0_i32 = arith.constant 0 : i32
    %c0_i32_0 = arith.constant 0 : i32
    %c0_i32_1 = arith.constant 0 : i32
    return %c0_i32, %c0_i32_0 : i32, i32
  }
  func.func @transform_10(%arg0: i32) -> (i32, i32) {
    %c0_i32 = arith.constant 0 : i32
    %c0_i32_0 = arith.constant 0 : i32
    return %arg0, %c0_i32 : i32, i32
  }
}

</mosaic_0001>

<llo_original>
// kernel: tpu_custom_call.1
$region0: #{tpu_custom_call.1}
  #allocation0 [shape = 'u32[]', space=smem, size = 0x4, offset = 0x4, fixed_abs, tag = 'smem constant byte address 0x4 - core index']
  #allocation1 [shape = 'u32[144,128]{1,0:T(1,128)}', space=vmem, size = 0x12000, scoped, tag = 'internal scratch']
  %s0 = inlined_call_operand.vmem [shape: bf16[256,128], index: 0, kind: input, shape index: {}]
  %s1 = inlined_call_operand.vmem [shape: bf16[256,16], index: 1, kind: input, shape index: {}]
  %s2 = inlined_call_operand.vmem [shape: bf16[16,128], index: 2, kind: input, shape index: {}]
  %s3 = inlined_call_operand.vmem [shape: f32[1,128], index: 3, kind: input, shape index: {}]
  %s4 = inlined_call_operand.hbm [shape: bf16[128,128], index: 4, kind: input, shape index: {}]
  %s5 = inlined_call_operand.vmem [shape: f32[1,128], index: 5, kind: input, shape index: {}]
  %s6 = inlined_call_operand.hbm [shape: bf16[128,256], index: 6, kind: input, shape index: {}]
  %s7 = inlined_call_operand.vmem [shape: f32[1,256], index: 7, kind: input, shape index: {}]
  %s8 = inlined_call_operand.hbm [shape: bf16[256,128], index: 8, kind: input, shape index: {}]
  %s9 = inlined_call_operand.vmem [shape: f32[1,128], index: 9, kind: input, shape index: {}]
  %s10 = inlined_call_operand.hbm [shape: f32[256,128], index: 10, kind: output, shape index: {}]
  %s11 = sld [smem:[#allocation0]]
  $region62: #{tpu_custom_call.1} parent=0
    _
  %s13 = ssub.s32 1, %s11
  %s14 = scalar_select 0, %s13, %s11
  $region1: #{tpu_custom_call.1} parent=0
    #allocation2 [shape = 'u8[32768]{0}', space=vmem, size = 0x8000, scoped, tag = 'input window, operand 4, single buffered']
    #allocation3 [shape = 's32[1]{0}', space=sflag, size = 0x4, scoped, tag = 'scoped memory for tpu_custom_call.1']
    #allocation4 [shape = 's32[1]{0}', space=sflag, size = 0x4, scoped, tag = 'scoped memory for tpu_custom_call.1']
    #allocation5 [shape = 'u8[65536]{0}', space=vmem, size = 0x10000, scoped, tag = 'input window, operand 6, single buffered']
    #allocation6 [shape = 's32[1]{0}', space=sflag, size = 0x4, scoped, tag = 'scoped memory for tpu_custom_call.1']
    #allocation7 [shape = 'u8[65536]{0}', space=vmem, size = 0x10000, scoped, tag = 'input window, operand 8, single buffered']
    #allocation8 [shape = 'u8[131072]{0}', space=vmem, size = 0x20000, scoped, tag = 'output window, operand 0, single buffered']
    %15 = vsyncpa [#allocation3], 0
    %16 = vsyncpa [#allocation6], 0
    %17 = vsyncpa [#allocation4], 0
    // Predicated region
    $region2: #{tpu_custom_call.1} parent=1 // pred_check
      _
    $region3: #{tpu_custom_call.1} parent=1 // pred_check_branch
      %19 = sbr.rel (0) target = $region5
    $region4: #{tpu_custom_call.1} parent=1 // pred_region
      _
    $region5: #{tpu_custom_call.1} parent=1 // pred_fallthru
      _
    // Predicated region
    $region6: #{tpu_custom_call.1} parent=1 // pred_check
      _
    $region7: #{tpu_custom_call.1} parent=1 // pred_check_branch
      %21 = sbr.rel (0) target = $region9
    $region8: #{tpu_custom_call.1} parent=1 // pred_region
      _
    $region9: #{tpu_custom_call.1} parent=1 // pred_fallthru
      _
    // Predicated region
    $region10: #{tpu_custom_call.1} parent=1 // pred_check
      _
    $region11: #{tpu_custom_call.1} parent=1 // pred_check_branch
      %23 = sbr.rel (0) target = $region13
    $region12: #{tpu_custom_call.1} parent=1 // pred_region
      _
    $region13: #{tpu_custom_call.1} parent=1 // pred_fallthru
      _
    // Predicated region
    $region14: #{tpu_custom_call.1} parent=1 // pred_check
      _
    $region15: #{tpu_custom_call.1} parent=1 // pred_check_branch
      %25 = sbr.rel (0) target = $region17
    $region16: #{tpu_custom_call.1} parent=1 // pred_region
      _
    $region17: #{tpu_custom_call.1} parent=1 // pred_fallthru
      _
    // Predicated region
    $region18: #{tpu_custom_call.1} parent=1 // pred_check
      _
    $region19: #{tpu_custom_call.1} parent=1 // pred_check_branch
      %27 = sbr.rel (0) target = $region21
    $region20: #{tpu_custom_call.1} parent=1 // pred_region
      %s29 = ssub.s32 1024, 1024
      %30 = vsyncadd [#allocation3], %s29
      %s31 = sshll.u32 [#allocation2], 4
      %s32 = int_to_ptr.vmem [resolvable:$true] %s31
      %37 = dma.hbm_to_vmem [thread:$0]  %s4, 1024, %s32, [#allocation3], 64, 64, 4
    $region21: #{tpu_custom_call.1} parent=1 // pred_fallthru
      _
    // Predicated region
    $region22: #{tpu_custom_call.1} parent=1 // pred_check
      _
    $region23: #{tpu_custom_call.1} parent=1 // pred_check_branch
      %39 = sbr.rel (0) target = $region25
    $region24: #{tpu_custom_call.1} parent=1 // pred_region
      _
    $region25: #{tpu_custom_call.1} parent=1 // pred_fallthru
      _
    // Predicated region
    $region26: #{tpu_custom_call.1} parent=1 // pred_check
      _
    $region27: #{tpu_custom_call.1} parent=1 // pred_check_branch
      %41 = sbr.rel (0) target = $region29
    $region28: #{tpu_custom_call.1} parent=1 // pred_region
      %s43 = ssub.s32 2048, 2048
      %44 = vsyncadd [#allocation6], %s43
      %s45 = sshll.u32 [#allocation5], 4
      %s46 = int_to_ptr.vmem [resolvable:$true] %s45
      %51 = dma.hbm_to_vmem [thread:$0]  %s6, 2048, %s46, [#allocation6], 128, 128, 8
    $region29: #{tpu_custom_call.1} parent=1 // pred_fallthru
      _
    // Predicated region
    $region30: #{tpu_custom_call.1} parent=1 // pred_check
      _
    $region31: #{tpu_custom_call.1} parent=1 // pred_check_branch
      %53 = sbr.rel (0) target = $region33
    $region32: #{tpu_custom_call.1} parent=1 // pred_region
      _
    $region33: #{tpu_custom_call.1} parent=1 // pred_fallthru
      _
    // Predicated region
    $region34: #{tpu_custom_call.1} parent=1 // pred_check
      _
    $region35: #{tpu_custom_call.1} parent=1 // pred_check_branch
      %55 = sbr.rel (0) target = $region37
    $region36: #{tpu_custom_call.1} parent=1 // pred_region
      %s57 = ssub.s32 2048, 2048
      %58 = vsyncadd [#allocation6], %s57
      %s59 = sshll.u32 [#allocation7], 4
      %s60 = int_to_ptr.vmem [resolvable:$true] %s59
      %65 = dma.hbm_to_vmem [thread:$0]  %s8, 2048, %s60, [#allocation6], 64, 64, 4
    $region37: #{tpu_custom_call.1} parent=1 // pred_fallthru
      _
    // Predicated region
    $region38: #{tpu_custom_call.1} parent=1 // pred_check
      _
    $region39: #{tpu_custom_call.1} parent=1 // pred_check_branch
      %67 = sbr.rel (0) target = $region41
    $region40: #{tpu_custom_call.1} parent=1 // pred_region
      _
    $region41: #{tpu_custom_call.1} parent=1 // pred_fallthru
      _
    // Predicated region
    $region42: #{tpu_custom_call.1} parent=1 // pred_check
      _
    $region43: #{tpu_custom_call.1} parent=1 // pred_check_branch
      %69 = sbr.rel (0) target = $region45
    $region44: #{tpu_custom_call.1} parent=1 // pred_region
      %70 = dma.done [#allocation3], 1024
    $region45: #{tpu_custom_call.1} parent=1 // pred_fallthru
      _
    // Predicated region
    $region46: #{tpu_custom_call.1} parent=1 // pred_check
      _
    $region47: #{tpu_custom_call.1} parent=1 // pred_check_branch
      %72 = sbr.rel (0) target = $region49
    $region48: #{tpu_custom_call.1} parent=1 // pred_region
      %73 = dma.done [#allocation6], 2048
    $region49: #{tpu_custom_call.1} parent=1 // pred_fallthru
      _
    // Predicated region
    $region50: #{tpu_custom_call.1} parent=1 // pred_check
      _
    $region51: #{tpu_custom_call.1} parent=1 // pred_check_branch
      %75 = sbr.rel (0) target = $region53
    $region52: #{tpu_custom_call.1} parent=1 // pred_region
      %76 = dma.done [#allocation6], 2048
    $region53: #{tpu_custom_call.1} parent=1 // pred_fallthru
      _
    %v78 = vld [vmem:[%s0] sm:$0xf]
    %v79 = vld [vmem:[%s0 + $0x4] sm:$0xf]
    %v80 = vld [vmem:[%s0 + $0x8] sm:$0xf]
    %v81 = vld [vmem:[%s0 + $0xc] sm:$0xf]
    %v82 = vld [vmem:[%s0 + $0x10] sm:$0xf]
    %v83 = vld [vmem:[%s0 + $0x14] sm:$0xf]
    %v84 = vld [vmem:[%s0 + $0x18] sm:$0xf]
    %v85 = vld [vmem:[%s0 + $0x1c] sm:$0xf]
    %v86 = vld [vmem:[%s0 + $0x20] sm:$0xf]
    %v87 = vld [vmem:[%s0 + $0x24] sm:$0xf]
    %v88 = vld [vmem:[%s0 + $0x28] sm:$0xf]
    %v89 = vld [vmem:[%s0 + $0x2c] sm:$0xf]
    %v90 = vld [vmem:[%s0 + $0x30] sm:$0xf]
    %v91 = vld [vmem:[%s0 + $0x34] sm:$0xf]
    %v92 = vld [vmem:[%s0 + $0x38] sm:$0xf]
    %v93 = vld [vmem:[%s0 + $0x3c] sm:$0xf]
    %v94 = vld [vmem:[%s0 + $0x40] sm:$0xf]
    %v95 = vld [vmem:[%s0 + $0x44] sm:$0xf]
    %v96 = vld [vmem:[%s0 + $0x48] sm:$0xf]
    %v97 = vld [vmem:[%s0 + $0x4c] sm:$0xf]
    %v98 = vld [vmem:[%s0 + $0x50] sm:$0xf]
    %v99 = vld [vmem:[%s0 + $0x54] sm:$0xf]
    %v100 = vld [vmem:[%s0 + $0x58] sm:$0xf]
    %v101 = vld [vmem:[%s0 + $0x5c] sm:$0xf]
    %v102 = vld [vmem:[%s0 + $0x60] sm:$0xf]
    %v103 = vld [vmem:[%s0 + $0x64] sm:$0xf]
    %v104 = vld [vmem:[%s0 + $0x68] sm:$0xf]
    %v105 = vld [vmem:[%s0 + $0x6c] sm:$0xf]
    %v106 = vld [vmem:[%s0 + $0x70] sm:$0xf]
    %v107 = vld [vmem:[%s0 + $0x74] sm:$0xf]
    %v108 = vld [vmem:[%s0 + $0x78] sm:$0xf]
    %v109 = vld [vmem:[%s0 + $0x7c] sm:$0xf]
    %v110 = vunpack.c.l.bf16 %v78
    %v111 = vunpack.c.l.bf16 %v79
    %v112 = vunpack.c.l.bf16 %v80
    %v113 = vunpack.c.l.bf16 %v81
    %v114 = vunpack.c.l.bf16 %v82
    %v115 = vunpack.c.l.bf16 %v83
    %v116 = vunpack.c.l.bf16 %v84
    %v117 = vunpack.c.l.bf16 %v85
    %v118 = vunpack.c.l.bf16 %v86
    %v119 = vunpack.c.l.bf16 %v87
    %v120 = vunpack.c.l.bf16 %v88
    %v121 = vunpack.c.l.bf16 %v89
    %v122 = vunpack.c.l.bf16 %v90
    %v123 = vunpack.c.l.bf16 %v91
    %v124 = vunpack.c.l.bf16 %v92
    %v125 = vunpack.c.l.bf16 %v93
    %v126 = vunpack.c.l.bf16 %v94
    %v127 = vunpack.c.l.bf16 %v95
    %v128 = vunpack.c.l.bf16 %v96
    %v129 = vunpack.c.l.bf16 %v97
    %v130 = vunpack.c.l.bf16 %v98
    %v131 = vunpack.c.l.bf16 %v99
    %v132 = vunpack.c.l.bf16 %v100
    %v133 = vunpack.c.l.bf16 %v101
    %v134 = vunpack.c.l.bf16 %v102
    %v135 = vunpack.c.l.bf16 %v103
    %v136 = vunpack.c.l.bf16 %v104
    %v137 = vunpack.c.l.bf16 %v105
    %v138 = vunpack.c.l.bf16 %v106
    %v139 = vunpack.c.l.bf16 %v107
    %v140 = vunpack.c.l.bf16 %v108
    %v141 = vunpack.c.l.bf16 %v109
    %v142 = vld [vmem:[%s1] sm:$0xf]
    %v143 = vld [vmem:[%s1 + $0x4] sm:$0xf]
    %v144 = vld [vmem:[%s1 + $0x8] sm:$0xf]
    %v145 = vld [vmem:[%s1 + $0xc] sm:$0xf]
    %v146 = vld [vmem:[%s1 + $0x10] sm:$0xf]
    %v147 = vld [vmem:[%s1 + $0x14] sm:$0xf]
    %v148 = vld [vmem:[%s1 + $0x18] sm:$0xf]
    %v149 = vld [vmem:[%s1 + $0x1c] sm:$0xf]
    %v150 = vld [vmem:[%s1 + $0x20] sm:$0xf]
    %v151 = vld [vmem:[%s1 + $0x24] sm:$0xf]
    %v152 = vld [vmem:[%s1 + $0x28] sm:$0xf]
    %v153 = vld [vmem:[%s1 + $0x2c] sm:$0xf]
    %v154 = vld [vmem:[%s1 + $0x30] sm:$0xf]
    %v155 = vld [vmem:[%s1 + $0x34] sm:$0xf]
    %v156 = vld [vmem:[%s1 + $0x38] sm:$0xf]
    %v157 = vld [vmem:[%s1 + $0x3c] sm:$0xf]
    %v158 = vld [vmem:[%s1 + $0x40] sm:$0xf]
    %v159 = vld [vmem:[%s1 + $0x44] sm:$0xf]
    %v160 = vld [vmem:[%s1 + $0x48] sm:$0xf]
    %v161 = vld [vmem:[%s1 + $0x4c] sm:$0xf]
    %v162 = vld [vmem:[%s1 + $0x50] sm:$0xf]
    %v163 = vld [vmem:[%s1 + $0x54] sm:$0xf]
    %v164 = vld [vmem:[%s1 + $0x58] sm:$0xf]
    %v165 = vld [vmem:[%s1 + $0x5c] sm:$0xf]
    %v166 = vld [vmem:[%s1 + $0x60] sm:$0xf]
    %v167 = vld [vmem:[%s1 + $0x64] sm:$0xf]
    %v168 = vld [vmem:[%s1 + $0x68] sm:$0xf]
    %v169 = vld [vmem:[%s1 + $0x6c] sm:$0xf]
    %v170 = vld [vmem:[%s1 + $0x70] sm:$0xf]
    %v171 = vld [vmem:[%s1 + $0x74] sm:$0xf]
    %v172 = vld [vmem:[%s1 + $0x78] sm:$0xf]
    %v173 = vld [vmem:[%s1 + $0x7c] sm:$0xf]
    %v174 = vld [vmem:[%s2] sm:$0xf]
    %v175 = vld [vmem:[%s2 + $0x4] sm:$0xf]
    %v208 = vunpack.c.l.b16 %v142
    %v209 = vunpack.c.l.b16 %v143
    %v210 = vunpack.c.l.b16 %v144
    %v211 = vunpack.c.l.b16 %v145
    %v212 = vunpack.c.l.b16 %v146
    %v213 = vunpack.c.l.b16 %v147
    %v214 = vunpack.c.l.b16 %v148
    %v215 = vunpack.c.l.b16 %v149
    %v216 = vunpack.c.l.b16 %v150
    %v217 = vunpack.c.l.b16 %v151
    %v218 = vunpack.c.l.b16 %v152
    %v219 = vunpack.c.l.b16 %v153
    %v220 = vunpack.c.l.b16 %v154
    %v221 = vunpack.c.l.b16 %v155
    %v222 = vunpack.c.l.b16 %v156
    %v223 = vunpack.c.l.b16 %v157
    %v224 = vunpack.c.l.b16 %v158
    %v225 = vunpack.c.l.b16 %v159
    %v226 = vunpack.c.l.b16 %v160
    %v227 = vunpack.c.l.b16 %v161
    %v228 = vunpack.c.l.b16 %v162
    %v229 = vunpack.c.l.b16 %v163
    %v230 = vunpack.c.l.b16 %v164
    %v231 = vunpack.c.l.b16 %v165
    %v232 = vunpack.c.l.b16 %v166
    %v233 = vunpack.c.l.b16 %v167
    %v234 = vunpack.c.l.b16 %v168
    %v235 = vunpack.c.l.b16 %v169
    %v236 = vunpack.c.l.b16 %v170
    %v237 = vunpack.c.l.b16 %v171
    %v238 = vunpack.c.l.b16 %v172
    %v239 = vunpack.c.l.b16 %v173
    %v240 = vpack.c.b16 %v209, %v208
    %v241 = vpack.c.b16 %v211, %v210
    %v242 = vpack.c.b16 %v213, %v212
    %v243 = vpack.c.b16 %v215, %v214
    %v244 = vpack.c.b16 %v217, %v216
    %v245 = vpack.c.b16 %v219, %v218
    %v246 = vpack.c.b16 %v221, %v220
    %v247 = vpack.c.b16 %v223, %v222
    %v248 = vpack.c.b16 %v225, %v224
    %v249 = vpack.c.b16 %v227, %v226
    %v250 = vpack.c.b16 %v229, %v228
    %v251 = vpack.c.b16 %v231, %v230
    %v252 = vpack.c.b16 %v233, %v232
    %v253 = vpack.c.b16 %v235, %v234
    %v254 = vpack.c.b16 %v237, %v236
    %v255 = vpack.c.b16 %v239, %v238
    %v258 = vunpack.c.l.b16 %v174
    %v259 = vunpack.c.l.b16 %v175
    %v260 = vpack.c.b16 %v259, %v258
    %vm262 = vcmask 130048
    %v264 = vsel %vm262, %v240, 0
    %v267 = vsel %vm262, %v241, 0
    %v270 = vsel %vm262, %v242, 0
    %v273 = vsel %vm262, %v243, 0
    %v276 = vsel %vm262, %v244, 0
    %v279 = vsel %vm262, %v245, 0
    %v282 = vsel %vm262, %v246, 0
    %v285 = vsel %vm262, %v247, 0
    %v288 = vsel %vm262, %v248, 0
    %v291 = vsel %vm262, %v249, 0
    %v294 = vsel %vm262, %v250, 0
    %v297 = vsel %vm262, %v251, 0
    %v300 = vsel %vm262, %v252, 0
    %v303 = vsel %vm262, %v253, 0
    %v306 = vsel %vm262, %v254, 0
    %v309 = vsel %vm262, %v255, 0
    %311 = vmatprep.subr.bf16.mxu0 0
    %312 = vmatpush1.bf16.msra.mxu0 %v260
    %313 = vmatprep.subr.bf16.mxu0 0
    %314 = vmatpush1.bf16.msra.mxu0 0
    %315 = vmatprep.subr.bf16.mxu0 0
    %316 = vmatpush1.bf16.msra.mxu0 0
    %317 = vmatprep.subr.bf16.mxu0 0
    %318 = vmatpush1.bf16.msra.mxu0 0
    %319 = vmatprep.subr.bf16.mxu0 0
    %320 = vmatpush1.bf16.msra.mxu0 0
    %321 = vmatprep.subr.bf16.mxu0 0
    %322 = vmatpush1.bf16.msra.mxu0 0
    %323 = vmatprep.subr.bf16.mxu0 0
    %324 = vmatpush1.bf16.msra.mxu0 0
    %325 = vmatprep.subr.bf16.mxu0 0
    %326 = vmatpush1.bf16.msra.mxu0 0
    %327 = vmatprep.subr.bf16.mxu0 0
    %328 = vmatpush1.bf16.msra.mxu0 0
    %329 = vmatprep.subr.bf16.mxu0 0
    %330 = vmatpush1.bf16.msra.mxu0 0
    %331 = vmatprep.subr.bf16.mxu0 0
    %332 = vmatpush1.bf16.msra.mxu0 0
    %333 = vmatprep.subr.bf16.mxu0 0
    %334 = vmatpush1.bf16.msra.mxu0 0
    %335 = vmatprep.subr.bf16.mxu0 0
    %336 = vmatpush1.bf16.msra.mxu0 0
    %337 = vmatprep.subr.bf16.mxu0 0
    %338 = vmatpush1.bf16.msra.mxu0 0
    %339 = vmatprep.subr.bf16.mxu0 0
    %340 = vmatpush1.bf16.msra.mxu0 0
    %341 = vmatprep.subr.bf16.mxu0 0
    %342 = vmatpush1.bf16.msra.mxu0 0
    %343 = vmatprep.mubr.bf16.mxu0 0
    %344 = vmatmul.mubr.bf16.gmra.mrb[0].mxu0 %v264
    %v345 = vpop.f32.mrb[0].mxu0
    %v346 = vadd.f32 0.0, %v345
    %v347 = vpop.f32.mrb[0].mxu0
    %v348 = vpop.f32.mrb[0].mxu0
    %v349 = vadd.f32 0.0, %v348
    %v350 = vpop.f32.mrb[0].mxu0
    %351 = vmatprep.mubr.bf16.mxu0 0
    %352 = vmatmul.mubr.bf16.gmra.mrb[0].mxu0 %v267
    %v353 = vpop.f32.mrb[0].mxu0
    %v354 = vadd.f32 0.0, %v353
    %v355 = vpop.f32.mrb[0].mxu0
    %v356 = vpop.f32.mrb[0].mxu0
    %v357 = vadd.f32 0.0, %v356
    %v358 = vpop.f32.mrb[0].mxu0
    %359 = vmatprep.mubr.bf16.mxu0 0
    %360 = vmatmul.mubr.bf16.gmra.mrb[0].mxu0 %v270
    %v361 = vpop.f32.mrb[0].mxu0
    %v362 = vadd.f32 0.0, %v361
    %v363 = vpop.f32.mrb[0].mxu0
    %v364 = vpop.f32.mrb[0].mxu0
    %v365 = vadd.f32 0.0, %v364
    %v366 = vpop.f32.mrb[0].mxu0
    %367 = vmatprep.mubr.bf16.mxu0 0
    %368 = vmatmul.mubr.bf16.gmra.mrb[0].mxu0 %v273
    %v369 = vpop.f32.mrb[0].mxu0
    %v370 = vadd.f32 0.0, %v369
    %v371 = vpop.f32.mrb[0].mxu0
    %v372 = vpop.f32.mrb[0].mxu0
    %v373 = vadd.f32 0.0, %v372
    %v374 = vpop.f32.mrb[0].mxu0
    %375 = vmatprep.mubr.bf16.mxu0 0
    %376 = vmatmul.mubr.bf16.gmra.mrb[0].mxu0 %v276
    %v377 = vpop.f32.mrb[0].mxu0
    %v378 = vadd.f32 0.0, %v377
    %v379 = vpop.f32.mrb[0].mxu0
    %v380 = vpop.f32.mrb[0].mxu0
    %v381 = vadd.f32 0.0, %v380
    %v382 = vpop.f32.mrb[0].mxu0
    %383 = vmatprep.mubr.bf16.mxu0 0
    %384 = vmatmul.mubr.bf16.gmra.mrb[0].mxu0 %v279
    %v385 = vpop.f32.mrb[0].mxu0
    %v386 = vadd.f32 0.0, %v385
    %v387 = vpop.f32.mrb[0].mxu0
    %v388 = vpop.f32.mrb[0].mxu0
    %v389 = vadd.f32 0.0, %v388
    %v390 = vpop.f32.mrb[0].mxu0
    %391 = vmatprep.mubr.bf16.mxu0 0
    %392 = vmatmul.mubr.bf16.gmra.mrb[0].mxu0 %v282
    %v393 = vpop.f32.mrb[0].mxu0
    %v394 = vadd.f32 0.0, %v393
    %v395 = vpop.f32.mrb[0].mxu0
    %v396 = vpop.f32.mrb[0].mxu0
    %v397 = vadd.f32 0.0, %v396
    %v398 = vpop.f32.mrb[0].mxu0
    %399 = vmatprep.mubr.bf16.mxu0 0
    %400 = vmatmul.mubr.bf16.gmra.mrb[0].mxu0 %v285
    %v401 = vpop.f32.mrb[0].mxu0
    %v402 = vadd.f32 0.0, %v401
    %v403 = vpop.f32.mrb[0].mxu0
    %v404 = vpop.f32.mrb[0].mxu0
    %v405 = vadd.f32 0.0, %v404
    %v406 = vpop.f32.mrb[0].mxu0
    %407 = vmatprep.mubr.bf16.mxu0 0
    %408 = vmatmul.mubr.bf16.gmra.mrb[0].mxu0 %v288
    %v409 = vpop.f32.mrb[0].mxu0
    %v410 = vadd.f32 0.0, %v409
    %v411 = vpop.f32.mrb[0].mxu0
    %v412 = vpop.f32.mrb[0].mxu0
    %v413 = vadd.f32 0.0, %v412
    %v414 = vpop.f32.mrb[0].mxu0
    %415 = vmatprep.mubr.bf16.mxu0 0
    %416 = vmatmul.mubr.bf16.gmra.mrb[0].mxu0 %v291
    %v417 = vpop.f32.mrb[0].mxu0
    %v418 = vadd.f32 0.0, %v417
    %v419 = vpop.f32.mrb[0].mxu0
    %v420 = vpop.f32.mrb[0].mxu0
    %v421 = vadd.f32 0.0, %v420
    %v422 = vpop.f32.mrb[0].mxu0
    %423 = vmatprep.mubr.bf16.mxu0 0
    %424 = vmatmul.mubr.bf16.gmra.mrb[0].mxu0 %v294
    %v425 = vpop.f32.mrb[0].mxu0
    %v426 = vadd.f32 0.0, %v425
    %v427 = vpop.f32.mrb[0].mxu0
    %v428 = vpop.f32.mrb[0].mxu0
    %v429 = vadd.f32 0.0, %v428
    %v430 = vpop.f32.mrb[0].mxu0
    %431 = vmatprep.mubr.bf16.mxu0 0
    %432 = vmatmul.mubr.bf16.gmra.mrb[0].mxu0 %v297
    %v433 = vpop.f32.mrb[0].mxu0
    %v434 = vadd.f32 0.0, %v433
    %v435 = vpop.f32.mrb[0].mxu0
    %v436 = vpop.f32.mrb[0].mxu0
    %v437 = vadd.f32 0.0, %v436
    %v438 = vpop.f32.mrb[0].mxu0
    %439 = vmatprep.mubr.bf16.mxu0 0
    %440 = vmatmul.mubr.bf16.gmra.mrb[0].mxu0 %v300
    %v441 = vpop.f32.mrb[0].mxu0
    %v442 = vadd.f32 0.0, %v441
    %v443 = vpop.f32.mrb[0].mxu0
    %v444 = vpop.f32.mrb[0].mxu0
    %v445 = vadd.f32 0.0, %v444
    %v446 = vpop.f32.mrb[0].mxu0
    %447 = vmatprep.mubr.bf16.mxu0 0
    %448 = vmatmul.mubr.bf16.gmra.mrb[0].mxu0 %v303
    %v449 = vpop.f32.mrb[0].mxu0
    %v450 = vadd.f32 0.0, %v449
    %v451 = vpop.f32.mrb[0].mxu0
    %v452 = vpop.f32.mrb[0].mxu0
    %v453 = vadd.f32 0.0, %v452
    %v454 = vpop.f32.mrb[0].mxu0
    %455 = vmatprep.mubr.bf16.mxu0 0
    %456 = vmatmul.mubr.bf16.gmra.mrb[0].mxu0 %v306
    %v457 = vpop.f32.mrb[0].mxu0
    %v458 = vadd.f32 0.0, %v457
    %v459 = vpop.f32.mrb[0].mxu0
    %v460 = vpop.f32.mrb[0].mxu0
    %v461 = vadd.f32 0.0, %v460
    %v462 = vpop.f32.mrb[0].mxu0
    %463 = vmatprep.mubr.bf16.mxu0 0
    %464 = vmatmul.mubr.bf16.gmra.mrb[0].mxu0 %v309
    %v465 = vpop.f32.mrb[0].mxu0
    %v466 = vadd.f32 0.0, %v465
    %v467 = vpop.f32.mrb[0].mxu0
    %v468 = vpop.f32.mrb[0].mxu0
    %v469 = vadd.f32 0.0, %v468
    %v470 = vpop.f32.mrb[0].mxu0
    %471 = vdwg.mxu0
    %v472 = vadd.f32 %v110, %v346
    %v473 = vadd.f32 %v111, %v349
    %v474 = vadd.f32 %v112, %v354
    %v475 = vadd.f32 %v113, %v357
    %v476 = vadd.f32 %v114, %v362
    %v477 = vadd.f32 %v115, %v365
    %v478 = vadd.f32 %v116, %v370
    %v479 = vadd.f32 %v117, %v373
    %v480 = vadd.f32 %v118, %v378
    %v481 = vadd.f32 %v119, %v381
    %v482 = vadd.f32 %v120, %v386
    %v483 = vadd.f32 %v121, %v389
    %v484 = vadd.f32 %v122, %v394
    %v485 = vadd.f32 %v123, %v397
    %v486 = vadd.f32 %v124, %v402
    %v487 = vadd.f32 %v125, %v405
    %v488 = vadd.f32 %v126, %v410
    %v489 = vadd.f32 %v127, %v413
    %v490 = vadd.f32 %v128, %v418
    %v491 = vadd.f32 %v129, %v421
    %v492 = vadd.f32 %v130, %v426
    %v493 = vadd.f32 %v131, %v429
    %v494 = vadd.f32 %v132, %v434
    %v495 = vadd.f32 %v133, %v437
    %v496 = vadd.f32 %v134, %v442
    %v497 = vadd.f32 %v135, %v445
    %v498 = vadd.f32 %v136, %v450
    %v499 = vadd.f32 %v137, %v453
    %v500 = vadd.f32 %v138, %v458
    %v501 = vadd.f32 %v139, %v461
    %v502 = vadd.f32 %v140, %v466
    %v503 = vadd.f32 %v141, %v469
    %v504 = vld [vmem:[%s3] sm:$0x1]
    %v506 = vlaneseq
    %v507 = vshrl.u32 %v506, 7
    %v508 = vsub.s32 0, %v507
    %v509 = vrot.slane %v504, %v508
    %v511 = vadd.f32 %v472, %v509
    %v512 = vadd.f32 %v473, %v509
    %v513 = vadd.f32 %v474, %v509
    %v514 = vadd.f32 %v475, %v509
    %v515 = vadd.f32 %v476, %v509
    %v516 = vadd.f32 %v477, %v509
    %v517 = vadd.f32 %v478, %v509
    %v518 = vadd.f32 %v479, %v509
    %v519 = vadd.f32 %v480, %v509
    %v520 = vadd.f32 %v481, %v509
    %v521 = vadd.f32 %v482, %v509
    %v522 = vadd.f32 %v483, %v509
    %v523 = vadd.f32 %v484, %v509
    %v524 = vadd.f32 %v485, %v509
    %v525 = vadd.f32 %v486, %v509
    %v526 = vadd.f32 %v487, %v509
    %v527 = vadd.f32 %v488, %v509
    %v528 = vadd.f32 %v489, %v509
    %v529 = vadd.f32 %v490, %v509
    %v530 = vadd.f32 %v491, %v509
    %v531 = vadd.f32 %v492, %v509
    %v532 = vadd.f32 %v493, %v509
    %v533 = vadd.f32 %v494, %v509
    %v534 = vadd.f32 %v495, %v509
    %v535 = vadd.f32 %v496, %v509
    %v536 = vadd.f32 %v497, %v509
    %v537 = vadd.f32 %v498, %v509
    %v538 = vadd.f32 %v499, %v509
    %v539 = vadd.f32 %v500, %v509
    %v540 = vadd.f32 %v501, %v509
    %v541 = vadd.f32 %v502, %v509
    %v542 = vadd.f32 %v503, %v509
    %v543 = vtanh.pop %v511
    %v544 = vtanh.pop %v512
    %v545 = vtanh.pop %v513
    %v546 = vtanh.pop %v514
    %v547 = vtanh.pop %v515
    %v548 = vtanh.pop %v516
    %v549 = vtanh.pop %v517
    %v550 = vtanh.pop %v518
    %v551 = vtanh.pop %v519
    %v552 = vtanh.pop %v520
    %v553 = vtanh.pop %v521
    %v554 = vtanh.pop %v522
    %v555 = vtanh.pop %v523
    %v556 = vtanh.pop %v524
    %v557 = vtanh.pop %v525
    %v558 = vtanh.pop %v526
    %v559 = vtanh.pop %v527
    %v560 = vtanh.pop %v528
    %v561 = vtanh.pop %v529
    %v562 = vtanh.pop %v530
    %v563 = vtanh.pop %v531
    %v564 = vtanh.pop %v532
    %v565 = vtanh.pop %v533
    %v566 = vtanh.pop %v534
    %v567 = vtanh.pop %v535
    %v568 = vtanh.pop %v536
    %v569 = vtanh.pop %v537
    %v570 = vtanh.pop %v538
    %v571 = vtanh.pop %v539
    %v572 = vtanh.pop %v540
    %v573 = vtanh.pop %v541
    %v574 = vtanh.pop %v542
    %v575 = vpack.c.bf16 %v544, %v543
    %v576 = vpack.c.bf16 %v546, %v545
    %v577 = vpack.c.bf16 %v548, %v547
    %v578 = vpack.c.bf16 %v550, %v549
    %v579 = vpack.c.bf16 %v552, %v551
    %v580 = vpack.c.bf16 %v554, %v553
    %v581 = vpack.c.bf16 %v556, %v555
    %v582 = vpack.c.bf16 %v558, %v557
    %v583 = vpack.c.bf16 %v560, %v559
    %v584 = vpack.c.bf16 %v562, %v561
    %v585 = vpack.c.bf16 %v564, %v563
    %v586 = vpack.c.bf16 %v566, %v565
    %v587 = vpack.c.bf16 %v568, %v567
    %v588 = vpack.c.bf16 %v570, %v569
    %v589 = vpack.c.bf16 %v572, %v571
    %v590 = vpack.c.bf16 %v574, %v573
    %v591 = vld [vmem:[#allocation2] sm:$0xf]
    %v592 = vld [vmem:[#allocation2 + $0x4] sm:$0xf]
    %v593 = vld [vmem:[#allocation2 + $0x8] sm:$0xf]
    %v594 = vld [vmem:[#allocation2 + $0xc] sm:$0xf]
    %v595 = vld [vmem:[#allocation2 + $0x10] sm:$0xf]
    %v596 = vld [vmem:[#allocation2 + $0x14] sm:$0xf]
    %v597 = vld [vmem:[#allocation2 + $0x18] sm:$0xf]
    %v598 = vld [vmem:[#allocation2 + $0x1c] sm:$0xf]
    %v599 = vld [vmem:[#allocation2 + $0x20] sm:$0xf]
    %v600 = vld [vmem:[#allocation2 + $0x24] sm:$0xf]
    %v601 = vld [vmem:[#allocation2 + $0x28] sm:$0xf]
    %v602 = vld [vmem:[#allocation2 + $0x2c] sm:$0xf]
    %v603 = vld [vmem:[#allocation2 + $0x30] sm:$0xf]
    %v604 = vld [vmem:[#allocation2 + $0x34] sm:$0xf]
    %v605 = vld [vmem:[#allocation2 + $0x38] sm:$0xf]
    %v606 = vld [vmem:[#allocation2 + $0x3c] sm:$0xf]
    %v607 = vld [vmem:[%s5] sm:$0x1]
    %v609 = vlaneseq
    %v610 = vshrl.u32 %v609, 7
    %v611 = vsub.s32 0, %v610
    %v612 = vrot.slane %v607, %v611
    %v630 = vunpack.c.l.b16 %v591
    %v631 = vunpack.c.l.b16 %v592
    %v632 = vunpack.c.l.b16 %v593
    %v633 = vunpack.c.l.b16 %v594
    %v634 = vunpack.c.l.b16 %v595
    %v635 = vunpack.c.l.b16 %v596
    %v636 = vunpack.c.l.b16 %v597
    %v637 = vunpack.c.l.b16 %v598
    %v638 = vunpack.c.l.b16 %v599
    %v639 = vunpack.c.l.b16 %v600
    %v640 = vunpack.c.l.b16 %v601
    %v641 = vunpack.c.l.b16 %v602
    %v642 = vunpack.c.l.b16 %v603
    %v643 = vunpack.c.l.b16 %v604
    %v644 = vunpack.c.l.b16 %v605
    %v645 = vunpack.c.l.b16 %v606
    %v646 = vpack.c.b16 %v631, %v630
    %v647 = vpack.c.b16 %v633, %v632
    %v648 = vpack.c.b16 %v635, %v634
    %v649 = vpack.c.b16 %v637, %v636
    %v650 = vpack.c.b16 %v639, %v638
    %v651 = vpack.c.b16 %v641, %v640
    %v652 = vpack.c.b16 %v643, %v642
    %v653 = vpack.c.b16 %v645, %v644
    %662 = vmatprep.subr.bf16.mxu0 0
    %663 = vmatpush1.bf16.msra.mxu0 %v646
    %664 = vmatprep.subr.bf16.mxu0 0
    %665 = vmatpush1.bf16.msra.mxu0 %v647
    %666 = vmatprep.subr.bf16.mxu0 0
    %667 = vmatpush1.bf16.msra.mxu0 %v648
    %668 = vmatprep.subr.bf16.mxu0 0
    %669 = vmatpush1.bf16.msra.mxu0 %v649
    %670 = vmatprep.subr.bf16.mxu0 0
    %671 = vmatpush1.bf16.msra.mxu0 %v650
    %672 = vmatprep.subr.bf16.mxu0 0
    %673 = vmatpush1.bf16.msra.mxu0 %v651
    %674 = vmatprep.subr.bf16.mxu0 0
    %675 = vmatpush1.bf16.msra.mxu0 %v652
    %676 = vmatprep.subr.bf16.mxu0 0
    %677 = vmatpush1.bf16.msra.mxu0 %v653
    %678 = vmatprep.subr.bf16.mxu0 0
    %679 = vmatpush1.bf16.msra.mxu0 0
    %680 = vmatprep.subr.bf16.mxu0 0
    %681 = vmatpush1.bf16.msra.mxu0 0
    %682 = vmatprep.subr.bf16.mxu0 0
    %683 = vmatpush1.bf16.msra.mxu0 0
    %684 = vmatprep.subr.bf16.mxu0 0
    %685 = vmatpush1.bf16.msra.mxu0 0
    %686 = vmatprep.subr.bf16.mxu0 0
    %687 = vmatpush1.bf16.msra.mxu0 0
    %688 = vmatprep.subr.bf16.mxu0 0
    %689 = vmatpush1.bf16.msra.mxu0 0
    %690 = vmatprep.subr.bf16.mxu0 0
    %691 = vmatpush1.bf16.msra.mxu0 0
    %692 = vmatprep.subr.bf16.mxu0 0
    %693 = vmatpush1.bf16.msra.mxu0 0
    %694 = vmatprep.mubr.bf16.mxu0 0
    %695 = vmatmul.mubr.bf16.gmra.mrb[0].mxu0 %v575
    %v696 = vpop.f32.mrb[0].mxu0
    %v697 = vadd.f32 %v612, %v696
    %v698 = vpop.f32.mrb[0].mxu0
    %v699 = vpop.f32.mrb[0].mxu0
    %v700 = vadd.f32 %v612, %v699
    %v701 = vpop.f32.mrb[0].mxu0
    %702 = vmatprep.mubr.bf16.mxu0 0
    %703 = vmatmul.mubr.bf16.gmra.mrb[0].mxu0 %v576
    %v704 = vpop.f32.mrb[0].mxu0
    %v705 = vadd.f32 %v612, %v704
    %v706 = vpop.f32.mrb[0].mxu0
    %v707 = vpop.f32.mrb[0].mxu0
    %v708 = vadd.f32 %v612, %v707
    %v709 = vpop.f32.mrb[0].mxu0
    %710 = vmatprep.mubr.bf16.mxu0 0
    %711 = vmatmul.mubr.bf16.gmra.mrb[0].mxu0 %v577
    %v712 = vpop.f32.mrb[0].mxu0
    %v713 = vadd.f32 %v612, %v712
    %v714 = vpop.f32.mrb[0].mxu0
    %v715 = vpop.f32.mrb[0].mxu0
    %v716 = vadd.f32 %v612, %v715
    %v717 = vpop.f32.mrb[0].mxu0
    %718 = vmatprep.mubr.bf16.mxu0 0
    %719 = vmatmul.mubr.bf16.gmra.mrb[0].mxu0 %v578
    %v720 = vpop.f32.mrb[0].mxu0
    %v721 = vadd.f32 %v612, %v720
    %v722 = vpop.f32.mrb[0].mxu0
    %v723 = vpop.f32.mrb[0].mxu0
    %v724 = vadd.f32 %v612, %v723
    %v725 = vpop.f32.mrb[0].mxu0
    %726 = vmatprep.mubr.bf16.mxu0 0
    %727 = vmatmul.mubr.bf16.gmra.mrb[0].mxu0 %v579
    %v728 = vpop.f32.mrb[0].mxu0
    %v729 = vadd.f32 %v612, %v728
    %v730 = vpop.f32.mrb[0].mxu0
    %v731 = vpop.f32.mrb[0].mxu0
    %v732 = vadd.f32 %v612, %v731
    %v733 = vpop.f32.mrb[0].mxu0
    %734 = vmatprep.mubr.bf16.mxu0 0
    %735 = vmatmul.mubr.bf16.gmra.mrb[0].mxu0 %v580
    %v736 = vpop.f32.mrb[0].mxu0
    %v737 = vadd.f32 %v612, %v736
    %v738 = vpop.f32.mrb[0].mxu0
    %v739 = vpop.f32.mrb[0].mxu0
    %v740 = vadd.f32 %v612, %v739
    %v741 = vpop.f32.mrb[0].mxu0
    %742 = vmatprep.mubr.bf16.mxu0 0
    %743 = vmatmul.mubr.bf16.gmra.mrb[0].mxu0 %v581
    %v744 = vpop.f32.mrb[0].mxu0
    %v745 = vadd.f32 %v612, %v744
    %v746 = vpop.f32.mrb[0].mxu0
    %v747 = vpop.f32.mrb[0].mxu0
    %v748 = vadd.f32 %v612, %v747
    %v749 = vpop.f32.mrb[0].mxu0
    %750 = vmatprep.mubr.bf16.mxu0 0
    %751 = vmatmul.mubr.bf16.gmra.mrb[0].mxu0 %v582
    %v752 = vpop.f32.mrb[0].mxu0
    %v753 = vadd.f32 %v612, %v752
    %v754 = vpop.f32.mrb[0].mxu0
    %v755 = vpop.f32.mrb[0].mxu0
    %v756 = vadd.f32 %v612, %v755
    %v757 = vpop.f32.mrb[0].mxu0
    %758 = vmatprep.mubr.bf16.mxu0 0
    %759 = vmatmul.mubr.bf16.gmra.mrb[0].mxu0 %v583
    %v760 = vpop.f32.mrb[0].mxu0
    %v761 = vadd.f32 %v612, %v760
    %v762 = vpop.f32.mrb[0].mxu0
    %v763 = vpop.f32.mrb[0].mxu0
    %v764 = vadd.f32 %v612, %v763
    %v765 = vpop.f32.mrb[0].mxu0
    %766 = vmatprep.mubr.bf16.mxu0 0
    %767 = vmatmul.mubr.bf16.gmra.mrb[0].mxu0 %v584
    %v768 = vpop.f32.mrb[0].mxu0
    %v769 = vadd.f32 %v612, %v768
    %v770 = vpop.f32.mrb[0].mxu0
    %v771 = vpop.f32.mrb[0].mxu0
    %v772 = vadd.f32 %v612, %v771
    %v773 = vpop.f32.mrb[0].mxu0
    %774 = vmatprep.mubr.bf16.mxu0 0
    %775 = vmatmul.mubr.bf16.gmra.mrb[0].mxu0 %v585
    %v776 = vpop.f32.mrb[0].mxu0
    %v777 = vadd.f32 %v612, %v776
    %v778 = vpop.f32.mrb[0].mxu0
    %v779 = vpop.f32.mrb[0].mxu0
    %v780 = vadd.f32 %v612, %v779
    %v781 = vpop.f32.mrb[0].mxu0
    %782 = vmatprep.mubr.bf16.mxu0 0
    %783 = vmatmul.mubr.bf16.gmra.mrb[0].mxu0 %v586
    %v784 = vpop.f32.mrb[0].mxu0
    %v785 = vadd.f32 %v612, %v784
    %v786 = vpop.f32.mrb[0].mxu0
    %v787 = vpop.f32.mrb[0].mxu0
    %v788 = vadd.f32 %v612, %v787
    %v789 = vpop.f32.mrb[0].mxu0
    %790 = vmatprep.mubr.bf16.mxu0 0
    %791 = vmatmul.mubr.bf16.gmra.mrb[0].mxu0 %v587
    %v792 = vpop.f32.mrb[0].mxu0
    %v793 = vadd.f32 %v612, %v792
    %v794 = vpop.f32.mrb[0].mxu0
    %v795 = vpop.f32.mrb[0].mxu0
    %v796 = vadd.f32 %v612, %v795
    %v797 = vpop.f32.mrb[0].mxu0
    %798 = vmatprep.mubr.bf16.mxu0 0
    %799 = vmatmul.mubr.bf16.gmra.mrb[0].mxu0 %v588
    %v800 = vpop.f32.mrb[0].mxu0
    %v801 = vadd.f32 %v612, %v800
    %v802 = vpop.f32.mrb[0].mxu0
    %v803 = vpop.f32.mrb[0].mxu0
    %v804 = vadd.f32 %v612, %v803
    %v805 = vpop.f32.mrb[0].mxu0
    %806 = vmatprep.mubr.bf16.mxu0 0
    %807 = vmatmul.mubr.bf16.gmra.mrb[0].mxu0 %v589
    %v808 = vpop.f32.mrb[0].mxu0
    %v809 = vadd.f32 %v612, %v808
    %v810 = vpop.f32.mrb[0].mxu0
    %v811 = vpop.f32.mrb[0].mxu0
    %v812 = vadd.f32 %v612, %v811
    %v813 = vpop.f32.mrb[0].mxu0
    %814 = vmatprep.mubr.bf16.mxu0 0
    %815 = vmatmul.mubr.bf16.gmra.mrb[0].mxu0 %v590
    %v816 = vpop.f32.mrb[0].mxu0
    %v817 = vadd.f32 %v612, %v816
    %v818 = vpop.f32.mrb[0].mxu0
    %v819 = vpop.f32.mrb[0].mxu0
    %v820 = vadd.f32 %v612, %v819
    %v821 = vpop.f32.mrb[0].mxu0
    %822 = vdwg.mxu0
    %v823 = vtanh.pop %v697
    %v824 = vtanh.pop %v700
    %v825 = vtanh.pop %v705
    %v826 = vtanh.pop %v708
    %v827 = vtanh.pop %v713
    %v828 = vtanh.pop %v716
    %v829 = vtanh.pop %v721
    %v830 = vtanh.pop %v724
    %v831 = vtanh.pop %v729
    %v832 = vtanh.pop %v732
    %v833 = vtanh.pop %v737
    %v834 = vtanh.pop %v740
    %v835 = vtanh.pop %v745
    %v836 = vtanh.pop %v748
    %v837 = vtanh.pop %v753
    %v838 = vtanh.pop %v756
    %v839 = vtanh.pop %v761
    %v840 = vtanh.pop %v764
    %v841 = vtanh.pop %v769
    %v842 = vtanh.pop %v772
    %v843 = vtanh.pop %v777
    %v844 = vtanh.pop %v780
    %v845 = vtanh.pop %v785
    %v846 = vtanh.pop %v788
    %v847 = vtanh.pop %v793
    %v848 = vtanh.pop %v796
    %v849 = vtanh.pop %v801
    %v850 = vtanh.pop %v804
    %v851 = vtanh.pop %v809
    %v852 = vtanh.pop %v812
    %v853 = vtanh.pop %v817
    %v854 = vtanh.pop %v820
    %v855 = vpack.c.bf16 %v824, %v823
    %v856 = vpack.c.bf16 %v826, %v825
    %v857 = vpack.c.bf16 %v828, %v827
    %v858 = vpack.c.bf16 %v830, %v829
    %v859 = vpack.c.bf16 %v832, %v831
    %v860 = vpack.c.bf16 %v834, %v833
    %v861 = vpack.c.bf16 %v836, %v835
    %v862 = vpack.c.bf16 %v838, %v837
    %v863 = vpack.c.bf16 %v840, %v839
    %v864 = vpack.c.bf16 %v842, %v841
    %v865 = vpack.c.bf16 %v844, %v843
    %v866 = vpack.c.bf16 %v846, %v845
    %v867 = vpack.c.bf16 %v848, %v847
    %v868 = vpack.c.bf16 %v850, %v849
    %v869 = vpack.c.bf16 %v852, %v851
    %v870 = vpack.c.bf16 %v854, %v853
    %v871 = vld [vmem:[#allocation5] sm:$0xff]
    %v872 = vld [vmem:[#allocation5 + $0x8] sm:$0xff]
    %v873 = vld [vmem:[#allocation5 + $0x10] sm:$0xff]
    %v874 = vld [vmem:[#allocation5 + $0x18] sm:$0xff]
    %v875 = vld [vmem:[#allocation5 + $0x20] sm:$0xff]
    %v876 = vld [vmem:[#allocation5 + $0x28] sm:$0xff]
    %v877 = vld [vmem:[#allocation5 + $0x30] sm:$0xff]
    %v878 = vld [vmem:[#allocation5 + $0x38] sm:$0xff]
    %v879 = vld [vmem:[#allocation5 + $0x40] sm:$0xff]
    %v880 = vld [vmem:[#allocation5 + $0x48] sm:$0xff]
    %v881 = vld [vmem:[#allocation5 + $0x50] sm:$0xff]
    %v882 = vld [vmem:[#allocation5 + $0x58] sm:$0xff]
    %v883 = vld [vmem:[#allocation5 + $0x60] sm:$0xff]
    %v884 = vld [vmem:[#allocation5 + $0x68] sm:$0xff]
    %v885 = vld [vmem:[#allocation5 + $0x70] sm:$0xff]
    %v886 = vld [vmem:[#allocation5 + $0x78] sm:$0xff]
    %v887 = vld [vmem:[%s7] sm:$0x3]
    %v889 = vlaneseq
    %v890 = vshrl.u32 %v889, 7
    %v891 = vsub.s32 0, %v890
    %v892 = vrot.slane %v887, %v891
    %v893 = vlaneseq
    %v894 = vshrl.u32 %v893, 7
    %v895 = vsub.s32 1, %v894
    %v896 = vrot.slane %v887, %v895
    %v915 = vunpack.c.l.b16 %v871
    %v916 = vunpack.c.h.b16 %v871
    %v917 = vunpack.c.l.b16 %v872
    %v918 = vunpack.c.h.b16 %v872
    %v919 = vunpack.c.l.b16 %v873
    %v920 = vunpack.c.h.b16 %v873
    %v921 = vunpack.c.l.b16 %v874
    %v922 = vunpack.c.h.b16 %v874
    %v923 = vunpack.c.l.b16 %v875
    %v924 = vunpack.c.h.b16 %v875
    %v925 = vunpack.c.l.b16 %v876
    %v926 = vunpack.c.h.b16 %v876
    %v927 = vunpack.c.l.b16 %v877
    %v928 = vunpack.c.h.b16 %v877
    %v929 = vunpack.c.l.b16 %v878
    %v930 = vunpack.c.h.b16 %v878
    %v931 = vunpack.c.l.b16 %v879
    %v932 = vunpack.c.h.b16 %v879
    %v933 = vunpack.c.l.b16 %v880
    %v934 = vunpack.c.h.b16 %v880
    %v935 = vunpack.c.l.b16 %v881
    %v936 = vunpack.c.h.b16 %v881
    %v937 = vunpack.c.l.b16 %v882
    %v938 = vunpack.c.h.b16 %v882
    %v939 = vunpack.c.l.b16 %v883
    %v940 = vunpack.c.h.b16 %v883
    %v941 = vunpack.c.l.b16 %v884
    %v942 = vunpack.c.h.b16 %v884
    %v943 = vunpack.c.l.b16 %v885
    %v944 = vunpack.c.h.b16 %v885
    %v945 = vunpack.c.l.b16 %v886
    %v946 = vunpack.c.h.b16 %v886
    %v947 = vpack.c.b16 %v917, %v915
    %v948 = vpack.c.b16 %v918, %v916
    %v949 = vpack.c.b16 %v921, %v919
    %v950 = vpack.c.b16 %v922, %v920
    %v951 = vpack.c.b16 %v925, %v923
    %v952 = vpack.c.b16 %v926, %v924
    %v953 = vpack.c.b16 %v929, %v927
    %v954 = vpack.c.b16 %v930, %v928
    %v955 = vpack.c.b16 %v933, %v931
    %v956 = vpack.c.b16 %v934, %v932
    %v957 = vpack.c.b16 %v937, %v935
    %v958 = vpack.c.b16 %v938, %v936
    %v959 = vpack.c.b16 %v941, %v939
    %v960 = vpack.c.b16 %v942, %v940
    %v961 = vpack.c.b16 %v945, %v943
    %v962 = vpack.c.b16 %v946, %v944
    %979 = vmatprep.subr.bf16.mxu0 %v948
    %980 = vmatpush1.bf16.msra.mxu0 %v947
    %981 = vmatprep.subr.bf16.mxu0 %v950
    %982 = vmatpush1.bf16.msra.mxu0 %v949
    %983 = vmatprep.subr.bf16.mxu0 %v952
    %984 = vmatpush1.bf16.msra.mxu0 %v951
    %985 = vmatprep.subr.bf16.mxu0 %v954
    %986 = vmatpush1.bf16.msra.mxu0 %v953
    %987 = vmatprep.subr.bf16.mxu0 %v956
    %988 = vmatpush1.bf16.msra.mxu0 %v955
    %989 = vmatprep.subr.bf16.mxu0 %v958
    %990 = vmatpush1.bf16.msra.mxu0 %v957
    %991 = vmatprep.subr.bf16.mxu0 %v960
    %992 = vmatpush1.bf16.msra.mxu0 %v959
    %993 = vmatprep.subr.bf16.mxu0 %v962
    %994 = vmatpush1.bf16.msra.mxu0 %v961
    %995 = vmatprep.subr.bf16.mxu0 0
    %996 = vmatpush1.bf16.msra.mxu0 0
    %997 = vmatprep.subr.bf16.mxu0 0
    %998 = vmatpush1.bf16.msra.mxu0 0
    %999 = vmatprep.subr.bf16.mxu0 0
    %1000 = vmatpush1.bf16.msra.mxu0 0
    %1001 = vmatprep.subr.bf16.mxu0 0
    %1002 = vmatpush1.bf16.msra.mxu0 0
    %1003 = vmatprep.subr.bf16.mxu0 0
    %1004 = vmatpush1.bf16.msra.mxu0 0
    %1005 = vmatprep.subr.bf16.mxu0 0
    %1006 = vmatpush1.bf16.msra.mxu0 0
    %1007 = vmatprep.subr.bf16.mxu0 0
    %1008 = vmatpush1.bf16.msra.mxu0 0
    %1009 = vmatprep.subr.bf16.mxu0 0
    %1010 = vmatpush1.bf16.msra.mxu0 0
    %1011 = vmatprep.mubr.bf16.mxu0 0
    %1012 = vmatmul.mubr.bf16.gmra.mrb[0].mxu0 %v855
    %v1013 = vpop.f32.mrb[0].mxu0
    %v1014 = vadd.f32 %v892, %v1013
    %v1015 = vpop.f32.mrb[0].mxu0
    %v1016 = vadd.f32 %v896, %v1015
    %v1017 = vpop.f32.mrb[0].mxu0
    %v1018 = vadd.f32 %v892, %v1017
    %v1019 = vpop.f32.mrb[0].mxu0
    %v1020 = vadd.f32 %v896, %v1019
    %1021 = vmatprep.mubr.bf16.mxu0 0
    %1022 = vmatmul.mubr.bf16.gmra.mrb[0].mxu0 %v856
    %v1023 = vpop.f32.mrb[0].mxu0
    %v1024 = vadd.f32 %v892, %v1023
    %v1025 = vpop.f32.mrb[0].mxu0
    %v1026 = vadd.f32 %v896, %v1025
    %v1027 = vpop.f32.mrb[0].mxu0
    %v1028 = vadd.f32 %v892, %v1027
    %v1029 = vpop.f32.mrb[0].mxu0
    %v1030 = vadd.f32 %v896, %v1029
    %1031 = vmatprep.mubr.bf16.mxu0 0
    %1032 = vmatmul.mubr.bf16.gmra.mrb[0].mxu0 %v857
    %v1033 = vpop.f32.mrb[0].mxu0
    %v1034 = vadd.f32 %v892, %v1033
    %v1035 = vpop.f32.mrb[0].mxu0
    %v1036 = vadd.f32 %v896, %v1035
    %v1037 = vpop.f32.mrb[0].mxu0
    %v1038 = vadd.f32 %v892, %v1037
    %v1039 = vpop.f32.mrb[0].mxu0
    %v1040 = vadd.f32 %v896, %v1039
    %1041 = vmatprep.mubr.bf16.mxu0 0
    %1042 = vmatmul.mubr.bf16.gmra.mrb[0].mxu0 %v858
    %v1043 = vpop.f32.mrb[0].mxu0
    %v1044 = vadd.f32 %v892, %v1043
    %v1045 = vpop.f32.mrb[0].mxu0
    %v1046 = vadd.f32 %v896, %v1045
    %v1047 = vpop.f32.mrb[0].mxu0
    %v1048 = vadd.f32 %v892, %v1047
    %v1049 = vpop.f32.mrb[0].mxu0
    %v1050 = vadd.f32 %v896, %v1049
    %1051 = vmatprep.mubr.bf16.mxu0 0
    %1052 = vmatmul.mubr.bf16.gmra.mrb[0].mxu0 %v859
    %v1053 = vpop.f32.mrb[0].mxu0
    %v1054 = vadd.f32 %v892, %v1053
    %v1055 = vpop.f32.mrb[0].mxu0
    %v1056 = vadd.f32 %v896, %v1055
    %v1057 = vpop.f32.mrb[0].mxu0
    %v1058 = vadd.f32 %v892, %v1057
    %v1059 = vpop.f32.mrb[0].mxu0
    %v1060 = vadd.f32 %v896, %v1059
    %1061 = vmatprep.mubr.bf16.mxu0 0
    %1062 = vmatmul.mubr.bf16.gmra.mrb[0].mxu0 %v860
    %v1063 = vpop.f32.mrb[0].mxu0
    %v1064 = vadd.f32 %v892, %v1063
    %v1065 = vpop.f32.mrb[0].mxu0
    %v1066 = vadd.f32 %v896, %v1065
    %v1067 = vpop.f32.mrb[0].mxu0
    %v1068 = vadd.f32 %v892, %v1067
    %v1069 = vpop.f32.mrb[0].mxu0
    %v1070 = vadd.f32 %v896, %v1069
    %1071 = vmatprep.mubr.bf16.mxu0 0
    %1072 = vmatmul.mubr.bf16.gmra.mrb[0].mxu0 %v861
    %v1073 = vpop.f32.mrb[0].mxu0
    %v1074 = vadd.f32 %v892, %v1073
    %v1075 = vpop.f32.mrb[0].mxu0
    %v1076 = vadd.f32 %v896, %v1075
    %v1077 = vpop.f32.mrb[0].mxu0
    %v1078 = vadd.f32 %v892, %v1077
    %v1079 = vpop.f32.mrb[0].mxu0
    %v1080 = vadd.f32 %v896, %v1079
    %1081 = vmatprep.mubr.bf16.mxu0 0
    %1082 = vmatmul.mubr.bf16.gmra.mrb[0].mxu0 %v862
    %v1083 = vpop.f32.mrb[0].mxu0
    %v1084 = vadd.f32 %v892, %v1083
    %v1085 = vpop.f32.mrb[0].mxu0
    %v1086 = vadd.f32 %v896, %v1085
    %v1087 = vpop.f32.mrb[0].mxu0
    %v1088 = vadd.f32 %v892, %v1087
    %v1089 = vpop.f32.mrb[0].mxu0
    %v1090 = vadd.f32 %v896, %v1089
    %1091 = vmatprep.mubr.bf16.mxu0 0
    %1092 = vmatmul.mubr.bf16.gmra.mrb[0].mxu0 %v863
    %v1093 = vpop.f32.mrb[0].mxu0
    %v1094 = vadd.f32 %v892, %v1093
    %v1095 = vpop.f32.mrb[0].mxu0
    %v1096 = vadd.f32 %v896, %v1095
    %v1097 = vpop.f32.mrb[0].mxu0
    %v1098 = vadd.f32 %v892, %v1097
    %v1099 = vpop.f32.mrb[0].mxu0
    %v1100 = vadd.f32 %v896, %v1099
    %1101 = vmatprep.mubr.bf16.mxu0 0
    %1102 = vmatmul.mubr.bf16.gmra.mrb[0].mxu0 %v864
    %v1103 = vpop.f32.mrb[0].mxu0
    %v1104 = vadd.f32 %v892, %v1103
    %v1105 = vpop.f32.mrb[0].mxu0
    %v1106 = vadd.f32 %v896, %v1105
    %v1107 = vpop.f32.mrb[0].mxu0
    %v1108 = vadd.f32 %v892, %v1107
    %v1109 = vpop.f32.mrb[0].mxu0
    %v1110 = vadd.f32 %v896, %v1109
    %1111 = vmatprep.mubr.bf16.mxu0 0
    %1112 = vmatmul.mubr.bf16.gmra.mrb[0].mxu0 %v865
    %v1113 = vpop.f32.mrb[0].mxu0
    %v1114 = vadd.f32 %v892, %v1113
    %v1115 = vpop.f32.mrb[0].mxu0
    %v1116 = vadd.f32 %v896, %v1115
    %v1117 = vpop.f32.mrb[0].mxu0
    %v1118 = vadd.f32 %v892, %v1117
    %v1119 = vpop.f32.mrb[0].mxu0
    %v1120 = vadd.f32 %v896, %v1119
    %1121 = vmatprep.mubr.bf16.mxu0 0
    %1122 = vmatmul.mubr.bf16.gmra.mrb[0].mxu0 %v866
    %v1123 = vpop.f32.mrb[0].mxu0
    %v1124 = vadd.f32 %v892, %v1123
    %v1125 = vpop.f32.mrb[0].mxu0
    %v1126 = vadd.f32 %v896, %v1125
    %v1127 = vpop.f32.mrb[0].mxu0
    %v1128 = vadd.f32 %v892, %v1127
    %v1129 = vpop.f32.mrb[0].mxu0
    %v1130 = vadd.f32 %v896, %v1129
    %1131 = vmatprep.mubr.bf16.mxu0 0
    %1132 = vmatmul.mubr.bf16.gmra.mrb[0].mxu0 %v867
    %v1133 = vpop.f32.mrb[0].mxu0
    %v1134 = vadd.f32 %v892, %v1133
    %v1135 = vpop.f32.mrb[0].mxu0
    %v1136 = vadd.f32 %v896, %v1135
    %v1137 = vpop.f32.mrb[0].mxu0
    %v1138 = vadd.f32 %v892, %v1137
    %v1139 = vpop.f32.mrb[0].mxu0
    %v1140 = vadd.f32 %v896, %v1139
    %1141 = vmatprep.mubr.bf16.mxu0 0
    %1142 = vmatmul.mubr.bf16.gmra.mrb[0].mxu0 %v868
    %v1143 = vpop.f32.mrb[0].mxu0
    %v1144 = vadd.f32 %v892, %v1143
    %v1145 = vpop.f32.mrb[0].mxu0
    %v1146 = vadd.f32 %v896, %v1145
    %v1147 = vpop.f32.mrb[0].mxu0
    %v1148 = vadd.f32 %v892, %v1147
    %v1149 = vpop.f32.mrb[0].mxu0
    %v1150 = vadd.f32 %v896, %v1149
    %1151 = vmatprep.mubr.bf16.mxu0 0
    %1152 = vmatmul.mubr.bf16.gmra.mrb[0].mxu0 %v869
    %v1153 = vpop.f32.mrb[0].mxu0
    %v1154 = vadd.f32 %v892, %v1153
    %v1155 = vpop.f32.mrb[0].mxu0
    %v1156 = vadd.f32 %v896, %v1155
    %v1157 = vpop.f32.mrb[0].mxu0
    %v1158 = vadd.f32 %v892, %v1157
    %v1159 = vpop.f32.mrb[0].mxu0
    %v1160 = vadd.f32 %v896, %v1159
    %1161 = vmatprep.mubr.bf16.mxu0 0
    %1162 = vmatmul.mubr.bf16.gmra.mrb[0].mxu0 %v870
    %v1163 = vpop.f32.mrb[0].mxu0
    %v1164 = vadd.f32 %v892, %v1163
    %v1165 = vpop.f32.mrb[0].mxu0
    %v1166 = vadd.f32 %v896, %v1165
    %v1167 = vpop.f32.mrb[0].mxu0
    %v1168 = vadd.f32 %v892, %v1167
    %v1169 = vpop.f32.mrb[0].mxu0
    %v1170 = vadd.f32 %v896, %v1169
    %1171 = vdwg.mxu0
    %v1172 = vtanh.pop %v1014
    %v1173 = vtanh.pop %v1016
    %v1174 = vtanh.pop %v1018
    %v1175 = vtanh.pop %v1020
    %v1176 = vtanh.pop %v1024
    %v1177 = vtanh.pop %v1026
    %v1178 = vtanh.pop %v1028
    %v1179 = vtanh.pop %v1030
    %v1180 = vtanh.pop %v1034
    %v1181 = vtanh.pop %v1036
    %v1182 = vtanh.pop %v1038
    %v1183 = vtanh.pop %v1040
    %v1184 = vtanh.pop %v1044
    %v1185 = vtanh.pop %v1046
    %v1186 = vtanh.pop %v1048
    %v1187 = vtanh.pop %v1050
    %v1188 = vtanh.pop %v1054
    %v1189 = vtanh.pop %v1056
    %v1190 = vtanh.pop %v1058
    %v1191 = vtanh.pop %v1060
    %v1192 = vtanh.pop %v1064
    %v1193 = vtanh.pop %v1066
    %v1194 = vtanh.pop %v1068
    %v1195 = vtanh.pop %v1070
    %v1196 = vtanh.pop %v1074
    %v1197 = vtanh.pop %v1076
    %v1198 = vtanh.pop %v1078
    %v1199 = vtanh.pop %v1080
    %v1200 = vtanh.pop %v1084
    %v1201 = vtanh.pop %v1086
    %v1202 = vtanh.pop %v1088
    %v1203 = vtanh.pop %v1090
    %v1204 = vtanh.pop %v1094
    %v1205 = vtanh.pop %v1096
    %v1206 = vtanh.pop %v1098
    %v1207 = vtanh.pop %v1100
    %v1208 = vtanh.pop %v1104
    %v1209 = vtanh.pop %v1106
    %v1210 = vtanh.pop %v1108
    %v1211 = vtanh.pop %v1110
    %v1212 = vtanh.pop %v1114
    %v1213 = vtanh.pop %v1116
    %v1214 = vtanh.pop %v1118
    %v1215 = vtanh.pop %v1120
    %v1216 = vtanh.pop %v1124
    %v1217 = vtanh.pop %v1126
    %v1218 = vtanh.pop %v1128
    %v1219 = vtanh.pop %v1130
    %v1220 = vtanh.pop %v1134
    %v1221 = vtanh.pop %v1136
    %v1222 = vtanh.pop %v1138
    %v1223 = vtanh.pop %v1140
    %v1224 = vtanh.pop %v1144
    %v1225 = vtanh.pop %v1146
    %v1226 = vtanh.pop %v1148
    %v1227 = vtanh.pop %v1150
    %v1228 = vtanh.pop %v1154
    %v1229 = vtanh.pop %v1156
    %v1230 = vtanh.pop %v1158
    %v1231 = vtanh.pop %v1160
    %v1232 = vtanh.pop %v1164
    %v1233 = vtanh.pop %v1166
    %v1234 = vtanh.pop %v1168
    %v1235 = vtanh.pop %v1170
    %v1236 = vpack.c.bf16 %v1174, %v1172
    %v1237 = vpack.c.bf16 %v1175, %v1173
    %v1238 = vpack.c.bf16 %v1178, %v1176
    %v1239 = vpack.c.bf16 %v1179, %v1177
    %v1240 = vpack.c.bf16 %v1182, %v1180
    %v1241 = vpack.c.bf16 %v1183, %v1181
    %v1242 = vpack.c.bf16 %v1186, %v1184
    %v1243 = vpack.c.bf16 %v1187, %v1185
    %v1244 = vpack.c.bf16 %v1190, %v1188
    %v1245 = vpack.c.bf16 %v1191, %v1189
    %v1246 = vpack.c.bf16 %v1194, %v1192
    %v1247 = vpack.c.bf16 %v1195, %v1193
    %v1248 = vpack.c.bf16 %v1198, %v1196
    %v1249 = vpack.c.bf16 %v1199, %v1197
    %v1250 = vpack.c.bf16 %v1202, %v1200
    %v1251 = vpack.c.bf16 %v1203, %v1201
    %v1252 = vpack.c.bf16 %v1206, %v1204
    %v1253 = vpack.c.bf16 %v1207, %v1205
    %v1254 = vpack.c.bf16 %v1210, %v1208
    %v1255 = vpack.c.bf16 %v1211, %v1209
    %v1256 = vpack.c.bf16 %v1214, %v1212
    %v1257 = vpack.c.bf16 %v1215, %v1213
    %v1258 = vpack.c.bf16 %v1218, %v1216
    %v1259 = vpack.c.bf16 %v1219, %v1217
    %v1260 = vpack.c.bf16 %v1222, %v1220
    %v1261 = vpack.c.bf16 %v1223, %v1221
    %v1262 = vpack.c.bf16 %v1226, %v1224
    %v1263 = vpack.c.bf16 %v1227, %v1225
    %v1264 = vpack.c.bf16 %v1230, %v1228
    %v1265 = vpack.c.bf16 %v1231, %v1229
    %v1266 = vpack.c.bf16 %v1234, %v1232
    %v1267 = vpack.c.bf16 %v1235, %v1233
    %v1268 = vld [vmem:[#allocation7] sm:$0xf]
    %v1269 = vld [vmem:[#allocation7 + $0x4] sm:$0xf]
    %v1270 = vld [vmem:[#allocation7 + $0x8] sm:$0xf]
    %v1271 = vld [vmem:[#allocation7 + $0xc] sm:$0xf]
    %v1272 = vld [vmem:[#allocation7 + $0x10] sm:$0xf]
    %v1273 = vld [vmem:[#allocation7 + $0x14] sm:$0xf]
    %v1274 = vld [vmem:[#allocation7 + $0x18] sm:$0xf]
    %v1275 = vld [vmem:[#allocation7 + $0x1c] sm:$0xf]
    %v1276 = vld [vmem:[#allocation7 + $0x20] sm:$0xf]
    %v1277 = vld [vmem:[#allocation7 + $0x24] sm:$0xf]
    %v1278 = vld [vmem:[#allocation7 + $0x28] sm:$0xf]
    %v1279 = vld [vmem:[#allocation7 + $0x2c] sm:$0xf]
    %v1280 = vld [vmem:[#allocation7 + $0x30] sm:$0xf]
    %v1281 = vld [vmem:[#allocation7 + $0x34] sm:$0xf]
    %v1282 = vld [vmem:[#allocation7 + $0x38] sm:$0xf]
    %v1283 = vld [vmem:[#allocation7 + $0x3c] sm:$0xf]
    %v1284 = vld [vmem:[#allocation7 + $0x40] sm:$0xf]
    %v1285 = vld [vmem:[#allocation7 + $0x44] sm:$0xf]
    %v1286 = vld [vmem:[#allocation7 + $0x48] sm:$0xf]
    %v1287 = vld [vmem:[#allocation7 + $0x4c] sm:$0xf]
    %v1288 = vld [vmem:[#allocation7 + $0x50] sm:$0xf]
    %v1289 = vld [vmem:[#allocation7 + $0x54] sm:$0xf]
    %v1290 = vld [vmem:[#allocation7 + $0x58] sm:$0xf]
    %v1291 = vld [vmem:[#allocation7 + $0x5c] sm:$0xf]
    %v1292 = vld [vmem:[#allocation7 + $0x60] sm:$0xf]
    %v1293 = vld [vmem:[#allocation7 + $0x64] sm:$0xf]
    %v1294 = vld [vmem:[#allocation7 + $0x68] sm:$0xf]
    %v1295 = vld [vmem:[#allocation7 + $0x6c] sm:$0xf]
    %v1296 = vld [vmem:[#allocation7 + $0x70] sm:$0xf]
    %v1297 = vld [vmem:[#allocation7 + $0x74] sm:$0xf]
    %v1298 = vld [vmem:[#allocation7 + $0x78] sm:$0xf]
    %v1299 = vld [vmem:[#allocation7 + $0x7c] sm:$0xf]
    %v1300 = vld [vmem:[%s9] sm:$0x1]
    %v1302 = vlaneseq
    %v1303 = vshrl.u32 %v1302, 7
    %v1304 = vsub.s32 0, %v1303
    %v1305 = vrot.slane %v1300, %v1304
    %v1339 = vunpack.c.l.b16 %v1268
    %v1340 = vunpack.c.l.b16 %v1269
    %v1341 = vunpack.c.l.b16 %v1270
    %v1342 = vunpack.c.l.b16 %v1271
    %v1343 = vunpack.c.l.b16 %v1272
    %v1344 = vunpack.c.l.b16 %v1273
    %v1345 = vunpack.c.l.b16 %v1274
    %v1346 = vunpack.c.l.b16 %v1275
    %v1347 = vunpack.c.l.b16 %v1276
    %v1348 = vunpack.c.l.b16 %v1277
    %v1349 = vunpack.c.l.b16 %v1278
    %v1350 = vunpack.c.l.b16 %v1279
    %v1351 = vunpack.c.l.b16 %v1280
    %v1352 = vunpack.c.l.b16 %v1281
    %v1353 = vunpack.c.l.b16 %v1282
    %v1354 = vunpack.c.l.b16 %v1283
    %v1355 = vunpack.c.l.b16 %v1284
    %v1356 = vunpack.c.l.b16 %v1285
    %v1357 = vunpack.c.l.b16 %v1286
    %v1358 = vunpack.c.l.b16 %v1287
    %v1359 = vunpack.c.l.b16 %v1288
    %v1360 = vunpack.c.l.b16 %v1289
    %v1361 = vunpack.c.l.b16 %v1290
    %v1362 = vunpack.c.l.b16 %v1291
    %v1363 = vunpack.c.l.b16 %v1292
    %v1364 = vunpack.c.l.b16 %v1293
    %v1365 = vunpack.c.l.b16 %v1294
    %v1366 = vunpack.c.l.b16 %v1295
    %v1367 = vunpack.c.l.b16 %v1296
    %v1368 = vunpack.c.l.b16 %v1297
    %v1369 = vunpack.c.l.b16 %v1298
    %v1370 = vunpack.c.l.b16 %v1299
    %v1371 = vpack.c.b16 %v1340, %v1339
    %v1372 = vpack.c.b16 %v1342, %v1341
    %v1373 = vpack.c.b16 %v1344, %v1343
    %v1374 = vpack.c.b16 %v1346, %v1345
    %v1375 = vpack.c.b16 %v1348, %v1347
    %v1376 = vpack.c.b16 %v1350, %v1349
    %v1377 = vpack.c.b16 %v1352, %v1351
    %v1378 = vpack.c.b16 %v1354, %v1353
    %v1379 = vpack.c.b16 %v1356, %v1355
    %v1380 = vpack.c.b16 %v1358, %v1357
    %v1381 = vpack.c.b16 %v1360, %v1359
    %v1382 = vpack.c.b16 %v1362, %v1361
    %v1383 = vpack.c.b16 %v1364, %v1363
    %v1384 = vpack.c.b16 %v1366, %v1365
    %v1385 = vpack.c.b16 %v1368, %v1367
    %v1386 = vpack.c.b16 %v1370, %v1369
    %1403 = vmatprep.subr.bf16.mxu0 0
    %1404 = vmatpush1.bf16.msra.mxu0 %v1371
    %1405 = vmatprep.subr.bf16.mxu0 0
    %1406 = vmatpush1.bf16.msra.mxu0 %v1372
    %1407 = vmatprep.subr.bf16.mxu0 0
    %1408 = vmatpush1.bf16.msra.mxu0 %v1373
    %1409 = vmatprep.subr.bf16.mxu0 0
    %1410 = vmatpush1.bf16.msra.mxu0 %v1374
    %1411 = vmatprep.subr.bf16.mxu0 0
    %1412 = vmatpush1.bf16.msra.mxu0 %v1375
    %1413 = vmatprep.subr.bf16.mxu0 0
    %1414 = vmatpush1.bf16.msra.mxu0 %v1376
    %1415 = vmatprep.subr.bf16.mxu0 0
    %1416 = vmatpush1.bf16.msra.mxu0 %v1377
    %1417 = vmatprep.subr.bf16.mxu0 0
    %1418 = vmatpush1.bf16.msra.mxu0 %v1378
    %1419 = vmatprep.subr.bf16.mxu0 0
    %1420 = vmatpush1.bf16.msra.mxu0 %v1379
    %1421 = vmatprep.subr.bf16.mxu0 0
    %1422 = vmatpush1.bf16.msra.mxu0 %v1380
    %1423 = vmatprep.subr.bf16.mxu0 0
    %1424 = vmatpush1.bf16.msra.mxu0 %v1381
    %1425 = vmatprep.subr.bf16.mxu0 0
    %1426 = vmatpush1.bf16.msra.mxu0 %v1382
    %1427 = vmatprep.subr.bf16.mxu0 0
    %1428 = vmatpush1.bf16.msra.mxu0 %v1383
    %1429 = vmatprep.subr.bf16.mxu0 0
    %1430 = vmatpush1.bf16.msra.mxu0 %v1384
    %1431 = vmatprep.subr.bf16.mxu0 0
    %1432 = vmatpush1.bf16.msra.mxu0 %v1385
    %1433 = vmatprep.subr.bf16.mxu0 0
    %1434 = vmatpush1.bf16.msra.mxu0 %v1386
    %1435 = vmatprep.mubr.bf16.mxu0 %v1237
    %1436 = vmatmul.mubr.bf16.gmra.mrb[0].mxu0 %v1236
    %v1437 = vpop.f32.mrb[0].mxu0
    %v1438 = vadd.f32 %v1305, %v1437
    %v1439 = vpop.f32.mrb[0].mxu0
    %v1440 = vpop.f32.mrb[0].mxu0
    %v1441 = vadd.f32 %v1305, %v1440
    %v1442 = vpop.f32.mrb[0].mxu0
    %1443 = vmatprep.mubr.bf16.mxu0 %v1239
    %1444 = vmatmul.mubr.bf16.gmra.mrb[0].mxu0 %v1238
    %v1445 = vpop.f32.mrb[0].mxu0
    %v1446 = vadd.f32 %v1305, %v1445
    %v1447 = vpop.f32.mrb[0].mxu0
    %v1448 = vpop.f32.mrb[0].mxu0
    %v1449 = vadd.f32 %v1305, %v1448
    %v1450 = vpop.f32.mrb[0].mxu0
    %1451 = vmatprep.mubr.bf16.mxu0 %v1241
    %1452 = vmatmul.mubr.bf16.gmra.mrb[0].mxu0 %v1240
    %v1453 = vpop.f32.mrb[0].mxu0
    %v1454 = vadd.f32 %v1305, %v1453
    %v1455 = vpop.f32.mrb[0].mxu0
    %v1456 = vpop.f32.mrb[0].mxu0
    %v1457 = vadd.f32 %v1305, %v1456
    %v1458 = vpop.f32.mrb[0].mxu0
    %1459 = vmatprep.mubr.bf16.mxu0 %v1243
    %1460 = vmatmul.mubr.bf16.gmra.mrb[0].mxu0 %v1242
    %v1461 = vpop.f32.mrb[0].mxu0
    %v1462 = vadd.f32 %v1305, %v1461
    %v1463 = vpop.f32.mrb[0].mxu0
    %v1464 = vpop.f32.mrb[0].mxu0
    %v1465 = vadd.f32 %v1305, %v1464
    %v1466 = vpop.f32.mrb[0].mxu0
    %1467 = vmatprep.mubr.bf16.mxu0 %v1245
    %1468 = vmatmul.mubr.bf16.gmra.mrb[0].mxu0 %v1244
    %v1469 = vpop.f32.mrb[0].mxu0
    %v1470 = vadd.f32 %v1305, %v1469
    %v1471 = vpop.f32.mrb[0].mxu0
    %v1472 = vpop.f32.mrb[0].mxu0
    %v1473 = vadd.f32 %v1305, %v1472
    %v1474 = vpop.f32.mrb[0].mxu0
    %1475 = vmatprep.mubr.bf16.mxu0 %v1247
    %1476 = vmatmul.mubr.bf16.gmra.mrb[0].mxu0 %v1246
    %v1477 = vpop.f32.mrb[0].mxu0
    %v1478 = vadd.f32 %v1305, %v1477
    %v1479 = vpop.f32.mrb[0].mxu0
    %v1480 = vpop.f32.mrb[0].mxu0
    %v1481 = vadd.f32 %v1305, %v1480
    %v1482 = vpop.f32.mrb[0].mxu0
    %1483 = vmatprep.mubr.bf16.mxu0 %v1249
    %1484 = vmatmul.mubr.bf16.gmra.mrb[0].mxu0 %v1248
    %v1485 = vpop.f32.mrb[0].mxu0
    %v1486 = vadd.f32 %v1305, %v1485
    %v1487 = vpop.f32.mrb[0].mxu0
    %v1488 = vpop.f32.mrb[0].mxu0
    %v1489 = vadd.f32 %v1305, %v1488
    %v1490 = vpop.f32.mrb[0].mxu0
    %1491 = vmatprep.mubr.bf16.mxu0 %v1251
    %1492 = vmatmul.mubr.bf16.gmra.mrb[0].mxu0 %v1250
    %v1493 = vpop.f32.mrb[0].mxu0
    %v1494 = vadd.f32 %v1305, %v1493
    %v1495 = vpop.f32.mrb[0].mxu0
    %v1496 = vpop.f32.mrb[0].mxu0
    %v1497 = vadd.f32 %v1305, %v1496
    %v1498 = vpop.f32.mrb[0].mxu0
    %1499 = vmatprep.mubr.bf16.mxu0 %v1253
    %1500 = vmatmul.mubr.bf16.gmra.mrb[0].mxu0 %v1252
    %v1501 = vpop.f32.mrb[0].mxu0
    %v1502 = vadd.f32 %v1305, %v1501
    %v1503 = vpop.f32.mrb[0].mxu0
    %v1504 = vpop.f32.mrb[0].mxu0
    %v1505 = vadd.f32 %v1305, %v1504
    %v1506 = vpop.f32.mrb[0].mxu0
    %1507 = vmatprep.mubr.bf16.mxu0 %v1255
    %1508 = vmatmul.mubr.bf16.gmra.mrb[0].mxu0 %v1254
    %v1509 = vpop.f32.mrb[0].mxu0
    %v1510 = vadd.f32 %v1305, %v1509
    %v1511 = vpop.f32.mrb[0].mxu0
    %v1512 = vpop.f32.mrb[0].mxu0
    %v1513 = vadd.f32 %v1305, %v1512
    %v1514 = vpop.f32.mrb[0].mxu0
    %1515 = vmatprep.mubr.bf16.mxu0 %v1257
    %1516 = vmatmul.mubr.bf16.gmra.mrb[0].mxu0 %v1256
    %v1517 = vpop.f32.mrb[0].mxu0
    %v1518 = vadd.f32 %v1305, %v1517
    %v1519 = vpop.f32.mrb[0].mxu0
    %v1520 = vpop.f32.mrb[0].mxu0
    %v1521 = vadd.f32 %v1305, %v1520
    %v1522 = vpop.f32.mrb[0].mxu0
    %1523 = vmatprep.mubr.bf16.mxu0 %v1259
    %1524 = vmatmul.mubr.bf16.gmra.mrb[0].mxu0 %v1258
    %v1525 = vpop.f32.mrb[0].mxu0
    %v1526 = vadd.f32 %v1305, %v1525
    %v1527 = vpop.f32.mrb[0].mxu0
    %v1528 = vpop.f32.mrb[0].mxu0
    %v1529 = vadd.f32 %v1305, %v1528
    %v1530 = vpop.f32.mrb[0].mxu0
    %1531 = vmatprep.mubr.bf16.mxu0 %v1261
    %1532 = vmatmul.mubr.bf16.gmra.mrb[0].mxu0 %v1260
    %v1533 = vpop.f32.mrb[0].mxu0
    %v1534 = vadd.f32 %v1305, %v1533
    %v1535 = vpop.f32.mrb[0].mxu0
    %v1536 = vpop.f32.mrb[0].mxu0
    %v1537 = vadd.f32 %v1305, %v1536
    %v1538 = vpop.f32.mrb[0].mxu0
    %1539 = vmatprep.mubr.bf16.mxu0 %v1263
    %1540 = vmatmul.mubr.bf16.gmra.mrb[0].mxu0 %v1262
    %v1541 = vpop.f32.mrb[0].mxu0
    %v1542 = vadd.f32 %v1305, %v1541
    %v1543 = vpop.f32.mrb[0].mxu0
    %v1544 = vpop.f32.mrb[0].mxu0
    %v1545 = vadd.f32 %v1305, %v1544
    %v1546 = vpop.f32.mrb[0].mxu0
    %1547 = vmatprep.mubr.bf16.mxu0 %v1265
    %1548 = vmatmul.mubr.bf16.gmra.mrb[0].mxu0 %v1264
    %v1549 = vpop.f32.mrb[0].mxu0
    %v1550 = vadd.f32 %v1305, %v1549
    %v1551 = vpop.f32.mrb[0].mxu0
    %v1552 = vpop.f32.mrb[0].mxu0
    %v1553 = vadd.f32 %v1305, %v1552
    %v1554 = vpop.f32.mrb[0].mxu0
    %1555 = vmatprep.mubr.bf16.mxu0 %v1267
    %1556 = vmatmul.mubr.bf16.gmra.mrb[0].mxu0 %v1266
    %v1557 = vpop.f32.mrb[0].mxu0
    %v1558 = vadd.f32 %v1305, %v1557
    %v1559 = vpop.f32.mrb[0].mxu0
    %v1560 = vpop.f32.mrb[0].mxu0
    %v1561 = vadd.f32 %v1305, %v1560
    %v1562 = vpop.f32.mrb[0].mxu0
    %1563 = vdwg.mxu0
    %1564 = vst [vmem:[#allocation8] sm:$0xff] %v1438
    %1565 = vst [vmem:[#allocation8 + $0x8] sm:$0xff] %v1441
    %1566 = vst [vmem:[#allocation8 + $0x10] sm:$0xff] %v1446
    %1567 = vst [vmem:[#allocation8 + $0x18] sm:$0xff] %v1449
    %1568 = vst [vmem:[#allocation8 + $0x20] sm:$0xff] %v1454
    %1569 = vst [vmem:[#allocation8 + $0x28] sm:$0xff] %v1457
    %1570 = vst [vmem:[#allocation8 + $0x30] sm:$0xff] %v1462
    %1571 = vst [vmem:[#allocation8 + $0x38] sm:$0xff] %v1465
    %1572 = vst [vmem:[#allocation8 + $0x40] sm:$0xff] %v1470
    %1573 = vst [vmem:[#allocation8 + $0x48] sm:$0xff] %v1473
    %1574 = vst [vmem:[#allocation8 + $0x50] sm:$0xff] %v1478
    %1575 = vst [vmem:[#allocation8 + $0x58] sm:$0xff] %v1481
    %1576 = vst [vmem:[#allocation8 + $0x60] sm:$0xff] %v1486
    %1577 = vst [vmem:[#allocation8 + $0x68] sm:$0xff] %v1489
    %1578 = vst [vmem:[#allocation8 + $0x70] sm:$0xff] %v1494
    %1579 = vst [vmem:[#allocation8 + $0x78] sm:$0xff] %v1497
    %1580 = vst [vmem:[#allocation8 + $0x80] sm:$0xff] %v1502
    %1581 = vst [vmem:[#allocation8 + $0x88] sm:$0xff] %v1505
    %1582 = vst [vmem:[#allocation8 + $0x90] sm:$0xff] %v1510
    %1583 = vst [vmem:[#allocation8 + $0x98] sm:$0xff] %v1513
    %1584 = vst [vmem:[#allocation8 + $0xa0] sm:$0xff] %v1518
    %1585 = vst [vmem:[#allocation8 + $0xa8] sm:$0xff] %v1521
    %1586 = vst [vmem:[#allocation8 + $0xb0] sm:$0xff] %v1526
    %1587 = vst [vmem:[#allocation8 + $0xb8] sm:$0xff] %v1529
    %1588 = vst [vmem:[#allocation8 + $0xc0] sm:$0xff] %v1534
    %1589 = vst [vmem:[#allocation8 + $0xc8] sm:$0xff] %v1537
    %1590 = vst [vmem:[#allocation8 + $0xd0] sm:$0xff] %v1542
    %1591 = vst [vmem:[#allocation8 + $0xd8] sm:$0xff] %v1545
    %1592 = vst [vmem:[#allocation8 + $0xe0] sm:$0xff] %v1550
    %1593 = vst [vmem:[#allocation8 + $0xe8] sm:$0xff] %v1553
    %1594 = vst [vmem:[#allocation8 + $0xf0] sm:$0xff] %v1558
    %1595 = vst [vmem:[#allocation8 + $0xf8] sm:$0xff] %v1561
    // Predicated region
    $region54: #{tpu_custom_call.1} parent=1 // pred_check
      _
    $region55: #{tpu_custom_call.1} parent=1 // pred_check_branch
      %1597 = sbr.rel (0) target = $region57
    $region56: #{tpu_custom_call.1} parent=1 // pred_region
      %s1599 = ssub.s32 4096, 4096
      %1600 = vsyncadd [#allocation4], %s1599
      %s1601 = sshll.u32 [#allocation8], 4
      %s1602 = int_to_ptr.vmem [resolvable:$true] %s1601
      %1607 = dma.vmem_to_hbm [thread:$0]  %s1602, 4096, %s10, [#allocation4], 128, 128, 8
    $region57: #{tpu_custom_call.1} parent=1 // pred_fallthru
      _
    // Predicated region
    $region58: #{tpu_custom_call.1} parent=1 // pred_check
      _
    $region59: #{tpu_custom_call.1} parent=1 // pred_check_branch
      %1609 = sbr.rel (0) target = $region61
    $region60: #{tpu_custom_call.1} parent=1 // pred_region
      %1610 = dma.done [#allocation4], 4096
    $region61: #{tpu_custom_call.1} parent=1 // pred_fallthru
      _
    %1611 = vsyncpa [#allocation3], 1
    %1612 = vsyncpa [#allocation6], 1
    %1613 = vsyncpa [#allocation4], 1

// kernel: tpu_custom_call.1
$region0: #{tpu_custom_call.1}
  #allocation0 [shape = 'u32[]', space=smem, size = 0x4, offset = 0x4, fixed_abs, tag = 'smem constant byte address 0x4 - core index']
  #allocation1 [shape = 'u32[144,128]{1,0:T(1,128)}', space=vmem, size = 0x12000, scoped, tag = 'internal scratch']
  %s0 = inlined_call_operand.vmem [shape: bf16[256,128], index: 0, kind: input, shape index: {}]
  %s1 = inlined_call_operand.vmem [shape: bf16[256,16], index: 1, kind: input, shape index: {}]
  %s2 = inlined_call_operand.vmem [shape: bf16[16,128], index: 2, kind: input, shape index: {}]
  %s3 = inlined_call_operand.vmem [shape: f32[1,128], index: 3, kind: input, shape index: {}]
  %s4 = inlined_call_operand.hbm [shape: bf16[128,128], index: 4, kind: input, shape index: {}]
  %s5 = inlined_call_operand.vmem [shape: f32[1,128], index: 5, kind: input, shape index: {}]
  %s6 = inlined_call_operand.hbm [shape: bf16[128,256], index: 6, kind: input, shape index: {}]
  %s7 = inlined_call_operand.vmem [shape: f32[1,256], index: 7, kind: input, shape index: {}]
  %s8 = inlined_call_operand.hbm [shape: bf16[256,128], index: 8, kind: input, shape index: {}]
  %s9 = inlined_call_operand.vmem [shape: f32[1,128], index: 9, kind: input, shape index: {}]
  %s10 = inlined_call_operand.hbm [shape: f32[256,128], index: 10, kind: output, shape index: {}]
  %s11 = sld [smem:[#allocation0]]
  $region62: #{tpu_custom_call.1} parent=0
    _
  %s13 = ssub.s32 1, %s11
  %s14 = scalar_select 0, %s13, %s11
  $region1: #{tpu_custom_call.1} parent=0
    #allocation2 [shape = 'u8[32768]{0}', space=vmem, size = 0x8000, scoped, tag = 'input window, operand 4, single buffered']
    #allocation3 [shape = 's32[1]{0}', space=sflag, size = 0x4, scoped, tag = 'scoped memory for tpu_custom_call.1']
    #allocation4 [shape = 's32[1]{0}', space=sflag, size = 0x4, scoped, tag = 'scoped memory for tpu_custom_call.1']
    #allocation5 [shape = 'u8[65536]{0}', space=vmem, size = 0x10000, scoped, tag = 'input window, operand 6, single buffered']
    #allocation6 [shape = 's32[1]{0}', space=sflag, size = 0x4, scoped, tag = 'scoped memory for tpu_custom_call.1']
    #allocation7 [shape = 'u8[65536]{0}', space=vmem, size = 0x10000, scoped, tag = 'input window, operand 8, single buffered']
    #allocation8 [shape = 'u8[131072]{0}', space=vmem, size = 0x20000, scoped, tag = 'output window, operand 0, single buffered']
    %15 = vsyncpa [#allocation3], 0
    %16 = vsyncpa [#allocation6], 0
    %17 = vsyncpa [#allocation4], 0
    // Predicated region
    $region2: #{tpu_custom_call.1} parent=1 // pred_check
      _
    $region3: #{tpu_custom_call.1} parent=1 // pred_check_branch
      %19 = sbr.rel (0) target = $region5
    $region4: #{tpu_custom_call.1} parent=1 // pred_region
      _
    $region5: #{tpu_custom_call.1} parent=1 // pred_fallthru
      _
    // Predicated region
    $region6: #{tpu_custom_call.1} parent=1 // pred_check
      _
    $region7: #{tpu_custom_call.1} parent=1 // pred_check_branch
      %21 = sbr.rel (0) target = $region9
    $region8: #{tpu_custom_call.1} parent=1 // pred_region
      _
    $region9: #{tpu_custom_call.1} parent=1 // pred_fallthru
      _
    // Predicated region
    $region10: #{tpu_custom_call.1} parent=1 // pred_check
      _
    $region11: #{tpu_custom_call.1} parent=1 // pred_check_branch
      %23 = sbr.rel (0) target = $region13
    $region12: #{tpu_custom_call.1} parent=1 // pred_region
      _
    $region13: #{tpu_custom_call.1} parent=1 // pred_fallthru
      _
    // Predicated region
    $region14: #{tpu_custom_call.1} parent=1 // pred_check
      _
    $region15: #{tpu_custom_call.1} parent=1 // pred_check_branch
      %25 = sbr.rel (0) target = $region17
    $region16: #{tpu_custom_call.1} parent=1 // pred_region
      _
    $region17: #{tpu_custom_call.1} parent=1 // pred_fallthru
      _
    // Predicated region
    $region18: #{tpu_custom_call.1} parent=1 // pred_check
      _
    $region19: #{tpu_custom_call.1} parent=1 // pred_check_branch
      %27 = sbr.rel (0) target = $region21
    $region20: #{tpu_custom_call.1} parent=1 // pred_region
      %s29 = ssub.s32 1024, 1024
      %30 = vsyncadd [#allocation3], %s29
      %s31 = sshll.u32 [#allocation2], 4
      %s32 = int_to_ptr.vmem [resolvable:$true] %s31
      %37 = dma.hbm_to_vmem [thread:$0]  %s4, 1024, %s32, [#allocation3], 64, 64, 4
    $region21: #{tpu_custom_call.1} parent=1 // pred_fallthru
      _
    // Predicated region
    $region22: #{tpu_custom_call.1} parent=1 // pred_check
      _
    $region23: #{tpu_custom_call.1} parent=1 // pred_check_branch
      %39 = sbr.rel (0) target = $region25
    $region24: #{tpu_custom_call.1} parent=1 // pred_region
      _
    $region25: #{tpu_custom_call.1} parent=1 // pred_fallthru
      _
    // Predicated region
    $region26: #{tpu_custom_call.1} parent=1 // pred_check
      _
    $region27: #{tpu_custom_call.1} parent=1 // pred_check_branch
      %41 = sbr.rel (0) target = $region29
    $region28: #{tpu_custom_call.1} parent=1 // pred_region
      %s43 = ssub.s32 2048, 2048
      %44 = vsyncadd [#allocation6], %s43
      %s45 = sshll.u32 [#allocation5], 4
      %s46 = int_to_ptr.vmem [resolvable:$true] %s45
      %51 = dma.hbm_to_vmem [thread:$0]  %s6, 2048, %s46, [#allocation6], 128, 128, 8
    $region29: #{tpu_custom_call.1} parent=1 // pred_fallthru
      _
    // Predicated region
    $region30: #{tpu_custom_call.1} parent=1 // pred_check
      _
    $region31: #{tpu_custom_call.1} parent=1 // pred_check_branch
      %53 = sbr.rel (0) target = $region33
    $region32: #{tpu_custom_call.1} parent=1 // pred_region
      _
    $region33: #{tpu_custom_call.1} parent=1 // pred_fallthru
      _
    // Predicated region
    $region34: #{tpu_custom_call.1} parent=1 // pred_check
      _
    $region35: #{tpu_custom_call.1} parent=1 // pred_check_branch
      %55 = sbr.rel (0) target = $region37
    $region36: #{tpu_custom_call.1} parent=1 // pred_region
      %s57 = ssub.s32 2048, 2048
      %58 = vsyncadd [#allocation6], %s57
      %s59 = sshll.u32 [#allocation7], 4
      %s60 = int_to_ptr.vmem [resolvable:$true] %s59
      %65 = dma.hbm_to_vmem [thread:$0]  %s8, 2048, %s60, [#allocation6], 64, 64, 4
    $region37: #{tpu_custom_call.1} parent=1 // pred_fallthru
      _
    // Predicated region
    $region38: #{tpu_custom_call.1} parent=1 // pred_check
      _
    $region39: #{tpu_custom_call.1} parent=1 // pred_check_branch
      %67 = sbr.rel (0) target = $region41
    $region40: #{tpu_custom_call.1} parent=1 // pred_region
      _
    $region41: #{tpu_custom_call.1} parent=1 // pred_fallthru
      _
    // Predicated region
    $region42: #{tpu_custom_call.1} parent=1 // pred_check
      _
    $region43: #{tpu_custom_call.1} parent=1 // pred_check_branch
      %69 = sbr.rel (0) target = $region45
    $region44: #{tpu_custom_call.1} parent=1 // pred_region
      %70 = dma.done [#allocation3], 1024
    $region45: #{tpu_custom_call.1} parent=1 // pred_fallthru
      _
    // Predicated region
    $region46: #{tpu_custom_call.1} parent=1 // pred_check
      _
    $region47: #{tpu_custom_call.1} parent=1 // pred_check_branch
      %72 = sbr.rel (0) target = $region49
    $region48: #{tpu_custom_call.1} parent=1 // pred_region
      %73 = dma.done [#allocation6], 2048
    $region49: #{tpu_custom_call.1} parent=1 // pred_fallthru
      _
    // Predicated region
    $region50: #{tpu_custom_call.1} parent=1 // pred_check
      _
    $region51: #{tpu_custom_call.1} parent=1 // pred_check_branch
      %75 = sbr.rel (0) target = $region53
    $region52: #{tpu_custom_call.1} parent=1 // pred_region
      %76 = dma.done [#allocation6], 2048
    $region53: #{tpu_custom_call.1} parent=1 // pred_fallthru
      _
    %v78 = vld [vmem:[%s0] sm:$0xf]
    %v79 = vld [vmem:[%s0 + $0x4] sm:$0xf]
    %v80 = vld [vmem:[%s0 + $0x8] sm:$0xf]
    %v81 = vld [vmem:[%s0 + $0xc] sm:$0xf]
    %v82 = vld [vmem:[%s0 + $0x10] sm:$0xf]
    %v83 = vld [vmem:[%s0 + $0x14] sm:$0xf]
    %v84 = vld [vmem:[%s0 + $0x18] sm:$0xf]
    %v85 = vld [vmem:[%s0 + $0x1c] sm:$0xf]
    %v86 = vld [vmem:[%s0 + $0x20] sm:$0xf]
    %v87 = vld [vmem:[%s0 + $0x24] sm:$0xf]
    %v88 = vld [vmem:[%s0 + $0x28] sm:$0xf]
    %v89 = vld [vmem:[%s0 + $0x2c] sm:$0xf]
    %v90 = vld [vmem:[%s0 + $0x30] sm:$0xf]
    %v91 = vld [vmem:[%s0 + $0x34] sm:$0xf]
    %v92 = vld [vmem:[%s0 + $0x38] sm:$0xf]
    %v93 = vld [vmem:[%s0 + $0x3c] sm:$0xf]
    %v94 = vld [vmem:[%s0 + $0x40] sm:$0xf]
    %v95 = vld [vmem:[%s0 + $0x44] sm:$0xf]
    %v96 = vld [vmem:[%s0 + $0x48] sm:$0xf]
    %v97 = vld [vmem:[%s0 + $0x4c] sm:$0xf]
    %v98 = vld [vmem:[%s0 + $0x50] sm:$0xf]
    %v99 = vld [vmem:[%s0 + $0x54] sm:$0xf]
    %v100 = vld [vmem:[%s0 + $0x58] sm:$0xf]
    %v101 = vld [vmem:[%s0 + $0x5c] sm:$0xf]
    %v102 = vld [vmem:[%s0 + $0x60] sm:$0xf]
    %v103 = vld [vmem:[%s0 + $0x64] sm:$0xf]
    %v104 = vld [vmem:[%s0 + $0x68] sm:$0xf]
    %v105 = vld [vmem:[%s0 + $0x6c] sm:$0xf]
    %v106 = vld [vmem:[%s0 + $0x70] sm:$0xf]
    %v107 = vld [vmem:[%s0 + $0x74] sm:$0xf]
    %v108 = vld [vmem:[%s0 + $0x78] sm:$0xf]
    %v109 = vld [vmem:[%s0 + $0x7c] sm:$0xf]
    %v110 = vunpack.c.l.bf16 %v78
    %v111 = vunpack.c.l.bf16 %v79
    %v112 = vunpack.c.l.bf16 %v80
    %v113 = vunpack.c.l.bf16 %v81
    %v114 = vunpack.c.l.bf16 %v82
    %v115 = vunpack.c.l.bf16 %v83
    %v116 = vunpack.c.l.bf16 %v84
    %v117 = vunpack.c.l.bf16 %v85
    %v118 = vunpack.c.l.bf16 %v86
    %v119 = vunpack.c.l.bf16 %v87
    %v120 = vunpack.c.l.bf16 %v88
    %v121 = vunpack.c.l.bf16 %v89
    %v122 = vunpack.c.l.bf16 %v90
    %v123 = vunpack.c.l.bf16 %v91
    %v124 = vunpack.c.l.bf16 %v92
    %v125 = vunpack.c.l.bf16 %v93
    %v126 = vunpack.c.l.bf16 %v94
    %v127 = vunpack.c.l.bf16 %v95
    %v128 = vunpack.c.l.bf16 %v96
    %v129 = vunpack.c.l.bf16 %v97
    %v130 = vunpack.c.l.bf16 %v98
    %v131 = vunpack.c.l.bf16 %v99
    %v132 = vunpack.c.l.bf16 %v100
    %v133 = vunpack.c.l.bf16 %v101
    %v134 = vunpack.c.l.bf16 %v102
    %v135 = vunpack.c.l.bf16 %v103
    %v136 = vunpack.c.l.bf16 %v104
    %v137 = vunpack.c.l.bf16 %v105
    %v138 = vunpack.c.l.bf16 %v106
    %v139 = vunpack.c.l.bf16 %v107
    %v140 = vunpack.c.l.bf16 %v108
    %v141 = vunpack.c.l.bf16 %v109
    %v142 = vld [vmem:[%s1] sm:$0xf]
    %v143 = vld [vmem:[%s1 + $0x4] sm:$0xf]
    %v144 = vld [vmem:[%s1 + $0x8] sm:$0xf]
    %v145 = vld [vmem:[%s1 + $0xc] sm:$0xf]
    %v146 = vld [vmem:[%s1 + $0x10] sm:$0xf]
    %v147 = vld [vmem:[%s1 + $0x14] sm:$0xf]
    %v148 = vld [vmem:[%s1 + $0x18] sm:$0xf]
    %v149 = vld [vmem:[%s1 + $0x1c] sm:$0xf]
    %v150 = vld [vmem:[%s1 + $0x20] sm:$0xf]
    %v151 = vld [vmem:[%s1 + $0x24] sm:$0xf]
    %v152 = vld [vmem:[%s1 + $0x28] sm:$0xf]
    %v153 = vld [vmem:[%s1 + $0x2c] sm:$0xf]
    %v154 = vld [vmem:[%s1 + $0x30] sm:$0xf]
    %v155 = vld [vmem:[%s1 + $0x34] sm:$0xf]
    %v156 = vld [vmem:[%s1 + $0x38] sm:$0xf]
    %v157 = vld [vmem:[%s1 + $0x3c] sm:$0xf]
    %v158 = vld [vmem:[%s1 + $0x40] sm:$0xf]
    %v159 = vld [vmem:[%s1 + $0x44] sm:$0xf]
    %v160 = vld [vmem:[%s1 + $0x48] sm:$0xf]
    %v161 = vld [vmem:[%s1 + $0x4c] sm:$0xf]
    %v162 = vld [vmem:[%s1 + $0x50] sm:$0xf]
    %v163 = vld [vmem:[%s1 + $0x54] sm:$0xf]
    %v164 = vld [vmem:[%s1 + $0x58] sm:$0xf]
    %v165 = vld [vmem:[%s1 + $0x5c] sm:$0xf]
    %v166 = vld [vmem:[%s1 + $0x60] sm:$0xf]
    %v167 = vld [vmem:[%s1 + $0x64] sm:$0xf]
    %v168 = vld [vmem:[%s1 + $0x68] sm:$0xf]
    %v169 = vld [vmem:[%s1 + $0x6c] sm:$0xf]
    %v170 = vld [vmem:[%s1 + $0x70] sm:$0xf]
    %v171 = vld [vmem:[%s1 + $0x74] sm:$0xf]
    %v172 = vld [vmem:[%s1 + $0x78] sm:$0xf]
    %v173 = vld [vmem:[%s1 + $0x7c] sm:$0xf]
    %v174 = vld [vmem:[%s2] sm:$0xf]
    %v175 = vld [vmem:[%s2 + $0x4] sm:$0xf]
    %v208 = vunpack.c.l.b16 %v142
    %v209 = vunpack.c.l.b16 %v143
    %v210 = vunpack.c.l.b16 %v144
    %v211 = vunpack.c.l.b16 %v145
    %v212 = vunpack.c.l.b16 %v146
    %v213 = vunpack.c.l.b16 %v147
    %v214 = vunpack.c.l.b16 %v148
    %v215 = vunpack.c.l.b16 %v149
    %v216 = vunpack.c.l.b16 %v150
    %v217 = vunpack.c.l.b16 %v151
    %v218 = vunpack.c.l.b16 %v152
    %v219 = vunpack.c.l.b16 %v153
    %v220 = vunpack.c.l.b16 %v154
    %v221 = vunpack.c.l.b16 %v155
    %v222 = vunpack.c.l.b16 %v156
    %v223 = vunpack.c.l.b16 %v157
    %v224 = vunpack.c.l.b16 %v158
    %v225 = vunpack.c.l.b16 %v159
    %v226 = vunpack.c.l.b16 %v160
    %v227 = vunpack.c.l.b16 %v161
    %v228 = vunpack.c.l.b16 %v162
    %v229 = vunpack.c.l.b16 %v163
    %v230 = vunpack.c.l.b16 %v164
    %v231 = vunpack.c.l.b16 %v165
    %v232 = vunpack.c.l.b16 %v166
    %v233 = vunpack.c.l.b16 %v167
    %v234 = vunpack.c.l.b16 %v168
    %v235 = vunpack.c.l.b16 %v169
    %v236 = vunpack.c.l.b16 %v170
    %v237 = vunpack.c.l.b16 %v171
    %v238 = vunpack.c.l.b16 %v172
    %v239 = vunpack.c.l.b16 %v173
    %v240 = vpack.c.b16 %v209, %v208
    %v241 = vpack.c.b16 %v211, %v210
    %v242 = vpack.c.b16 %v213, %v212
    %v243 = vpack.c.b16 %v215, %v214
    %v244 = vpack.c.b16 %v217, %v216
    %v245 = vpack.c.b16 %v219, %v218
    %v246 = vpack.c.b16 %v221, %v220
    %v247 = vpack.c.b16 %v223, %v222
    %v248 = vpack.c.b16 %v225, %v224
    %v249 = vpack.c.b16 %v227, %v226
    %v250 = vpack.c.b16 %v229, %v228
    %v251 = vpack.c.b16 %v231, %v230
    %v252 = vpack.c.b16 %v233, %v232
    %v253 = vpack.c.b16 %v235, %v234
    %v254 = vpack.c.b16 %v237, %v236
    %v255 = vpack.c.b16 %v239, %v238
    %v258 = vunpack.c.l.b16 %v174
    %v259 = vunpack.c.l.b16 %v175
    %v260 = vpack.c.b16 %v259, %v258
    %vm262 = vcmask 130048
    %v264 = vsel %vm262, %v240, 0
    %v267 = vsel %vm262, %v241, 0
    %v270 = vsel %vm262, %v242, 0
    %v273 = vsel %vm262, %v243, 0
    %v276 = vsel %vm262, %v244, 0
    %v279 = vsel %vm262, %v245, 0
    %v282 = vsel %vm262, %v246, 0
    %v285 = vsel %vm262, %v247, 0
    %v288 = vsel %vm262, %v248, 0
    %v291 = vsel %vm262, %v249, 0
    %v294 = vsel %vm262, %v250, 0
    %v297 = vsel %vm262, %v251, 0
    %v300 = vsel %vm262, %v252, 0
    %v303 = vsel %vm262, %v253, 0
    %v306 = vsel %vm262, %v254, 0
    %v309 = vsel %vm262, %v255, 0
    %311 = vmatprep.subr.bf16.mxu0 0
    %312 = vmatpush1.bf16.msra.mxu0 %v260
    %313 = vmatprep.subr.bf16.mxu0 0
    %314 = vmatpush1.bf16.msra.mxu0 0
    %315 = vmatprep.subr.bf16.mxu0 0
    %316 = vmatpush1.bf16.msra.mxu0 0
    %317 = vmatprep.subr.bf16.mxu0 0
    %318 = vmatpush1.bf16.msra.mxu0 0
    %319 = vmatprep.subr.bf16.mxu0 0
    %320 = vmatpush1.bf16.msra.mxu0 0
    %321 = vmatprep.subr.bf16.mxu0 0
    %322 = vmatpush1.bf16.msra.mxu0 0
    %323 = vmatprep.subr.bf16.mxu0 0
    %324 = vmatpush1.bf16.msra.mxu0 0
    %325 = vmatprep.subr.bf16.mxu0 0
    %326 = vmatpush1.bf16.msra.mxu0 0
    %327 = vmatprep.subr.bf16.mxu0 0
    %328 = vmatpush1.bf16.msra.mxu0 0
    %329 = vmatprep.subr.bf16.mxu0 0
    %330 = vmatpush1.bf16.msra.mxu0 0
    %331 = vmatprep.subr.bf16.mxu0 0
    %332 = vmatpush1.bf16.msra.mxu0 0
    %333 = vmatprep.subr.bf16.mxu0 0
    %334 = vmatpush1.bf16.msra.mxu0 0
    %335 = vmatprep.subr.bf16.mxu0 0
    %336 = vmatpush1.bf16.msra.mxu0 0
    %337 = vmatprep.subr.bf16.mxu0 0
    %338 = vmatpush1.bf16.msra.mxu0 0
    %339 = vmatprep.subr.bf16.mxu0 0
    %340 = vmatpush1.bf16.msra.mxu0 0
    %341 = vmatprep.subr.bf16.mxu0 0
    %342 = vmatpush1.bf16.msra.mxu0 0
    %343 = vmatprep.mubr.bf16.mxu0 0
    %344 = vmatmul.mubr.bf16.gmra.mrb[0].mxu0 %v264
    %v345 = vpop.f32.mrb[0].mxu0
    %v346 = vadd.f32 0.0, %v345
    %v347 = vpop.f32.mrb[0].mxu0
    %v348 = vpop.f32.mrb[0].mxu0
    %v349 = vadd.f32 0.0, %v348
    %v350 = vpop.f32.mrb[0].mxu0
    %351 = vmatprep.mubr.bf16.mxu0 0
    %352 = vmatmul.mubr.bf16.gmra.mrb[0].mxu0 %v267
    %v353 = vpop.f32.mrb[0].mxu0
    %v354 = vadd.f32 0.0, %v353
    %v355 = vpop.f32.mrb[0].mxu0
    %v356 = vpop.f32.mrb[0].mxu0
    %v357 = vadd.f32 0.0, %v356
    %v358 = vpop.f32.mrb[0].mxu0
    %359 = vmatprep.mubr.bf16.mxu0 0
    %360 = vmatmul.mubr.bf16.gmra.mrb[0].mxu0 %v270
    %v361 = vpop.f32.mrb[0].mxu0
    %v362 = vadd.f32 0.0, %v361
    %v363 = vpop.f32.mrb[0].mxu0
    %v364 = vpop.f32.mrb[0].mxu0
    %v365 = vadd.f32 0.0, %v364
    %v366 = vpop.f32.mrb[0].mxu0
    %367 = vmatprep.mubr.bf16.mxu0 0
    %368 = vmatmul.mubr.bf16.gmra.mrb[0].mxu0 %v273
    %v369 = vpop.f32.mrb[0].mxu0
    %v370 = vadd.f32 0.0, %v369
    %v371 = vpop.f32.mrb[0].mxu0
    %v372 = vpop.f32.mrb[0].mxu0
    %v373 = vadd.f32 0.0, %v372
    %v374 = vpop.f32.mrb[0].mxu0
    %375 = vmatprep.mubr.bf16.mxu0 0
    %376 = vmatmul.mubr.bf16.gmra.mrb[0].mxu0 %v276
    %v377 = vpop.f32.mrb[0].mxu0
    %v378 = vadd.f32 0.0, %v377
    %v379 = vpop.f32.mrb[0].mxu0
    %v380 = vpop.f32.mrb[0].mxu0
    %v381 = vadd.f32 0.0, %v380
    %v382 = vpop.f32.mrb[0].mxu0
    %383 = vmatprep.mubr.bf16.mxu0 0
    %384 = vmatmul.mubr.bf16.gmra.mrb[0].mxu0 %v279
    %v385 = vpop.f32.mrb[0].mxu0
    %v386 = vadd.f32 0.0, %v385
    %v387 = vpop.f32.mrb[0].mxu0
    %v388 = vpop.f32.mrb[0].mxu0
    %v389 = vadd.f32 0.0, %v388
    %v390 = vpop.f32.mrb[0].mxu0
    %391 = vmatprep.mubr.bf16.mxu0 0
    %392 = vmatmul.mubr.bf16.gmra.mrb[0].mxu0 %v282
    %v393 = vpop.f32.mrb[0].mxu0
    %v394 = vadd.f32 0.0, %v393
    %v395 = vpop.f32.mrb[0].mxu0
    %v396 = vpop.f32.mrb[0].mxu0
    %v397 = vadd.f32 0.0, %v396
    %v398 = vpop.f32.mrb[0].mxu0
    %399 = vmatprep.mubr.bf16.mxu0 0
    %400 = vmatmul.mubr.bf16.gmra.mrb[0].mxu0 %v285
    %v401 = vpop.f32.mrb[0].mxu0
    %v402 = vadd.f32 0.0, %v401
    %v403 = vpop.f32.mrb[0].mxu0
    %v404 = vpop.f32.mrb[0].mxu0
    %v405 = vadd.f32 0.0, %v404
    %v406 = vpop.f32.mrb[0].mxu0
    %407 = vmatprep.mubr.bf16.mxu0 0
    %408 = vmatmul.mubr.bf16.gmra.mrb[0].mxu0 %v288
    %v409 = vpop.f32.mrb[0].mxu0
    %v410 = vadd.f32 0.0, %v409
    %v411 = vpop.f32.mrb[0].mxu0
    %v412 = vpop.f32.mrb[0].mxu0
    %v413 = vadd.f32 0.0, %v412
    %v414 = vpop.f32.mrb[0].mxu0
    %415 = vmatprep.mubr.bf16.mxu0 0
    %416 = vmatmul.mubr.bf16.gmra.mrb[0].mxu0 %v291
    %v417 = vpop.f32.mrb[0].mxu0
    %v418 = vadd.f32 0.0, %v417
    %v419 = vpop.f32.mrb[0].mxu0
    %v420 = vpop.f32.mrb[0].mxu0
    %v421 = vadd.f32 0.0, %v420
    %v422 = vpop.f32.mrb[0].mxu0
    %423 = vmatprep.mubr.bf16.mxu0 0
    %424 = vmatmul.mubr.bf16.gmra.mrb[0].mxu0 %v294
    %v425 = vpop.f32.mrb[0].mxu0
    %v426 = vadd.f32 0.0, %v425
    %v427 = vpop.f32.mrb[0].mxu0
    %v428 = vpop.f32.mrb[0].mxu0
    %v429 = vadd.f32 0.0, %v428
    %v430 = vpop.f32.mrb[0].mxu0
    %431 = vmatprep.mubr.bf16.mxu0 0
    %432 = vmatmul.mubr.bf16.gmra.mrb[0].mxu0 %v297
    %v433 = vpop.f32.mrb[0].mxu0
    %v434 = vadd.f32 0.0, %v433
    %v435 = vpop.f32.mrb[0].mxu0
    %v436 = vpop.f32.mrb[0].mxu0
    %v437 = vadd.f32 0.0, %v436
    %v438 = vpop.f32.mrb[0].mxu0
    %439 = vmatprep.mubr.bf16.mxu0 0
    %440 = vmatmul.mubr.bf16.gmra.mrb[0].mxu0 %v300
    %v441 = vpop.f32.mrb[0].mxu0
    %v442 = vadd.f32 0.0, %v441
    %v443 = vpop.f32.mrb[0].mxu0
    %v444 = vpop.f32.mrb[0].mxu0
    %v445 = vadd.f32 0.0, %v444
    %v446 = vpop.f32.mrb[0].mxu0
    %447 = vmatprep.mubr.bf16.mxu0 0
    %448 = vmatmul.mubr.bf16.gmra.mrb[0].mxu0 %v303
    %v449 = vpop.f32.mrb[0].mxu0
    %v450 = vadd.f32 0.0, %v449
    %v451 = vpop.f32.mrb[0].mxu0
    %v452 = vpop.f32.mrb[0].mxu0
    %v453 = vadd.f32 0.0, %v452
    %v454 = vpop.f32.mrb[0].mxu0
    %455 = vmatprep.mubr.bf16.mxu0 0
    %456 = vmatmul.mubr.bf16.gmra.mrb[0].mxu0 %v306
    %v457 = vpop.f32.mrb[0].mxu0
    %v458 = vadd.f32 0.0, %v457
    %v459 = vpop.f32.mrb[0].mxu0
    %v460 = vpop.f32.mrb[0].mxu0
    %v461 = vadd.f32 0.0, %v460
    %v462 = vpop.f32.mrb[0].mxu0
    %463 = vmatprep.mubr.bf16.mxu0 0
    %464 = vmatmul.mubr.bf16.gmra.mrb[0].mxu0 %v309
    %v465 = vpop.f32.mrb[0].mxu0
    %v466 = vadd.f32 0.0, %v465
    %v467 = vpop.f32.mrb[0].mxu0
    %v468 = vpop.f32.mrb[0].mxu0
    %v469 = vadd.f32 0.0, %v468
    %v470 = vpop.f32.mrb[0].mxu0
    %471 = vdwg.mxu0
    %v472 = vadd.f32 %v110, %v346
    %v473 = vadd.f32 %v111, %v349
    %v474 = vadd.f32 %v112, %v354
    %v475 = vadd.f32 %v113, %v357
    %v476 = vadd.f32 %v114, %v362
    %v477 = vadd.f32 %v115, %v365
    %v478 = vadd.f32 %v116, %v370
    %v479 = vadd.f32 %v117, %v373
    %v480 = vadd.f32 %v118, %v378
    %v481 = vadd.f32 %v119, %v381
    %v482 = vadd.f32 %v120, %v386
    %v483 = vadd.f32 %v121, %v389
    %v484 = vadd.f32 %v122, %v394
    %v485 = vadd.f32 %v123, %v397
    %v486 = vadd.f32 %v124, %v402
    %v487 = vadd.f32 %v125, %v405
    %v488 = vadd.f32 %v126, %v410
    %v489 = vadd.f32 %v127, %v413
    %v490 = vadd.f32 %v128, %v418
    %v491 = vadd.f32 %v129, %v421
    %v492 = vadd.f32 %v130, %v426
    %v493 = vadd.f32 %v131, %v429
    %v494 = vadd.f32 %v132, %v434
    %v495 = vadd.f32 %v133, %v437
    %v496 = vadd.f32 %v134, %v442
    %v497 = vadd.f32 %v135, %v445
    %v498 = vadd.f32 %v136, %v450
    %v499 = vadd.f32 %v137, %v453
    %v500 = vadd.f32 %v138, %v458
    %v501 = vadd.f32 %v139, %v461
    %v502 = vadd.f32 %v140, %v466
    %v503 = vadd.f32 %v141, %v469
    %v504 = vld [vmem:[%s3] sm:$0x1]
    %v506 = vlaneseq
    %v507 = vshrl.u32 %v506, 7
    %v508 = vsub.s32 0, %v507
    %v509 = vrot.slane %v504, %v508
    %v511 = vadd.f32 %v472, %v509
    %v512 = vadd.f32 %v473, %v509
    %v513 = vadd.f32 %v474, %v509
    %v514 = vadd.f32 %v475, %v509
    %v515 = vadd.f32 %v476, %v509
    %v516 = vadd.f32 %v477, %v509
    %v517 = vadd.f32 %v478, %v509
    %v518 = vadd.f32 %v479, %v509
    %v519 = vadd.f32 %v480, %v509
    %v520 = vadd.f32 %v481, %v509
    %v521 = vadd.f32 %v482, %v509
    %v522 = vadd.f32 %v483, %v509
    %v523 = vadd.f32 %v484, %v509
    %v524 = vadd.f32 %v485, %v509
    %v525 = vadd.f32 %v486, %v509
    %v526 = vadd.f32 %v487, %v509
    %v527 = vadd.f32 %v488, %v509
    %v528 = vadd.f32 %v489, %v509
    %v529 = vadd.f32 %v490, %v509
    %v530 = vadd.f32 %v491, %v509
    %v531 = vadd.f32 %v492, %v509
    %v532 = vadd.f32 %v493, %v509
    %v533 = vadd.f32 %v494, %v509
    %v534 = vadd.f32 %v495, %v509
    %v535 = vadd.f32 %v496, %v509
    %v536 = vadd.f32 %v497, %v509
    %v537 = vadd.f32 %v498, %v509
    %v538 = vadd.f32 %v499, %v509
    %v539 = vadd.f32 %v500, %v509
    %v540 = vadd.f32 %v501, %v509
    %v541 = vadd.f32 %v502, %v509
    %v542 = vadd.f32 %v503, %v509
    %v543 = vtanh.pop %v511
    %v544 = vtanh.pop %v512
    %v545 = vtanh.pop %v513
    %v546 = vtanh.pop %v514
    %v547 = vtanh.pop %v515
    %v548 = vtanh.pop %v516
    %v549 = vtanh.pop %v517
    %v550 = vtanh.pop %v518
    %v551 = vtanh.pop %v519
    %v552 = vtanh.pop %v520
    %v553 = vtanh.pop %v521
    %v554 = vtanh.pop %v522
    %v555 = vtanh.pop %v523
    %v556 = vtanh.pop %v524
    %v557 = vtanh.pop %v525
    %v558 = vtanh.pop %v526
    %v559 = vtanh.pop %v527
    %v560 = vtanh.pop %v528
    %v561 = vtanh.pop %v529
    %v562 = vtanh.pop %v530
    %v563 = vtanh.pop %v531
    %v564 = vtanh.pop %v532
    %v565 = vtanh.pop %v533
    %v566 = vtanh.pop %v534
    %v567 = vtanh.pop %v535
    %v568 = vtanh.pop %v536
    %v569 = vtanh.pop %v537
    %v570 = vtanh.pop %v538
    %v571 = vtanh.pop %v539
    %v572 = vtanh.pop %v540
    %v573 = vtanh.pop %v541
    %v574 = vtanh.pop %v542
    %v575 = vpack.c.bf16 %v544, %v543
    %v576 = vpack.c.bf16 %v546, %v545
    %v577 = vpack.c.bf16 %v548, %v547
    %v578 = vpack.c.bf16 %v550, %v549
    %v579 = vpack.c.bf16 %v552, %v551
    %v580 = vpack.c.bf16 %v554, %v553
    %v581 = vpack.c.bf16 %v556, %v555
    %v582 = vpack.c.bf16 %v558, %v557
    %v583 = vpack.c.bf16 %v560, %v559
    %v584 = vpack.c.bf16 %v562, %v561
    %v585 = vpack.c.bf16 %v564, %v563
    %v586 = vpack.c.bf16 %v566, %v565
    %v587 = vpack.c.bf16 %v568, %v567
    %v588 = vpack.c.bf16 %v570, %v569
    %v589 = vpack.c.bf16 %v572, %v571
    %v590 = vpack.c.bf16 %v574, %v573
    %v591 = vld [vmem:[#allocation2] sm:$0xf]
    %v592 = vld [vmem:[#allocation2 + $0x4] sm:$0xf]
    %v593 = vld [vmem:[#allocation2 + $0x8] sm:$0xf]
    %v594 = vld [vmem:[#allocation2 + $0xc] sm:$0xf]
    %v595 = vld [vmem:[#allocation2 + $0x10] sm:$0xf]
    %v596 = vld [vmem:[#allocation2 + $0x14] sm:$0xf]
    %v597 = vld [vmem:[#allocation2 + $0x18] sm:$0xf]
    %v598 = vld [vmem:[#allocation2 + $0x1c] sm:$0xf]
    %v599 = vld [vmem:[#allocation2 + $0x20] sm:$0xf]
    %v600 = vld [vmem:[#allocation2 + $0x24] sm:$0xf]
    %v601 = vld [vmem:[#allocation2 + $0x28] sm:$0xf]
    %v602 = vld [vmem:[#allocation2 + $0x2c] sm:$0xf]
    %v603 = vld [vmem:[#allocation2 + $0x30] sm:$0xf]
    %v604 = vld [vmem:[#allocation2 + $0x34] sm:$0xf]
    %v605 = vld [vmem:[#allocation2 + $0x38] sm:$0xf]
    %v606 = vld [vmem:[#allocation2 + $0x3c] sm:$0xf]
    %v607 = vld [vmem:[%s5] sm:$0x1]
    %v609 = vlaneseq
    %v610 = vshrl.u32 %v609, 7
    %v611 = vsub.s32 0, %v610
    %v612 = vrot.slane %v607, %v611
    %v630 = vunpack.c.l.b16 %v591
    %v631 = vunpack.c.l.b16 %v592
    %v632 = vunpack.c.l.b16 %v593
    %v633 = vunpack.c.l.b16 %v594
    %v634 = vunpack.c.l.b16 %v595
    %v635 = vunpack.c.l.b16 %v596
    %v636 = vunpack.c.l.b16 %v597
    %v637 = vunpack.c.l.b16 %v598
    %v638 = vunpack.c.l.b16 %v599
    %v639 = vunpack.c.l.b16 %v600
    %v640 = vunpack.c.l.b16 %v601
    %v641 = vunpack.c.l.b16 %v602
    %v642 = vunpack.c.l.b16 %v603
    %v643 = vunpack.c.l.b16 %v604
    %v644 = vunpack.c.l.b16 %v605
    %v645 = vunpack.c.l.b16 %v606
    %v646 = vpack.c.b16 %v631, %v630
    %v647 = vpack.c.b16 %v633, %v632
    %v648 = vpack.c.b16 %v635, %v634
    %v649 = vpack.c.b16 %v637, %v636
    %v650 = vpack.c.b16 %v639, %v638
    %v651 = vpack.c.b16 %v641, %v640
    %v652 = vpack.c.b16 %v643, %v642
    %v653 = vpack.c.b16 %v645, %v644
    %662 = vmatprep.subr.bf16.mxu0 0
    %663 = vmatpush1.bf16.msra.mxu0 %v646
    %664 = vmatprep.subr.bf16.mxu0 0
    %665 = vmatpush1.bf16.msra.mxu0 %v647
    %666 = vmatprep.subr.bf16.mxu0 0
    %667 = vmatpush1.bf16.msra.mxu0 %v648
    %668 = vmatprep.subr.bf16.mxu0 0
    %669 = vmatpush1.bf16.msra.mxu0 %v649
    %670 = vmatprep.subr.bf16.mxu0 0
    %671 = vmatpush1.bf16.msra.mxu0 %v650
    %672 = vmatprep.subr.bf16.mxu0 0
    %673 = vmatpush1.bf16.msra.mxu0 %v651
    %674 = vmatprep.subr.bf16.mxu0 0
    %675 = vmatpush1.bf16.msra.mxu0 %v652
    %676 = vmatprep.subr.bf16.mxu0 0
    %677 = vmatpush1.bf16.msra.mxu0 %v653
    %678 = vmatprep.subr.bf16.mxu0 0
    %679 = vmatpush1.bf16.msra.mxu0 0
    %680 = vmatprep.subr.bf16.mxu0 0
    %681 = vmatpush1.bf16.msra.mxu0 0
    %682 = vmatprep.subr.bf16.mxu0 0
    %683 = vmatpush1.bf16.msra.mxu0 0
    %684 = vmatprep.subr.bf16.mxu0 0
    %685 = vmatpush1.bf16.msra.mxu0 0
    %686 = vmatprep.subr.bf16.mxu0 0
    %687 = vmatpush1.bf16.msra.mxu0 0
    %688 = vmatprep.subr.bf16.mxu0 0
    %689 = vmatpush1.bf16.msra.mxu0 0
    %690 = vmatprep.subr.bf16.mxu0 0
    %691 = vmatpush1.bf16.msra.mxu0 0
    %692 = vmatprep.subr.bf16.mxu0 0
    %693 = vmatpush1.bf16.msra.mxu0 0
    %694 = vmatprep.mubr.bf16.mxu0 0
    %695 = vmatmul.mubr.bf16.gmra.mrb[0].mxu0 %v575
    %v696 = vpop.f32.mrb[0].mxu0
    %v697 = vadd.f32 %v612, %v696
    %v698 = vpop.f32.mrb[0].mxu0
    %v699 = vpop.f32.mrb[0].mxu0
    %v700 = vadd.f32 %v612, %v699
    %v701 = vpop.f32.mrb[0].mxu0
    %702 = vmatprep.mubr.bf16.mxu0 0
    %703 = vmatmul.mubr.bf16.gmra.mrb[0].mxu0 %v576
    %v704 = vpop.f32.mrb[0].mxu0
    %v705 = vadd.f32 %v612, %v704
    %v706 = vpop.f32.mrb[0].mxu0
    %v707 = vpop.f32.mrb[0].mxu0
    %v708 = vadd.f32 %v612, %v707
    %v709 = vpop.f32.mrb[0].mxu0
    %710 = vmatprep.mubr.bf16.mxu0 0
    %711 = vmatmul.mubr.bf16.gmra.mrb[0].mxu0 %v577
    %v712 = vpop.f32.mrb[0].mxu0
    %v713 = vadd.f32 %v612, %v712
    %v714 = vpop.f32.mrb[0].mxu0
    %v715 = vpop.f32.mrb[0].mxu0
    %v716 = vadd.f32 %v612, %v715
    %v717 = vpop.f32.mrb[0].mxu0
    %718 = vmatprep.mubr.bf16.mxu0 0
    %719 = vmatmul.mubr.bf16.gmra.mrb[0].mxu0 %v578
    %v720 = vpop.f32.mrb[0].mxu0
    %v721 = vadd.f32 %v612, %v720
    %v722 = vpop.f32.mrb[0].mxu0
    %v723 = vpop.f32.mrb[0].mxu0
    %v724 = vadd.f32 %v612, %v723
    %v725 = vpop.f32.mrb[0].mxu0
    %726 = vmatprep.mubr.bf16.mxu0 0
    %727 = vmatmul.mubr.bf16.gmra.mrb[0].mxu0 %v579
    %v728 = vpop.f32.mrb[0].mxu0
    %v729 = vadd.f32 %v612, %v728
    %v730 = vpop.f32.mrb[0].mxu0
    %v731 = vpop.f32.mrb[0].mxu0
    %v732 = vadd.f32 %v612, %v731
    %v733 = vpop.f32.mrb[0].mxu0
    %734 = vmatprep.mubr.bf16.mxu0 0
    %735 = vmatmul.mubr.bf16.gmra.mrb[0].mxu0 %v580
    %v736 = vpop.f32.mrb[0].mxu0
    %v737 = vadd.f32 %v612, %v736
    %v738 = vpop.f32.mrb[0].mxu0
    %v739 = vpop.f32.mrb[0].mxu0
    %v740 = vadd.f32 %v612, %v739
    %v741 = vpop.f32.mrb[0].mxu0
    %742 = vmatprep.mubr.bf16.mxu0 0
    %743 = vmatmul.mubr.bf16.gmra.mrb[0].mxu0 %v581
    %v744 = vpop.f32.mrb[0].mxu0
    %v745 = vadd.f32 %v612, %v744
    %v746 = vpop.f32.mrb[0].mxu0
    %v747 = vpop.f32.mrb[0].mxu0
    %v748 = vadd.f32 %v612, %v747
    %v749 = vpop.f32.mrb[0].mxu0
    %750 = vmatprep.mubr.bf16.mxu0 0
    %751 = vmatmul.mubr.bf16.gmra.mrb[0].mxu0 %v582
    %v752 = vpop.f32.mrb[0].mxu0
    %v753 = vadd.f32 %v612, %v752
    %v754 = vpop.f32.mrb[0].mxu0
    %v755 = vpop.f32.mrb[0].mxu0
    %v756 = vadd.f32 %v612, %v755
    %v757 = vpop.f32.mrb[0].mxu0
    %758 = vmatprep.mubr.bf16.mxu0 0
    %759 = vmatmul.mubr.bf16.gmra.mrb[0].mxu0 %v583
    %v760 = vpop.f32.mrb[0].mxu0
    %v761 = vadd.f32 %v612, %v760
    %v762 = vpop.f32.mrb[0].mxu0
    %v763 = vpop.f32.mrb[0].mxu0
    %v764 = vadd.f32 %v612, %v763
    %v765 = vpop.f32.mrb[0].mxu0
    %766 = vmatprep.mubr.bf16.mxu0 0
    %767 = vmatmul.mubr.bf16.gmra.mrb[0].mxu0 %v584
    %v768 = vpop.f32.mrb[0].mxu0
    %v769 = vadd.f32 %v612, %v768
    %v770 = vpop.f32.mrb[0].mxu0
    %v771 = vpop.f32.mrb[0].mxu0
    %v772 = vadd.f32 %v612, %v771
    %v773 = vpop.f32.mrb[0].mxu0
    %774 = vmatprep.mubr.bf16.mxu0 0
    %775 = vmatmul.mubr.bf16.gmra.mrb[0].mxu0 %v585
    %v776 = vpop.f32.mrb[0].mxu0
    %v777 = vadd.f32 %v612, %v776
    %v778 = vpop.f32.mrb[0].mxu0
    %v779 = vpop.f32.mrb[0].mxu0
    %v780 = vadd.f32 %v612, %v779
    %v781 = vpop.f32.mrb[0].mxu0
    %782 = vmatprep.mubr.bf16.mxu0 0
    %783 = vmatmul.mubr.bf16.gmra.mrb[0].mxu0 %v586
    %v784 = vpop.f32.mrb[0].mxu0
    %v785 = vadd.f32 %v612, %v784
    %v786 = vpop.f32.mrb[0].mxu0
    %v787 = vpop.f32.mrb[0].mxu0
    %v788 = vadd.f32 %v612, %v787
    %v789 = vpop.f32.mrb[0].mxu0
    %790 = vmatprep.mubr.bf16.mxu0 0
    %791 = vmatmul.mubr.bf16.gmra.mrb[0].mxu0 %v587
    %v792 = vpop.f32.mrb[0].mxu0
    %v793 = vadd.f32 %v612, %v792
    %v794 = vpop.f32.mrb[0].mxu0
    %v795 = vpop.f32.mrb[0].mxu0
    %v796 = vadd.f32 %v612, %v795
    %v797 = vpop.f32.mrb[0].mxu0
    %798 = vmatprep.mubr.bf16.mxu0 0
    %799 = vmatmul.mubr.bf16.gmra.mrb[0].mxu0 %v588
    %v800 = vpop.f32.mrb[0].mxu0
    %v801 = vadd.f32 %v612, %v800
    %v802 = vpop.f32.mrb[0].mxu0
    %v803 = vpop.f32.mrb[0].mxu0
    %v804 = vadd.f32 %v612, %v803
    %v805 = vpop.f32.mrb[0].mxu0
    %806 = vmatprep.mubr.bf16.mxu0 0
    %807 = vmatmul.mubr.bf16.gmra.mrb[0].mxu0 %v589
    %v808 = vpop.f32.mrb[0].mxu0
    %v809 = vadd.f32 %v612, %v808
    %v810 = vpop.f32.mrb[0].mxu0
    %v811 = vpop.f32.mrb[0].mxu0
    %v812 = vadd.f32 %v612, %v811
    %v813 = vpop.f32.mrb[0].mxu0
    %814 = vmatprep.mubr.bf16.mxu0 0
    %815 = vmatmul.mubr.bf16.gmra.mrb[0].mxu0 %v590
    %v816 = vpop.f32.mrb[0].mxu0
    %v817 = vadd.f32 %v612, %v816
    %v818 = vpop.f32.mrb[0].mxu0
    %v819 = vpop.f32.mrb[0].mxu0
    %v820 = vadd.f32 %v612, %v819
    %v821 = vpop.f32.mrb[0].mxu0
    %822 = vdwg.mxu0
    %v823 = vtanh.pop %v697
    %v824 = vtanh.pop %v700
    %v825 = vtanh.pop %v705
    %v826 = vtanh.pop %v708
    %v827 = vtanh.pop %v713
    %v828 = vtanh.pop %v716
    %v829 = vtanh.pop %v721
    %v830 = vtanh.pop %v724
    %v831 = vtanh.pop %v729
    %v832 = vtanh.pop %v732
    %v833 = vtanh.pop %v737
    %v834 = vtanh.pop %v740
    %v835 = vtanh.pop %v745
    %v836 = vtanh.pop %v748
    %v837 = vtanh.pop %v753
    %v838 = vtanh.pop %v756
    %v839 = vtanh.pop %v761
    %v840 = vtanh.pop %v764
    %v841 = vtanh.pop %v769
    %v842 = vtanh.pop %v772
    %v843 = vtanh.pop %v777
    %v844 = vtanh.pop %v780
    %v845 = vtanh.pop %v785
    %v846 = vtanh.pop %v788
    %v847 = vtanh.pop %v793
    %v848 = vtanh.pop %v796
    %v849 = vtanh.pop %v801
    %v850 = vtanh.pop %v804
    %v851 = vtanh.pop %v809
    %v852 = vtanh.pop %v812
    %v853 = vtanh.pop %v817
    %v854 = vtanh.pop %v820
    %v855 = vpack.c.bf16 %v824, %v823
    %v856 = vpack.c.bf16 %v826, %v825
    %v857 = vpack.c.bf16 %v828, %v827
    %v858 = vpack.c.bf16 %v830, %v829
    %v859 = vpack.c.bf16 %v832, %v831
    %v860 = vpack.c.bf16 %v834, %v833
    %v861 = vpack.c.bf16 %v836, %v835
    %v862 = vpack.c.bf16 %v838, %v837
    %v863 = vpack.c.bf16 %v840, %v839
    %v864 = vpack.c.bf16 %v842, %v841
    %v865 = vpack.c.bf16 %v844, %v843
    %v866 = vpack.c.bf16 %v846, %v845
    %v867 = vpack.c.bf16 %v848, %v847
    %v868 = vpack.c.bf16 %v850, %v849
    %v869 = vpack.c.bf16 %v852, %v851
    %v870 = vpack.c.bf16 %v854, %v853
    %v871 = vld [vmem:[#allocation5] sm:$0xff]
    %v872 = vld [vmem:[#allocation5 + $0x8] sm:$0xff]
    %v873 = vld [vmem:[#allocation5 + $0x10] sm:$0xff]
    %v874 = vld [vmem:[#allocation5 + $0x18] sm:$0xff]
    %v875 = vld [vmem:[#allocation5 + $0x20] sm:$0xff]
    %v876 = vld [vmem:[#allocation5 + $0x28] sm:$0xff]
    %v877 = vld [vmem:[#allocation5 + $0x30] sm:$0xff]
    %v878 = vld [vmem:[#allocation5 + $0x38] sm:$0xff]
    %v879 = vld [vmem:[#allocation5 + $0x40] sm:$0xff]
    %v880 = vld [vmem:[#allocation5 + $0x48] sm:$0xff]
    %v881 = vld [vmem:[#allocation5 + $0x50] sm:$0xff]
    %v882 = vld [vmem:[#allocation5 + $0x58] sm:$0xff]
    %v883 = vld [vmem:[#allocation5 + $0x60] sm:$0xff]
    %v884 = vld [vmem:[#allocation5 + $0x68] sm:$0xff]
    %v885 = vld [vmem:[#allocation5 + $0x70] sm:$0xff]
    %v886 = vld [vmem:[#allocation5 + $0x78] sm:$0xff]
    %v887 = vld [vmem:[%s7] sm:$0x3]
    %v889 = vlaneseq
    %v890 = vshrl.u32 %v889, 7
    %v891 = vsub.s32 0, %v890
    %v892 = vrot.slane %v887, %v891
    %v893 = vlaneseq
    %v894 = vshrl.u32 %v893, 7
    %v895 = vsub.s32 1, %v894
    %v896 = vrot.slane %v887, %v895
    %v915 = vunpack.c.l.b16 %v871
    %v916 = vunpack.c.h.b16 %v871
    %v917 = vunpack.c.l.b16 %v872
    %v918 = vunpack.c.h.b16 %v872
    %v919 = vunpack.c.l.b16 %v873
    %v920 = vunpack.c.h.b16 %v873
    %v921 = vunpack.c.l.b16 %v874
    %v922 = vunpack.c.h.b16 %v874
    %v923 = vunpack.c.l.b16 %v875
    %v924 = vunpack.c.h.b16 %v875
    %v925 = vunpack.c.l.b16 %v876
    %v926 = vunpack.c.h.b16 %v876
    %v927 = vunpack.c.l.b16 %v877
    %v928 = vunpack.c.h.b16 %v877
    %v929 = vunpack.c.l.b16 %v878
    %v930 = vunpack.c.h.b16 %v878
    %v931 = vunpack.c.l.b16 %v879
    %v932 = vunpack.c.h.b16 %v879
    %v933 = vunpack.c.l.b16 %v880
    %v934 = vunpack.c.h.b16 %v880
    %v935 = vunpack.c.l.b16 %v881
    %v936 = vunpack.c.h.b16 %v881
    %v937 = vunpack.c.l.b16 %v882
    %v938 = vunpack.c.h.b16 %v882
    %v939 = vunpack.c.l.b16 %v883
    %v940 = vunpack.c.h.b16 %v883
    %v941 = vunpack.c.l.b16 %v884
    %v942 = vunpack.c.h.b16 %v884
    %v943 = vunpack.c.l.b16 %v885
    %v944 = vunpack.c.h.b16 %v885
    %v945 = vunpack.c.l.b16 %v886
    %v946 = vunpack.c.h.b16 %v886
    %v947 = vpack.c.b16 %v917, %v915
    %v948 = vpack.c.b16 %v918, %v916
    %v949 = vpack.c.b16 %v921, %v919
    %v950 = vpack.c.b16 %v922, %v920
    %v951 = vpack.c.b16 %v925, %v923
    %v952 = vpack.c.b16 %v926, %v924
    %v953 = vpack.c.b16 %v929, %v927
    %v954 = vpack.c.b16 %v930, %v928
    %v955 = vpack.c.b16 %v933, %v931
    %v956 = vpack.c.b16 %v934, %v932
    %v957 = vpack.c.b16 %v937, %v935
    %v958 = vpack.c.b16 %v938, %v936
    %v959 = vpack.c.b16 %v941, %v939
    %v960 = vpack.c.b16 %v942, %v940
    %v961 = vpack.c.b16 %v945, %v943
    %v962 = vpack.c.b16 %v946, %v944
    %979 = vmatprep.subr.bf16.mxu0 %v948
    %980 = vmatpush1.bf16.msra.mxu0 %v947
    %981 = vmatprep.subr.bf16.mxu0 %v950
    %982 = vmatpush1.bf16.msra.mxu0 %v949
    %983 = vmatprep.subr.bf16.mxu0 %v952
    %984 = vmatpush1.bf16.msra.mxu0 %v951
    %985 = vmatprep.subr.bf16.mxu0 %v954
    %986 = vmatpush1.bf16.msra.mxu0 %v953
    %987 = vmatprep.subr.bf16.mxu0 %v956
    %988 = vmatpush1.bf16.msra.mxu0 %v955
    %989 = vmatprep.subr.bf16.mxu0 %v958
    %990 = vmatpush1.bf16.msra.mxu0 %v957
    %991 = vmatprep.subr.bf16.mxu0 %v960
    %992 = vmatpush1.bf16.msra.mxu0 %v959
    %993 = vmatprep.subr.bf16.mxu0 %v962
    %994 = vmatpush1.bf16.msra.mxu0 %v961
    %995 = vmatprep.subr.bf16.mxu0 0
    %996 = vmatpush1.bf16.msra.mxu0 0
    %997 = vmatprep.subr.bf16.mxu0 0
    %998 = vmatpush1.bf16.msra.mxu0 0
    %999 = vmatprep.subr.bf16.mxu0 0
    %1000 = vmatpush1.bf16.msra.mxu0 0
    %1001 = vmatprep.subr.bf16.mxu0 0
    %1002 = vmatpush1.bf16.msra.mxu0 0
    %1003 = vmatprep.subr.bf16.mxu0 0
    %1004 = vmatpush1.bf16.msra.mxu0 0
    %1005 = vmatprep.subr.bf16.mxu0 0
    %1006 = vmatpush1.bf16.msra.mxu0 0
    %1007 = vmatprep.subr.bf16.mxu0 0
    %1008 = vmatpush1.bf16.msra.mxu0 0
    %1009 = vmatprep.subr.bf16.mxu0 0
    %1010 = vmatpush1.bf16.msra.mxu0 0
    %1011 = vmatprep.mubr.bf16.mxu0 0
    %1012 = vmatmul.mubr.bf16.gmra.mrb[0].mxu0 %v855
    %v1013 = vpop.f32.mrb[0].mxu0
    %v1014 = vadd.f32 %v892, %v1013
    %v1015 = vpop.f32.mrb[0].mxu0
    %v1016 = vadd.f32 %v896, %v1015
    %v1017 = vpop.f32.mrb[0].mxu0
    %v1018 = vadd.f32 %v892, %v1017
    %v1019 = vpop.f32.mrb[0].mxu0
    %v1020 = vadd.f32 %v896, %v1019
    %1021 = vmatprep.mubr.bf16.mxu0 0
    %1022 = vmatmul.mubr.bf16.gmra.mrb[0].mxu0 %v856
    %v1023 = vpop.f32.mrb[0].mxu0
    %v1024 = vadd.f32 %v892, %v1023
    %v1025 = vpop.f32.mrb[0].mxu0
    %v1026 = vadd.f32 %v896, %v1025
    %v1027 = vpop.f32.mrb[0].mxu0
    %v1028 = vadd.f32 %v892, %v1027
    %v1029 = vpop.f32.mrb[0].mxu0
    %v1030 = vadd.f32 %v896, %v1029
    %1031 = vmatprep.mubr.bf16.mxu0 0
    %1032 = vmatmul.mubr.bf16.gmra.mrb[0].mxu0 %v857
    %v1033 = vpop.f32.mrb[0].mxu0
    %v1034 = vadd.f32 %v892, %v1033
    %v1035 = vpop.f32.mrb[0].mxu0
    %v1036 = vadd.f32 %v896, %v1035
    %v1037 = vpop.f32.mrb[0].mxu0
    %v1038 = vadd.f32 %v892, %v1037
    %v1039 = vpop.f32.mrb[0].mxu0
    %v1040 = vadd.f32 %v896, %v1039
    %1041 = vmatprep.mubr.bf16.mxu0 0
    %1042 = vmatmul.mubr.bf16.gmra.mrb[0].mxu0 %v858
    %v1043 = vpop.f32.mrb[0].mxu0
    %v1044 = vadd.f32 %v892, %v1043
    %v1045 = vpop.f32.mrb[0].mxu0
    %v1046 = vadd.f32 %v896, %v1045
    %v1047 = vpop.f32.mrb[0].mxu0
    %v1048 = vadd.f32 %v892, %v1047
    %v1049 = vpop.f32.mrb[0].mxu0
    %v1050 = vadd.f32 %v896, %v1049
    %1051 = vmatprep.mubr.bf16.mxu0 0
    %1052 = vmatmul.mubr.bf16.gmra.mrb[0].mxu0 %v859
    %v1053 = vpop.f32.mrb[0].mxu0
    %v1054 = vadd.f32 %v892, %v1053
    %v1055 = vpop.f32.mrb[0].mxu0
    %v1056 = vadd.f32 %v896, %v1055
    %v1057 = vpop.f32.mrb[0].mxu0
    %v1058 = vadd.f32 %v892, %v1057
    %v1059 = vpop.f32.mrb[0].mxu0
    %v1060 = vadd.f32 %v896, %v1059
    %1061 = vmatprep.mubr.bf16.mxu0 0
    %1062 = vmatmul.mubr.bf16.gmra.mrb[0].mxu0 %v860
    %v1063 = vpop.f32.mrb[0].mxu0
    %v1064 = vadd.f32 %v892, %v1063
    %v1065 = vpop.f32.mrb[0].mxu0
    %v1066 = vadd.f32 %v896, %v1065
    %v1067 = vpop.f32.mrb[0].mxu0
    %v1068 = vadd.f32 %v892, %v1067
    %v1069 = vpop.f32.mrb[0].mxu0
    %v1070 = vadd.f32 %v896, %v1069
    %1071 = vmatprep.mubr.bf16.mxu0 0
    %1072 = vmatmul.mubr.bf16.gmra.mrb[0].mxu0 %v861
    %v1073 = vpop.f32.mrb[0].mxu0
    %v1074 = vadd.f32 %v892, %v1073
    %v1075 = vpop.f32.mrb[0].mxu0
    %v1076 = vadd.f32 %v896, %v1075
    %v1077 = vpop.f32.mrb[0].mxu0
    %v1078 = vadd.f32 %v892, %v1077
    %v1079 = vpop.f32.mrb[0].mxu0
    %v1080 = vadd.f32 %v896, %v1079
    %1081 = vmatprep.mubr.bf16.mxu0 0
    %1082 = vmatmul.mubr.bf16.gmra.mrb[0].mxu0 %v862
    %v1083 = vpop.f32.mrb[0].mxu0
    %v1084 = vadd.f32 %v892, %v1083
    %v1085 = vpop.f32.mrb[0].mxu0
    %v1086 = vadd.f32 %v896, %v1085
    %v1087 = vpop.f32.mrb[0].mxu0
    %v1088 = vadd.f32 %v892, %v1087
    %v1089 = vpop.f32.mrb[0].mxu0
    %v1090 = vadd.f32 %v896, %v1089
    %1091 = vmatprep.mubr.bf16.mxu0 0
    %1092 = vmatmul.mubr.bf16.gmra.mrb[0].mxu0 %v863
    %v1093 = vpop.f32.mrb[0].mxu0
    %v1094 = vadd.f32 %v892, %v1093
    %v1095 = vpop.f32.mrb[0].mxu0
    %v1096 = vadd.f32 %v896, %v1095
    %v1097 = vpop.f32.mrb[0].mxu0
    %v1098 = vadd.f32 %v892, %v1097
    %v1099 = vpop.f32.mrb[0].mxu0
    %v1100 = vadd.f32 %v896, %v1099
    %1101 = vmatprep.mubr.bf16.mxu0 0
    %1102 = vmatmul.mubr.bf16.gmra.mrb[0].mxu0 %v864
    %v1103 = vpop.f32.mrb[0].mxu0
    %v1104 = vadd.f32 %v892, %v1103
    %v1105 = vpop.f32.mrb[0].mxu0
    %v1106 = vadd.f32 %v896, %v1105
    %v1107 = vpop.f32.mrb[0].mxu0
    %v1108 = vadd.f32 %v892, %v1107
    %v1109 = vpop.f32.mrb[0].mxu0
    %v1110 = vadd.f32 %v896, %v1109
    %1111 = vmatprep.mubr.bf16.mxu0 0
    %1112 = vmatmul.mubr.bf16.gmra.mrb[0].mxu0 %v865
    %v1113 = vpop.f32.mrb[0].mxu0
    %v1114 = vadd.f32 %v892, %v1113
    %v1115 = vpop.f32.mrb[0].mxu0
    %v1116 = vadd.f32 %v896, %v1115
    %v1117 = vpop.f32.mrb[0].mxu0
    %v1118 = vadd.f32 %v892, %v1117
    %v1119 = vpop.f32.mrb[0].mxu0
    %v1120 = vadd.f32 %v896, %v1119
    %1121 = vmatprep.mubr.bf16.mxu0 0
    %1122 = vmatmul.mubr.bf16.gmra.mrb[0].mxu0 %v866
    %v1123 = vpop.f32.mrb[0].mxu0
    %v1124 = vadd.f32 %v892, %v1123
    %v1125 = vpop.f32.mrb[0].mxu0
    %v1126 = vadd.f32 %v896, %v1125
    %v1127 = vpop.f32.mrb[0].mxu0
    %v1128 = vadd.f32 %v892, %v1127
    %v1129 = vpop.f32.mrb[0].mxu0
    %v1130 = vadd.f32 %v896, %v1129
    %1131 = vmatprep.mubr.bf16.mxu0 0
    %1132 = vmatmul.mubr.bf16.gmra.mrb[0].mxu0 %v867
    %v1133 = vpop.f32.mrb[0].mxu0
    %v1134 = vadd.f32 %v892, %v1133
    %v1135 = vpop.f32.mrb[0].mxu0
    %v1136 = vadd.f32 %v896, %v1135
    %v1137 = vpop.f32.mrb[0].mxu0
    %v1138 = vadd.f32 %v892, %v1137
    %v1139 = vpop.f32.mrb[0].mxu0
    %v1140 = vadd.f32 %v896, %v1139
    %1141 = vmatprep.mubr.bf16.mxu0 0
    %1142 = vmatmul.mubr.bf16.gmra.mrb[0].mxu0 %v868
    %v1143 = vpop.f32.mrb[0].mxu0
    %v1144 = vadd.f32 %v892, %v1143
    %v1145 = vpop.f32.mrb[0].mxu0
    %v1146 = vadd.f32 %v896, %v1145
    %v1147 = vpop.f32.mrb[0].mxu0
    %v1148 = vadd.f32 %v892, %v1147
    %v1149 = vpop.f32.mrb[0].mxu0
    %v1150 = vadd.f32 %v896, %v1149
    %1151 = vmatprep.mubr.bf16.mxu0 0
    %1152 = vmatmul.mubr.bf16.gmra.mrb[0].mxu0 %v869
    %v1153 = vpop.f32.mrb[0].mxu0
    %v1154 = vadd.f32 %v892, %v1153
    %v1155 = vpop.f32.mrb[0].mxu0
    %v1156 = vadd.f32 %v896, %v1155
    %v1157 = vpop.f32.mrb[0].mxu0
    %v1158 = vadd.f32 %v892, %v1157
    %v1159 = vpop.f32.mrb[0].mxu0
    %v1160 = vadd.f32 %v896, %v1159
    %1161 = vmatprep.mubr.bf16.mxu0 0
    %1162 = vmatmul.mubr.bf16.gmra.mrb[0].mxu0 %v870
    %v1163 = vpop.f32.mrb[0].mxu0
    %v1164 = vadd.f32 %v892, %v1163
    %v1165 = vpop.f32.mrb[0].mxu0
    %v1166 = vadd.f32 %v896, %v1165
    %v1167 = vpop.f32.mrb[0].mxu0
    %v1168 = vadd.f32 %v892, %v1167
    %v1169 = vpop.f32.mrb[0].mxu0
    %v1170 = vadd.f32 %v896, %v1169
    %1171 = vdwg.mxu0
    %v1172 = vtanh.pop %v1014
    %v1173 = vtanh.pop %v1016
    %v1174 = vtanh.pop %v1018
    %v1175 = vtanh.pop %v1020
    %v1176 = vtanh.pop %v1024
    %v1177 = vtanh.pop %v1026
    %v1178 = vtanh.pop %v1028
    %v1179 = vtanh.pop %v1030
    %v1180 = vtanh.pop %v1034
    %v1181 = vtanh.pop %v1036
    %v1182 = vtanh.pop %v1038
    %v1183 = vtanh.pop %v1040
    %v1184 = vtanh.pop %v1044
    %v1185 = vtanh.pop %v1046
    %v1186 = vtanh.pop %v1048
    %v1187 = vtanh.pop %v1050
    %v1188 = vtanh.pop %v1054
    %v1189 = vtanh.pop %v1056
    %v1190 = vtanh.pop %v1058
    %v1191 = vtanh.pop %v1060
    %v1192 = vtanh.pop %v1064
    %v1193 = vtanh.pop %v1066
    %v1194 = vtanh.pop %v1068
    %v1195 = vtanh.pop %v1070
    %v1196 = vtanh.pop %v1074
    %v1197 = vtanh.pop %v1076
    %v1198 = vtanh.pop %v1078
    %v1199 = vtanh.pop %v1080
    %v1200 = vtanh.pop %v1084
    %v1201 = vtanh.pop %v1086
    %v1202 = vtanh.pop %v1088
    %v1203 = vtanh.pop %v1090
    %v1204 = vtanh.pop %v1094
    %v1205 = vtanh.pop %v1096
    %v1206 = vtanh.pop %v1098
    %v1207 = vtanh.pop %v1100
    %v1208 = vtanh.pop %v1104
    %v1209 = vtanh.pop %v1106
    %v1210 = vtanh.pop %v1108
    %v1211 = vtanh.pop %v1110
    %v1212 = vtanh.pop %v1114
    %v1213 = vtanh.pop %v1116
    %v1214 = vtanh.pop %v1118
    %v1215 = vtanh.pop %v1120
    %v1216 = vtanh.pop %v1124
    %v1217 = vtanh.pop %v1126
    %v1218 = vtanh.pop %v1128
    %v1219 = vtanh.pop %v1130
    %v1220 = vtanh.pop %v1134
    %v1221 = vtanh.pop %v1136
    %v1222 = vtanh.pop %v1138
    %v1223 = vtanh.pop %v1140
    %v1224 = vtanh.pop %v1144
    %v1225 = vtanh.pop %v1146
    %v1226 = vtanh.pop %v1148
    %v1227 = vtanh.pop %v1150
    %v1228 = vtanh.pop %v1154
    %v1229 = vtanh.pop %v1156
    %v1230 = vtanh.pop %v1158
    %v1231 = vtanh.pop %v1160
    %v1232 = vtanh.pop %v1164
    %v1233 = vtanh.pop %v1166
    %v1234 = vtanh.pop %v1168
    %v1235 = vtanh.pop %v1170
    %v1236 = vpack.c.bf16 %v1174, %v1172
    %v1237 = vpack.c.bf16 %v1175, %v1173
    %v1238 = vpack.c.bf16 %v1178, %v1176
    %v1239 = vpack.c.bf16 %v1179, %v1177
    %v1240 = vpack.c.bf16 %v1182, %v1180
    %v1241 = vpack.c.bf16 %v1183, %v1181
    %v1242 = vpack.c.bf16 %v1186, %v1184
    %v1243 = vpack.c.bf16 %v1187, %v1185
    %v1244 = vpack.c.bf16 %v1190, %v1188
    %v1245 = vpack.c.bf16 %v1191, %v1189
    %v1246 = vpack.c.bf16 %v1194, %v1192
    %v1247 = vpack.c.bf16 %v1195, %v1193
    %v1248 = vpack.c.bf16 %v1198, %v1196
    %v1249 = vpack.c.bf16 %v1199, %v1197
    %v1250 = vpack.c.bf16 %v1202, %v1200
    %v1251 = vpack.c.bf16 %v1203, %v1201
    %v1252 = vpack.c.bf16 %v1206, %v1204
    %v1253 = vpack.c.bf16 %v1207, %v1205
    %v1254 = vpack.c.bf16 %v1210, %v1208
    %v1255 = vpack.c.bf16 %v1211, %v1209
    %v1256 = vpack.c.bf16 %v1214, %v1212
    %v1257 = vpack.c.bf16 %v1215, %v1213
    %v1258 = vpack.c.bf16 %v1218, %v1216
    %v1259 = vpack.c.bf16 %v1219, %v1217
    %v1260 = vpack.c.bf16 %v1222, %v1220
    %v1261 = vpack.c.bf16 %v1223, %v1221
    %v1262 = vpack.c.bf16 %v1226, %v1224
    %v1263 = vpack.c.bf16 %v1227, %v1225
    %v1264 = vpack.c.bf16 %v1230, %v1228
    %v1265 = vpack.c.bf16 %v1231, %v1229
    %v1266 = vpack.c.bf16 %v1234, %v1232
    %v1267 = vpack.c.bf16 %v1235, %v1233
    %v1268 = vld [vmem:[#allocation7] sm:$0xf]
    %v1269 = vld [vmem:[#allocation7 + $0x4] sm:$0xf]
    %v1270 = vld [vmem:[#allocation7 + $0x8] sm:$0xf]
    %v1271 = vld [vmem:[#allocation7 + $0xc] sm:$0xf]
    %v1272 = vld [vmem:[#allocation7 + $0x10] sm:$0xf]
    %v1273 = vld [vmem:[#allocation7 + $0x14] sm:$0xf]
    %v1274 = vld [vmem:[#allocation7 + $0x18] sm:$0xf]
    %v1275 = vld [vmem:[#allocation7 + $0x1c] sm:$0xf]
    %v1276 = vld [vmem:[#allocation7 + $0x20] sm:$0xf]
    %v1277 = vld [vmem:[#allocation7 + $0x24] sm:$0xf]
    %v1278 = vld [vmem:[#allocation7 + $0x28] sm:$0xf]
    %v1279 = vld [vmem:[#allocation7 + $0x2c] sm:$0xf]
    %v1280 = vld [vmem:[#allocation7 + $0x30] sm:$0xf]
    %v1281 = vld [vmem:[#allocation7 + $0x34] sm:$0xf]
    %v1282 = vld [vmem:[#allocation7 + $0x38] sm:$0xf]
    %v1283 = vld [vmem:[#allocation7 + $0x3c] sm:$0xf]
    %v1284 = vld [vmem:[#allocation7 + $0x40] sm:$0xf]
    %v1285 = vld [vmem:[#allocation7 + $0x44] sm:$0xf]
    %v1286 = vld [vmem:[#allocation7 + $0x48] sm:$0xf]
    %v1287 = vld [vmem:[#allocation7 + $0x4c] sm:$0xf]
    %v1288 = vld [vmem:[#allocation7 + $0x50] sm:$0xf]
    %v1289 = vld [vmem:[#allocation7 + $0x54] sm:$0xf]
    %v1290 = vld [vmem:[#allocation7 + $0x58] sm:$0xf]
    %v1291 = vld [vmem:[#allocation7 + $0x5c] sm:$0xf]
    %v1292 = vld [vmem:[#allocation7 + $0x60] sm:$0xf]
    %v1293 = vld [vmem:[#allocation7 + $0x64] sm:$0xf]
    %v1294 = vld [vmem:[#allocation7 + $0x68] sm:$0xf]
    %v1295 = vld [vmem:[#allocation7 + $0x6c] sm:$0xf]
    %v1296 = vld [vmem:[#allocation7 + $0x70] sm:$0xf]
    %v1297 = vld [vmem:[#allocation7 + $0x74] sm:$0xf]
    %v1298 = vld [vmem:[#allocation7 + $0x78] sm:$0xf]
    %v1299 = vld [vmem:[#allocation7 + $0x7c] sm:$0xf]
    %v1300 = vld [vmem:[%s9] sm:$0x1]
    %v1302 = vlaneseq
    %v1303 = vshrl.u32 %v1302, 7
    %v1304 = vsub.s32 0, %v1303
    %v1305 = vrot.slane %v1300, %v1304
    %v1339 = vunpack.c.l.b16 %v1268
    %v1340 = vunpack.c.l.b16 %v1269
    %v1341 = vunpack.c.l.b16 %v1270
    %v1342 = vunpack.c.l.b16 %v1271
    %v1343 = vunpack.c.l.b16 %v1272
    %v1344 = vunpack.c.l.b16 %v1273
    %v1345 = vunpack.c.l.b16 %v1274
    %v1346 = vunpack.c.l.b16 %v1275
    %v1347 = vunpack.c.l.b16 %v1276
    %v1348 = vunpack.c.l.b16 %v1277
    %v1349 = vunpack.c.l.b16 %v1278
    %v1350 = vunpack.c.l.b16 %v1279
    %v1351 = vunpack.c.l.b16 %v1280
    %v1352 = vunpack.c.l.b16 %v1281
    %v1353 = vunpack.c.l.b16 %v1282
    %v1354 = vunpack.c.l.b16 %v1283
    %v1355 = vunpack.c.l.b16 %v1284
    %v1356 = vunpack.c.l.b16 %v1285
    %v1357 = vunpack.c.l.b16 %v1286
    %v1358 = vunpack.c.l.b16 %v1287
    %v1359 = vunpack.c.l.b16 %v1288
    %v1360 = vunpack.c.l.b16 %v1289
    %v1361 = vunpack.c.l.b16 %v1290
    %v1362 = vunpack.c.l.b16 %v1291
    %v1363 = vunpack.c.l.b16 %v1292
    %v1364 = vunpack.c.l.b16 %v1293
    %v1365 = vunpack.c.l.b16 %v1294
    %v1366 = vunpack.c.l.b16 %v1295
    %v1367 = vunpack.c.l.b16 %v1296
    %v1368 = vunpack.c.l.b16 %v1297
    %v1369 = vunpack.c.l.b16 %v1298
    %v1370 = vunpack.c.l.b16 %v1299
    %v1371 = vpack.c.b16 %v1340, %v1339
    %v1372 = vpack.c.b16 %v1342, %v1341
    %v1373 = vpack.c.b16 %v1344, %v1343
    %v1374 = vpack.c.b16 %v1346, %v1345
    %v1375 = vpack.c.b16 %v1348, %v1347
    %v1376 = vpack.c.b16 %v1350, %v1349
    %v1377 = vpack.c.b16 %v1352, %v1351
    %v1378 = vpack.c.b16 %v1354, %v1353
    %v1379 = vpack.c.b16 %v1356, %v1355
    %v1380 = vpack.c.b16 %v1358, %v1357
    %v1381 = vpack.c.b16 %v1360, %v1359
    %v1382 = vpack.c.b16 %v1362, %v1361
    %v1383 = vpack.c.b16 %v1364, %v1363
    %v1384 = vpack.c.b16 %v1366, %v1365
    %v1385 = vpack.c.b16 %v1368, %v1367
    %v1386 = vpack.c.b16 %v1370, %v1369
    %1403 = vmatprep.subr.bf16.mxu0 0
    %1404 = vmatpush1.bf16.msra.mxu0 %v1371
    %1405 = vmatprep.subr.bf16.mxu0 0
    %1406 = vmatpush1.bf16.msra.mxu0 %v1372
    %1407 = vmatprep.subr.bf16.mxu0 0
    %1408 = vmatpush1.bf16.msra.mxu0 %v1373
    %1409 = vmatprep.subr.bf16.mxu0 0
    %1410 = vmatpush1.bf16.msra.mxu0 %v1374
    %1411 = vmatprep.subr.bf16.mxu0 0
    %1412 = vmatpush1.bf16.msra.mxu0 %v1375
    %1413 = vmatprep.subr.bf16.mxu0 0
    %1414 = vmatpush1.bf16.msra.mxu0 %v1376
    %1415 = vmatprep.subr.bf16.mxu0 0
    %1416 = vmatpush1.bf16.msra.mxu0 %v1377
    %1417 = vmatprep.subr.bf16.mxu0 0
    %1418 = vmatpush1.bf16.msra.mxu0 %v1378
    %1419 = vmatprep.subr.bf16.mxu0 0
    %1420 = vmatpush1.bf16.msra.mxu0 %v1379
    %1421 = vmatprep.subr.bf16.mxu0 0
    %1422 = vmatpush1.bf16.msra.mxu0 %v1380
    %1423 = vmatprep.subr.bf16.mxu0 0
    %1424 = vmatpush1.bf16.msra.mxu0 %v1381
    %1425 = vmatprep.subr.bf16.mxu0 0
    %1426 = vmatpush1.bf16.msra.mxu0 %v1382
    %1427 = vmatprep.subr.bf16.mxu0 0
    %1428 = vmatpush1.bf16.msra.mxu0 %v1383
    %1429 = vmatprep.subr.bf16.mxu0 0
    %1430 = vmatpush1.bf16.msra.mxu0 %v1384
    %1431 = vmatprep.subr.bf16.mxu0 0
    %1432 = vmatpush1.bf16.msra.mxu0 %v1385
    %1433 = vmatprep.subr.bf16.mxu0 0
    %1434 = vmatpush1.bf16.msra.mxu0 %v1386
    %1435 = vmatprep.mubr.bf16.mxu0 %v1237
    %1436 = vmatmul.mubr.bf16.gmra.mrb[0].mxu0 %v1236
    %v1437 = vpop.f32.mrb[0].mxu0
    %v1438 = vadd.f32 %v1305, %v1437
    %v1439 = vpop.f32.mrb[0].mxu0
    %v1440 = vpop.f32.mrb[0].mxu0
    %v1441 = vadd.f32 %v1305, %v1440
    %v1442 = vpop.f32.mrb[0].mxu0
    %1443 = vmatprep.mubr.bf16.mxu0 %v1239
    %1444 = vmatmul.mubr.bf16.gmra.mrb[0].mxu0 %v1238
    %v1445 = vpop.f32.mrb[0].mxu0
    %v1446 = vadd.f32 %v1305, %v1445
    %v1447 = vpop.f32.mrb[0].mxu0
    %v1448 = vpop.f32.mrb[0].mxu0
    %v1449 = vadd.f32 %v1305, %v1448
    %v1450 = vpop.f32.mrb[0].mxu0
    %1451 = vmatprep.mubr.bf16.mxu0 %v1241
    %1452 = vmatmul.mubr.bf16.gmra.mrb[0].mxu0 %v1240
    %v1453 = vpop.f32.mrb[0].mxu0
    %v1454 = vadd.f32 %v1305, %v1453
    %v1455 = vpop.f32.mrb[0].mxu0
    %v1456 = vpop.f32.mrb[0].mxu0
    %v1457 = vadd.f32 %v1305, %v1456
    %v1458 = vpop.f32.mrb[0].mxu0
    %1459 = vmatprep.mubr.bf16.mxu0 %v1243
    %1460 = vmatmul.mubr.bf16.gmra.mrb[0].mxu0 %v1242
    %v1461 = vpop.f32.mrb[0].mxu0
    %v1462 = vadd.f32 %v1305, %v1461
    %v1463 = vpop.f32.mrb[0].mxu0
    %v1464 = vpop.f32.mrb[0].mxu0
    %v1465 = vadd.f32 %v1305, %v1464
    %v1466 = vpop.f32.mrb[0].mxu0
    %1467 = vmatprep.mubr.bf16.mxu0 %v1245
    %1468 = vmatmul.mubr.bf16.gmra.mrb[0].mxu0 %v1244
    %v1469 = vpop.f32.mrb[0].mxu0
    %v1470 = vadd.f32 %v1305, %v1469
    %v1471 = vpop.f32.mrb[0].mxu0
    %v1472 = vpop.f32.mrb[0].mxu0
    %v1473 = vadd.f32 %v1305, %v1472
    %v1474 = vpop.f32.mrb[0].mxu0
    %1475 = vmatprep.mubr.bf16.mxu0 %v1247
    %1476 = vmatmul.mubr.bf16.gmra.mrb[0].mxu0 %v1246
    %v1477 = vpop.f32.mrb[0].mxu0
    %v1478 = vadd.f32 %v1305, %v1477
    %v1479 = vpop.f32.mrb[0].mxu0
    %v1480 = vpop.f32.mrb[0].mxu0
    %v1481 = vadd.f32 %v1305, %v1480
    %v1482 = vpop.f32.mrb[0].mxu0
    %1483 = vmatprep.mubr.bf16.mxu0 %v1249
    %1484 = vmatmul.mubr.bf16.gmra.mrb[0].mxu0 %v1248
    %v1485 = vpop.f32.mrb[0].mxu0
    %v1486 = vadd.f32 %v1305, %v1485
    %v1487 = vpop.f32.mrb[0].mxu0
    %v1488 = vpop.f32.mrb[0].mxu0
    %v1489 = vadd.f32 %v1305, %v1488
    %v1490 = vpop.f32.mrb[0].mxu0
    %1491 = vmatprep.mubr.bf16.mxu0 %v1251
    %1492 = vmatmul.mubr.bf16.gmra.mrb[0].mxu0 %v1250
    %v1493 = vpop.f32.mrb[0].mxu0
    %v1494 = vadd.f32 %v1305, %v1493
    %v1495 = vpop.f32.mrb[0].mxu0
    %v1496 = vpop.f32.mrb[0].mxu0
    %v1497 = vadd.f32 %v1305, %v1496
    %v1498 = vpop.f32.mrb[0].mxu0
    %1499 = vmatprep.mubr.bf16.mxu0 %v1253
    %1500 = vmatmul.mubr.bf16.gmra.mrb[0].mxu0 %v1252
    %v1501 = vpop.f32.mrb[0].mxu0
    %v1502 = vadd.f32 %v1305, %v1501
    %v1503 = vpop.f32.mrb[0].mxu0
    %v1504 = vpop.f32.mrb[0].mxu0
    %v1505 = vadd.f32 %v1305, %v1504
    %v1506 = vpop.f32.mrb[0].mxu0
    %1507 = vmatprep.mubr.bf16.mxu0 %v1255
    %1508 = vmatmul.mubr.bf16.gmra.mrb[0].mxu0 %v1254
    %v1509 = vpop.f32.mrb[0].mxu0
    %v1510 = vadd.f32 %v1305, %v1509
    %v1511 = vpop.f32.mrb[0].mxu0
    %v1512 = vpop.f32.mrb[0].mxu0
    %v1513 = vadd.f32 %v1305, %v1512
    %v1514 = vpop.f32.mrb[0].mxu0
    %1515 = vmatprep.mubr.bf16.mxu0 %v1257
    %1516 = vmatmul.mubr.bf16.gmra.mrb[0].mxu0 %v1256
    %v1517 = vpop.f32.mrb[0].mxu0
    %v1518 = vadd.f32 %v1305, %v1517
    %v1519 = vpop.f32.mrb[0].mxu0
    %v1520 = vpop.f32.mrb[0].mxu0
    %v1521 = vadd.f32 %v1305, %v1520
    %v1522 = vpop.f32.mrb[0].mxu0
    %1523 = vmatprep.mubr.bf16.mxu0 %v1259
    %1524 = vmatmul.mubr.bf16.gmra.mrb[0].mxu0 %v1258
    %v1525 = vpop.f32.mrb[0].mxu0
    %v1526 = vadd.f32 %v1305, %v1525
    %v1527 = vpop.f32.mrb[0].mxu0
    %v1528 = vpop.f32.mrb[0].mxu0
    %v1529 = vadd.f32 %v1305, %v1528
    %v1530 = vpop.f32.mrb[0].mxu0
    %1531 = vmatprep.mubr.bf16.mxu0 %v1261
    %1532 = vmatmul.mubr.bf16.gmra.mrb[0].mxu0 %v1260
    %v1533 = vpop.f32.mrb[0].mxu0
    %v1534 = vadd.f32 %v1305, %v1533
    %v1535 = vpop.f32.mrb[0].mxu0
    %v1536 = vpop.f32.mrb[0].mxu0
    %v1537 = vadd.f32 %v1305, %v1536
    %v1538 = vpop.f32.mrb[0].mxu0
    %1539 = vmatprep.mubr.bf16.mxu0 %v1263
    %1540 = vmatmul.mubr.bf16.gmra.mrb[0].mxu0 %v1262
    %v1541 = vpop.f32.mrb[0].mxu0
    %v1542 = vadd.f32 %v1305, %v1541
    %v1543 = vpop.f32.mrb[0].mxu0
    %v1544 = vpop.f32.mrb[0].mxu0
    %v1545 = vadd.f32 %v1305, %v1544
    %v1546 = vpop.f32.mrb[0].mxu0
    %1547 = vmatprep.mubr.bf16.mxu0 %v1265
    %1548 = vmatmul.mubr.bf16.gmra.mrb[0].mxu0 %v1264
    %v1549 = vpop.f32.mrb[0].mxu0
    %v1550 = vadd.f32 %v1305, %v1549
    %v1551 = vpop.f32.mrb[0].mxu0
    %v1552 = vpop.f32.mrb[0].mxu0
    %v1553 = vadd.f32 %v1305, %v1552
    %v1554 = vpop.f32.mrb[0].mxu0
    %1555 = vmatprep.mubr.bf16.mxu0 %v1267
    %1556 = vmatmul.mubr.bf16.gmra.mrb[0].mxu0 %v1266
    %v1557 = vpop.f32.mrb[0].mxu0
    %v1558 = vadd.f32 %v1305, %v1557
    %v1559 = vpop.f32.mrb[0].mxu0
    %v1560 = vpop.f32.mrb[0].mxu0
    %v1561 = vadd.f32 %v1305, %v1560
    %v1562 = vpop.f32.mrb[0].mxu0
    %1563 = vdwg.mxu0
    %1564 = vst [vmem:[#allocation8] sm:$0xff] %v1438
    %1565 = vst [vmem:[#allocation8 + $0x8] sm:$0xff] %v1441
    %1566 = vst [vmem:[#allocation8 + $0x10] sm:$0xff] %v1446
    %1567 = vst [vmem:[#allocation8 + $0x18] sm:$0xff] %v1449
    %1568 = vst [vmem:[#allocation8 + $0x20] sm:$0xff] %v1454
    %1569 = vst [vmem:[#allocation8 + $0x28] sm:$0xff] %v1457
    %1570 = vst [vmem:[#allocation8 + $0x30] sm:$0xff] %v1462
    %1571 = vst [vmem:[#allocation8 + $0x38] sm:$0xff] %v1465
    %1572 = vst [vmem:[#allocation8 + $0x40] sm:$0xff] %v1470
    %1573 = vst [vmem:[#allocation8 + $0x48] sm:$0xff] %v1473
    %1574 = vst [vmem:[#allocation8 + $0x50] sm:$0xff] %v1478
    %1575 = vst [vmem:[#allocation8 + $0x58] sm:$0xff] %v1481
    %1576 = vst [vmem:[#allocation8 + $0x60] sm:$0xff] %v1486
    %1577 = vst [vmem:[#allocation8 + $0x68] sm:$0xff] %v1489
    %1578 = vst [vmem:[#allocation8 + $0x70] sm:$0xff] %v1494
    %1579 = vst [vmem:[#allocation8 + $0x78] sm:$0xff] %v1497
    %1580 = vst [vmem:[#allocation8 + $0x80] sm:$0xff] %v1502
    %1581 = vst [vmem:[#allocation8 + $0x88] sm:$0xff] %v1505
    %1582 = vst [vmem:[#allocation8 + $0x90] sm:$0xff] %v1510
    %1583 = vst [vmem:[#allocation8 + $0x98] sm:$0xff] %v1513
    %1584 = vst [vmem:[#allocation8 + $0xa0] sm:$0xff] %v1518
    %1585 = vst [vmem:[#allocation8 + $0xa8] sm:$0xff] %v1521
    %1586 = vst [vmem:[#allocation8 + $0xb0] sm:$0xff] %v1526
    %1587 = vst [vmem:[#allocation8 + $0xb8] sm:$0xff] %v1529
    %1588 = vst [vmem:[#allocation8 + $0xc0] sm:$0xff] %v1534
    %1589 = vst [vmem:[#allocation8 + $0xc8] sm:$0xff] %v1537
    %1590 = vst [vmem:[#allocation8 + $0xd0] sm:$0xff] %v1542
    %1591 = vst [vmem:[#allocation8 + $0xd8] sm:$0xff] %v1545
    %1592 = vst [vmem:[#allocation8 + $0xe0] sm:$0xff] %v1550
    %1593 = vst [vmem:[#allocation8 + $0xe8] sm:$0xff] %v1553
    %1594 = vst [vmem:[#allocation8 + $0xf0] sm:$0xff] %v1558
    %1595 = vst [vmem:[#allocation8 + $0xf8] sm:$0xff] %v1561
    // Predicated region
    $region54: #{tpu_custom_call.1} parent=1 // pred_check
      _
    $region55: #{tpu_custom_call.1} parent=1 // pred_check_branch
      %1597 = sbr.rel (0) target = $region57
    $region56: #{tpu_custom_call.1} parent=1 // pred_region
      %s1599 = ssub.s32 4096, 4096
      %1600 = vsyncadd [#allocation4], %s1599
      %s1601 = sshll.u32 [#allocation8], 4
      %s1602 = int_to_ptr.vmem [resolvable:$true] %s1601
      %1607 = dma.vmem_to_hbm [thread:$0]  %s1602, 4096, %s10, [#allocation4], 128, 128, 8
    $region57: #{tpu_custom_call.1} parent=1 // pred_fallthru
      _
    // Predicated region
    $region58: #{tpu_custom_call.1} parent=1 // pred_check
      _
    $region59: #{tpu_custom_call.1} parent=1 // pred_check_branch
      %1609 = sbr.rel (0) target = $region61
    $region60: #{tpu_custom_call.1} parent=1 // pred_region
      %1610 = dma.done [#allocation4], 4096
    $region61: #{tpu_custom_call.1} parent=1 // pred_fallthru
      _
    %1611 = vsyncpa [#allocation3], 1
    %1612 = vsyncpa [#allocation6], 1
    %1613 = vsyncpa [#allocation4], 1

</llo_original>
